<compile_context>
chip_gen: v7x
topology: tpu7x:2x2x1
jax: 0.10.0
libtpu: 0.0.40
codegen_flags: <defaults>
</compile_context>

<pallas_src>
import math
import functools

import numpy as np
import jax
import jax.numpy as jnp
from jax.experimental import pallas as pl
from jax.experimental.pallas import tpu as pltpu

# ---- model hyper-parameters (ContrastiveModel_tf defaults) -----------------
EMB = 32          # eye-transformer embedding_dim
HEADS = 4         # num_heads        -> head_size = 8
PROJ = 64         # projection_dim
IMG_DIM = 768     # frozen ViT-B/32 feature dim
C_IN = 3          # eye signal channels
C_PAD = 8         # zero-padded channel dim fed to the kernel (math identical)
LN_EPS = 1e-5
NEG_BIG = -1e30


# ---------------------------- in-kernel helpers ------------------------------
def _layernorm(v, g, b):
    mu = jnp.mean(v, axis=-1, keepdims=True)
    var = jnp.mean((v - mu) ** 2, axis=-1, keepdims=True)
    return (v - mu) * jax.lax.rsqrt(var + LN_EPS) * g + b


def _erf(v):
    # Abramowitz & Stegun 7.1.26 rational approximation (|abs err| <= 1.5e-7,
    # i.e. float32 machine precision).  Avoids relying on an erf lowering.
    a1, a2, a3, a4, a5 = 0.254829592, -0.284496736, 1.421413741, -1.453152027, 1.061405429
    p = 0.3275911
    s = jnp.where(v >= 0.0, 1.0, -1.0)
    a = jnp.abs(v)
    t = 1.0 / (1.0 + p * a)
    poly = ((((a5 * t + a4) * t + a3) * t + a2) * t + a1) * t
    return s * (1.0 - poly * jnp.exp(-a * a))


def _gelu(v):
    # exact (erf-based) GELU, matching torch.nn.GELU() default
    return 0.5 * v * (1.0 + _erf(v * (1.0 / math.sqrt(2.0))))


def _mm(a, w):
    # 2-D matmul on the MXU
    return jax.lax.dot_general(a, w, (((1,), (0,)), ((), ())),
                               preferred_element_type=jnp.float32)


# ------------------------- fused model + loss kernel -------------------------
def fused_kernel(batch, seq, t_pad, num_heads,
                 x_ref, pe_ref, cw_ref, cb_ref,
                 ln1g_ref, ln1b_ref,
                 wqkv_ref, wo_ref, bo_ref,
                 ln2g_ref, ln2b_ref,
                 w1_ref, b1_ref, w2_ref, b2_ref,
                 lnfg_ref, lnfb_ref,
                 img_ref,
                 wpe_ref, bpe_ref, wfe_ref, bfe_ref, ge_ref, be_ref,
                 wpi_ref, bpi_ref, wfi_ref, bfi_ref, gi_ref, bi_ref,
                 out_ref):
    B, S, Tp, H = batch, seq, t_pad, num_heads
    E = cw_ref.shape[1]
    D = E // H
    N = B * Tp
    T_valid = S + 1

    # ---- token position masks (built once, fully vectorized) ----------------
    pos = jax.lax.broadcasted_iota(jnp.int32, (Tp, E), 0)                # (Tp, E)
    data_mask = jnp.logical_and(pos >= 1, pos <= S).astype(jnp.float32)
    cls_mask = (pos == 0).astype(jnp.float32)
    key_ok = jax.lax.broadcasted_iota(jnp.int32, (Tp, Tp), 1) < T_valid  # (Tp, Tp)

    # ---- Conv1d(3->E, k=1) == per-timestep linear projection ----------------
    x2 = x_ref[...].reshape(N, C_PAD)                                # (N, C_pad)
    emb = _mm(x2, cw_ref[...]) + cb_ref[...]                         # (N, E)
    # zero the CLS row and pad rows (conv of a zero row would leave the bias),
    # then add the positional encoding (broadcast over batch, no tiling).
    emb3 = emb.reshape(B, Tp, E) * data_mask[None]
    tok3 = emb3 + pe_ref[...][None]
    tok = tok3.reshape(N, E)                                         # (N, E)

    # ---- transformer block (x + attn(norm1(x)); x + mlp(norm2(x))) ----------
    h = _layernorm(tok, ln1g_ref[...], ln1b_ref[...])
    qkv = _mm(h, wqkv_ref[...])                                      # (N, 3E)
    q3 = qkv[:, 0:E].reshape(B, Tp, E)
    k3 = qkv[:, E:2 * E].reshape(B, Tp, E)
    v3 = qkv[:, 2 * E:3 * E].reshape(B, Tp, E)

    scale = 1.0 / math.sqrt(E)      # reference scales by embedding_dim ** -0.5

    head_outs = []
    for hh in range(H):             # static H-way unroll; batch dim is batched
        cs = slice(hh * D, (hh + 1) * D)
        qh, kh, vh = q3[..., cs], k3[..., cs], v3[..., cs]           # (B, Tp, D)
        sc = jnp.einsum('btd,bsd->bts', qh, kh,
                        preferred_element_type=jnp.float32) * scale  # (B, Tp, Tp)
        sc = jnp.where(key_ok[None], sc, NEG_BIG)                    # mask pad keys
        sc = sc - jnp.max(sc, axis=-1, keepdims=True)
        e = jnp.exp(sc)
        probs = e / jnp.sum(e, axis=-1, keepdims=True)
        head_outs.append(jnp.einsum('bts,bsd->btd', probs, vh,
                                    preferred_element_type=jnp.float32))
    att3 = jnp.concatenate(head_outs, axis=-1)                       # (B, Tp, E)
    att = _mm(att3.reshape(N, E), wo_ref[...]) + bo_ref[...]
    x1 = tok + att

    h2 = _layernorm(x1, ln2g_ref[...], ln2b_ref[...])
    ff = _gelu(_mm(h2, w1_ref[...]) + b1_ref[...])
    ff = _mm(ff, w2_ref[...]) + b2_ref[...]
    x2r = x1 + ff

    xn = _layernorm(x2r, lnfg_ref[...], lnfb_ref[...])               # (N, E)

    # ---- pooling: cls token + layer-normed mean over the data tokens --------
    xn3 = xn.reshape(B, Tp, E)
    cls_tok = jnp.sum(xn3 * cls_mask[None], axis=1)                  # (B, E)
    pooled = jnp.sum(xn3 * data_mask[None], axis=1) * (1.0 / S)      # (B, E)
    pooled = _layernorm(pooled, lnfg_ref[...], lnfb_ref[...])
    feats = jnp.concatenate([pooled, cls_tok], axis=-1)              # (B, 2E)

    # ---- projection heads ----------------------------------------------------
    def proj_head(feat, wp, bp, wf, bf, g, b):
        projected = _mm(feat, wp) + bp
        z = _gelu(projected)
        z = _mm(z, wf) + bf
        z = z + projected
        return _layernorm(z, g, b)

    eye_emb = proj_head(feats, wpe_ref[...], bpe_ref[...],
                        wfe_ref[...], bfe_ref[...], ge_ref[...], be_ref[...])
    img_emb = proj_head(img_ref[...], wpi_ref[...], bpi_ref[...],
                        wfi_ref[...], bfi_ref[...], gi_ref[...], bi_ref[...])

    # ---- CLIP-style soft-target contrastive loss -----------------------------
    dotT = lambda a, b: jax.lax.dot_general(
        a, b, (((1,), (1,)), ((), ())), preferred_element_type=jnp.float32)
    logits = dotT(eye_emb, img_emb)                                  # (B, B)
    tavg = (dotT(eye_emb, eye_emb) + dotT(img_emb, img_emb)) * 0.5
    tavg = tavg - jnp.max(tavg, axis=-1, keepdims=True)
    te = jnp.exp(tavg)
    targets = te / jnp.sum(te, axis=-1, keepdims=True)

    m_row = jnp.max(logits, axis=-1, keepdims=True)
    lse_row = jnp.log(jnp.sum(jnp.exp(logits - m_row), axis=-1, keepdims=True)) + m_row
    logp_row = logits - lse_row
    m_col = jnp.max(logits, axis=0, keepdims=True)
    lse_col = jnp.log(jnp.sum(jnp.exp(logits - m_col), axis=0, keepdims=True)) + m_col
    logp_col = logits - lse_col

    # loss = mean_i( (eye_loss_i + image_loss_i) / 2 )
    tot = jnp.sum(targets * (logp_row + logp_col), axis=1, keepdims=True)   # (B,1)
    tot = jnp.sum(tot, axis=0, keepdims=True)                               # (1,1)
    out_ref[...] = tot * (-1.0 / (2.0 * B))


# ------------------------------- wrapper --------------------------------------
_VMEM = pl.BlockSpec(memory_space=pltpu.MemorySpace.VMEM)


def contrastive_model_forward(batch, params):
    eye = batch['eye_data']                      # PyTorch NCW: (B, 3, S)
    # TODO(synk): ImageEncoder is a frozen pretrained torchvision ViT-B/32 with
    # no checkpoint available; its 768-d output features are provided directly.
    img = batch['img_features']                  # (B, 768)

    B, C, S = eye.shape
    T = S + 1
    T_pad = max(8, ((T + 7) // 8) * 8)           # sublane-aligned token count

    # Lay out tokens channels-last with the CLS row (zeros) and pad rows
    # (zeros) already in place: (B, T_pad, C_pad).
    x3 = jnp.transpose(eye, (0, 2, 1))                               # (B, S, C)
    x3 = jnp.pad(x3, ((0, 0), (1, T_pad - T), (0, C_PAD - C)))       # (B, T_pad, C_pad)
    pe_pad = jnp.pad(params['pe'][:T], ((0, T_pad - T), (0, 0)))     # (T_pad, E)

    kern = functools.partial(fused_kernel, B, S, T_pad, HEADS)
    out = pl.pallas_call(
        kern,
        out_shape=jax.ShapeDtypeStruct((1, 1), jnp.float32),
        in_specs=[_VMEM] * 30,
        out_specs=_VMEM,
    )(x3, pe_pad, params['conv_w'], params['conv_b'],
      params['ln1_g'], params['ln1_b'],
      params['w_qkv'], params['wo'], params['bo'],
      params['ln2_g'], params['ln2_b'],
      params['w1'], params['b1'], params['w2'], params['b2'],
      params['lnf_g'], params['lnf_b'],
      img,
      params['wp_e'], params['bp_e'], params['wf_e'], params['bf_e'], params['g_e'], params['b_e'],
      params['wp_i'], params['bp_i'], params['wf_i'], params['bf_i'], params['g_i'], params['b_i'])
    return out[0, 0]


# ------------------------- deterministic parameters ---------------------------
def init_params(key, seq_len):
    E, H4, T = EMB, 4 * EMB, seq_len + 1
    ks = iter(jax.random.split(key, 16))
    nrm = lambda k, shp: (jax.random.normal(k, shp, jnp.float32) * 0.02)

    p = {}
    # Conv1d(3 -> E, k=1): xavier_uniform weight, default-uniform bias
    bound_w = math.sqrt(6.0 / (C_IN + E))
    cw = jax.random.uniform(next(ks), (C_IN, E), jnp.float32, -bound_w, bound_w)
    p['conv_w'] = jnp.concatenate([cw, jnp.zeros((C_PAD - C_IN, E), jnp.float32)], axis=0)
    bound_b = 1.0 / math.sqrt(C_IN)
    p['conv_b'] = jax.random.uniform(next(ks), (1, E), jnp.float32, -bound_b, bound_b)

    # sinusoidal positional encoding (first T rows)
    pos = np.arange(T, dtype=np.float32)[:, None]
    div = np.exp(np.arange(0, E, 2, dtype=np.float32) * (-math.log(10000.0) / E))
    pe = np.zeros((T, E), np.float32)
    pe[:, 0::2] = np.sin(pos * div)
    pe[:, 1::2] = np.cos(pos * div)
    p['pe'] = jnp.asarray(pe)

    # transformer block (QKV fused into one (E, 3E) weight; no QKV bias)
    p['ln1_g'] = jnp.ones((1, E), jnp.float32); p['ln1_b'] = jnp.zeros((1, E), jnp.float32)
    wq, wk, wv = nrm(next(ks), (E, E)), nrm(next(ks), (E, E)), nrm(next(ks), (E, E))
    p['w_qkv'] = jnp.concatenate([wq, wk, wv], axis=1)               # (E, 3E)
    p['wo'] = nrm(next(ks), (E, E)); p['bo'] = jnp.zeros((1, E), jnp.float32)
    p['ln2_g'] = jnp.ones((1, E), jnp.float32); p['ln2_b'] = jnp.zeros((1, E), jnp.float32)
    p['w1'] = nrm(next(ks), (E, H4)); p['b1'] = jnp.zeros((1, H4), jnp.float32)
    p['w2'] = nrm(next(ks), (H4, E)); p['b2'] = jnp.zeros((1, E), jnp.float32)
    p['lnf_g'] = jnp.ones((1, E), jnp.float32); p['lnf_b'] = jnp.zeros((1, E), jnp.float32)

    # projection heads (eye: 2E -> PROJ, image: 768 -> PROJ)
    p['wp_e'] = nrm(next(ks), (2 * E, PROJ)); p['bp_e'] = jnp.zeros((1, PROJ), jnp.float32)
    p['wf_e'] = nrm(next(ks), (PROJ, PROJ));  p['bf_e'] = jnp.zeros((1, PROJ), jnp.float32)
    p['g_e'] = jnp.ones((1, PROJ), jnp.float32); p['b_e'] = jnp.zeros((1, PROJ), jnp.float32)
    p['wp_i'] = nrm(next(ks), (IMG_DIM, PROJ)); p['bp_i'] = jnp.zeros((1, PROJ), jnp.float32)
    p['wf_i'] = nrm(next(ks), (PROJ, PROJ));    p['bf_i'] = jnp.zeros((1, PROJ), jnp.float32)
    p['g_i'] = jnp.ones((1, PROJ), jnp.float32); p['b_i'] = jnp.zeros((1, PROJ), jnp.float32)
    return p


# ---------------------------------- main ---------------------------------------
if __name__ == "__main__":
    B, S = 2, 8
    key = jax.random.PRNGKey(0)
    k_eye, k_img, k_par = jax.random.split(key, 3)

    batch = {
        'eye_data': jax.random.normal(k_eye, (B, C_IN, S), jnp.float32),      # NCW
        'img_features': jax.random.normal(k_img, (B, IMG_DIM), jnp.float32),  # ViT output stand-in
    }
    params = init_params(k_par, seq_len=S)

    loss = contrastive_model_forward(batch, params)
    jax.block_until_ready(loss)
    print("KERNEL_OK")
</pallas_src>

<mosaic_0001>
module attributes {stable_mosaic.version = 11 : i64} {
  func.func @fused_kernel(%arg0: memref<2x16x8xf32, #tpu.memory_space<vmem>>, %arg1: memref<16x32xf32, #tpu.memory_space<vmem>>, %arg2: memref<8x32xf32, #tpu.memory_space<vmem>>, %arg3: memref<1x32xf32, #tpu.memory_space<vmem>>, %arg4: memref<1x32xf32, #tpu.memory_space<vmem>>, %arg5: memref<1x32xf32, #tpu.memory_space<vmem>>, %arg6: memref<32x96xf32, #tpu.memory_space<vmem>>, %arg7: memref<32x32xf32, #tpu.memory_space<vmem>>, %arg8: memref<1x32xf32, #tpu.memory_space<vmem>>, %arg9: memref<1x32xf32, #tpu.memory_space<vmem>>, %arg10: memref<1x32xf32, #tpu.memory_space<vmem>>, %arg11: memref<32x128xf32, #tpu.memory_space<vmem>>, %arg12: memref<1x128xf32, #tpu.memory_space<vmem>>, %arg13: memref<128x32xf32, #tpu.memory_space<vmem>>, %arg14: memref<1x32xf32, #tpu.memory_space<vmem>>, %arg15: memref<1x32xf32, #tpu.memory_space<vmem>>, %arg16: memref<1x32xf32, #tpu.memory_space<vmem>>, %arg17: memref<2x768xf32, #tpu.memory_space<vmem>>, %arg18: memref<64x64xf32, #tpu.memory_space<vmem>>, %arg19: memref<1x64xf32, #tpu.memory_space<vmem>>, %arg20: memref<64x64xf32, #tpu.memory_space<vmem>>, %arg21: memref<1x64xf32, #tpu.memory_space<vmem>>, %arg22: memref<1x64xf32, #tpu.memory_space<vmem>>, %arg23: memref<1x64xf32, #tpu.memory_space<vmem>>, %arg24: memref<768x64xf32, #tpu.memory_space<vmem>>, %arg25: memref<1x64xf32, #tpu.memory_space<vmem>>, %arg26: memref<64x64xf32, #tpu.memory_space<vmem>>, %arg27: memref<1x64xf32, #tpu.memory_space<vmem>>, %arg28: memref<1x64xf32, #tpu.memory_space<vmem>>, %arg29: memref<1x64xf32, #tpu.memory_space<vmem>>, %arg30: memref<1x1xf32, #tpu.memory_space<vmem>>) attributes {dimension_semantics = [], scalar_prefetch = 0 : i64, scratch_operands = 0 : i64, tpu.core_type = #tpu.core_type<tc>} {
    %0 = tpu.iota {dimensions = array<i32: 0>} : vector<16x32xi32>
    %c1_i32 = arith.constant 1 : i32
    %1 = vector.broadcast %c1_i32 : i32 to vector<16x32xi32>
    %2 = arith.cmpi sge, %0, %1 : vector<16x32xi32>
    %c8_i32 = arith.constant 8 : i32
    %3 = vector.broadcast %c8_i32 : i32 to vector<16x32xi32>
    %4 = arith.cmpi sle, %0, %3 : vector<16x32xi32>
    %5 = arith.andi %2, %4 : vector<16x32xi1>
    %6 = arith.extui %5 : vector<16x32xi1> to vector<16x32xi32>
    %7 = arith.sitofp %6 : vector<16x32xi32> to vector<16x32xf32>
    %c0_i32 = arith.constant 0 : i32
    %8 = vector.broadcast %c0_i32 : i32 to vector<16x32xi32>
    %9 = arith.cmpi eq, %0, %8 : vector<16x32xi32>
    %10 = arith.extui %9 : vector<16x32xi1> to vector<16x32xi32>
    %11 = arith.sitofp %10 : vector<16x32xi32> to vector<16x32xf32>
    %12 = tpu.iota {dimensions = array<i32: 1>} : vector<16x16xi32>
    %c9_i32 = arith.constant 9 : i32
    %13 = vector.broadcast %c9_i32 : i32 to vector<16x16xi32>
    %14 = arith.cmpi slt, %12, %13 : vector<16x16xi32>
    %c0 = arith.constant 0 : index
    %c0_0 = arith.constant 0 : index
    %c0_1 = arith.constant 0 : index
    %15 = vector.load %arg0[%c0, %c0_0, %c0_1] : memref<2x16x8xf32, #tpu.memory_space<vmem>>, vector<2x16x8xf32>
    %16 = vector.shape_cast %15 : vector<2x16x8xf32> to vector<32x8xf32>
    %c0_2 = arith.constant 0 : index
    %c0_3 = arith.constant 0 : index
    %17 = vector.load %arg2[%c0_2, %c0_3] : memref<8x32xf32, #tpu.memory_space<vmem>>, vector<8x32xf32>
    %cst = arith.constant dense<0.000000e+00> : vector<32x32xf32>
    %18 = tpu.matmul %16, %17, %cst {dimension_numbers = #tpu.dot_dimension_numbers<[1], [0], [0], [1], [0, 0, 1, 1], [], []>} : vector<32x8xf32>, vector<8x32xf32>, vector<32x32xf32> -> vector<32x32xf32>
    %c0_4 = arith.constant 0 : index
    %c0_5 = arith.constant 0 : index
    %19 = vector.load %arg3[%c0_4, %c0_5] : memref<1x32xf32, #tpu.memory_space<vmem>>, vector<1x32xf32>
    %20 = vector.broadcast %19 : vector<1x32xf32> to vector<32x32xf32>
    %21 = arith.addf %18, %20 : vector<32x32xf32>
    %22 = vector.shape_cast %21 : vector<32x32xf32> to vector<2x16x32xf32>
    %23 = vector.shape_cast %7 : vector<16x32xf32> to vector<1x16x32xf32>
    %24 = vector.broadcast %23 : vector<1x16x32xf32> to vector<2x16x32xf32>
    %25 = arith.mulf %22, %24 : vector<2x16x32xf32>
    %c0_6 = arith.constant 0 : index
    %c0_7 = arith.constant 0 : index
    %26 = vector.load %arg1[%c0_6, %c0_7] : memref<16x32xf32, #tpu.memory_space<vmem>>, vector<16x32xf32>
    %27 = vector.shape_cast %26 : vector<16x32xf32> to vector<1x16x32xf32>
    %28 = vector.broadcast %27 : vector<1x16x32xf32> to vector<2x16x32xf32>
    %29 = arith.addf %25, %28 : vector<2x16x32xf32>
    %30 = vector.shape_cast %29 : vector<2x16x32xf32> to vector<32x32xf32>
    %c0_8 = arith.constant 0 : index
    %c0_9 = arith.constant 0 : index
    %31 = vector.load %arg4[%c0_8, %c0_9] : memref<1x32xf32, #tpu.memory_space<vmem>>, vector<1x32xf32>
    %c0_10 = arith.constant 0 : index
    %c0_11 = arith.constant 0 : index
    %32 = vector.load %arg5[%c0_10, %c0_11] : memref<1x32xf32, #tpu.memory_space<vmem>>, vector<1x32xf32>
    %cst_12 = arith.constant dense<0.000000e+00> : vector<32xf32>
    %33 = vector.multi_reduction <add>, %30, %cst_12 [1] : vector<32x32xf32> to vector<32xf32>
    %34 = vector.shape_cast %33 : vector<32xf32> to vector<32x1xf32>
    %cst_13 = arith.constant 3.200000e+01 : f32
    %35 = vector.broadcast %cst_13 : f32 to vector<32x1xf32>
    %36 = arith.divf %34, %35 : vector<32x1xf32>
    %37 = vector.broadcast %36 : vector<32x1xf32> to vector<32x32xf32>
    %38 = arith.subf %30, %37 : vector<32x32xf32>
    %39 = arith.mulf %38, %38 : vector<32x32xf32>
    %cst_14 = arith.constant dense<0.000000e+00> : vector<32xf32>
    %40 = vector.multi_reduction <add>, %39, %cst_14 [1] : vector<32x32xf32> to vector<32xf32>
    %41 = vector.shape_cast %40 : vector<32xf32> to vector<32x1xf32>
    %cst_15 = arith.constant 3.200000e+01 : f32
    %42 = vector.broadcast %cst_15 : f32 to vector<32x1xf32>
    %43 = arith.divf %41, %42 : vector<32x1xf32>
    %44 = vector.broadcast %36 : vector<32x1xf32> to vector<32x32xf32>
    %45 = arith.subf %30, %44 : vector<32x32xf32>
    %cst_16 = arith.constant 9.99999974E-6 : f32
    %46 = vector.broadcast %cst_16 : f32 to vector<32x1xf32>
    %47 = arith.addf %43, %46 : vector<32x1xf32>
    %48 = math.rsqrt %47 : vector<32x1xf32>
    %49 = vector.broadcast %48 : vector<32x1xf32> to vector<32x32xf32>
    %50 = arith.mulf %45, %49 : vector<32x32xf32>
    %51 = vector.broadcast %31 : vector<1x32xf32> to vector<32x32xf32>
    %52 = arith.mulf %50, %51 : vector<32x32xf32>
    %53 = vector.broadcast %32 : vector<1x32xf32> to vector<32x32xf32>
    %54 = arith.addf %52, %53 : vector<32x32xf32>
    %c0_17 = arith.constant 0 : index
    %c0_18 = arith.constant 0 : index
    %55 = vector.load %arg6[%c0_17, %c0_18] : memref<32x96xf32, #tpu.memory_space<vmem>>, vector<32x96xf32>
    %cst_19 = arith.constant dense<0.000000e+00> : vector<32x96xf32>
    %56 = tpu.matmul %54, %55, %cst_19 {dimension_numbers = #tpu.dot_dimension_numbers<[1], [0], [0], [1], [0, 0, 1, 1], [], []>} : vector<32x32xf32>, vector<32x96xf32>, vector<32x96xf32> -> vector<32x96xf32>
    %57 = vector.extract_strided_slice %56 {offsets = [0, 0], sizes = [32, 32], strides = [1, 1]} : vector<32x96xf32> to vector<32x32xf32>
    %58 = vector.shape_cast %57 : vector<32x32xf32> to vector<2x16x32xf32>
    %59 = vector.extract_strided_slice %56 {offsets = [0, 32], sizes = [32, 32], strides = [1, 1]} : vector<32x96xf32> to vector<32x32xf32>
    %60 = vector.shape_cast %59 : vector<32x32xf32> to vector<2x16x32xf32>
    %61 = vector.extract_strided_slice %56 {offsets = [0, 64], sizes = [32, 32], strides = [1, 1]} : vector<32x96xf32> to vector<32x32xf32>
    %62 = vector.shape_cast %61 : vector<32x32xf32> to vector<2x16x32xf32>
    %63 = vector.extract_strided_slice %58 {offsets = [0, 0, 0], sizes = [2, 16, 8], strides = [1, 1, 1]} : vector<2x16x32xf32> to vector<2x16x8xf32>
    %64 = vector.extract_strided_slice %60 {offsets = [0, 0, 0], sizes = [2, 16, 8], strides = [1, 1, 1]} : vector<2x16x32xf32> to vector<2x16x8xf32>
    %65 = vector.extract_strided_slice %62 {offsets = [0, 0, 0], sizes = [2, 16, 8], strides = [1, 1, 1]} : vector<2x16x32xf32> to vector<2x16x8xf32>
    "tpu.trace_start"() <{level = 10 : i32, message = "btd,bsd->bts"}> : () -> ()
    %cst_20 = arith.constant dense<0.000000e+00> : vector<2x16x16xf32>
    %66 = tpu.matmul %63, %64, %cst_20 {dimension_numbers = #tpu.dot_dimension_numbers<[2], [2], [1], [1], [0, 0, 0, 1, 1, 1], [0], [0]>} : vector<2x16x8xf32>, vector<2x16x8xf32>, vector<2x16x16xf32> -> vector<2x16x16xf32>
    "tpu.trace_stop"() : () -> ()
    %cst_21 = arith.constant 0.176776692 : f32
    %67 = vector.broadcast %cst_21 : f32 to vector<2x16x16xf32>
    %68 = arith.mulf %66, %67 : vector<2x16x16xf32>
    %69 = vector.shape_cast %14 : vector<16x16xi1> to vector<1x16x16xi1>
    %cst_22 = arith.constant -1.000000e+30 : f32
    %70 = vector.shape_cast %69 : vector<1x16x16xi1> to vector<1x16x16xi1>
    %71 = vector.broadcast %70 : vector<1x16x16xi1> to vector<2x16x16xi1>
    %72 = vector.broadcast %cst_22 : f32 to vector<2x16x16xf32>
    %73 = arith.select %71, %68, %72 : vector<2x16x16xi1>, vector<2x16x16xf32>
    %cst_23 = arith.constant dense<0xFF800000> : vector<2x16xf32>
    %74 = vector.multi_reduction <maximumf>, %73, %cst_23 [2] : vector<2x16x16xf32> to vector<2x16xf32>
    %75 = vector.shape_cast %74 : vector<2x16xf32> to vector<2x16x1xf32>
    %76 = vector.broadcast %75 : vector<2x16x1xf32> to vector<2x16x16xf32>
    %77 = arith.subf %73, %76 : vector<2x16x16xf32>
    %78 = math.exp %77 : vector<2x16x16xf32>
    %cst_24 = arith.constant dense<0.000000e+00> : vector<2x16xf32>
    %79 = vector.multi_reduction <add>, %78, %cst_24 [2] : vector<2x16x16xf32> to vector<2x16xf32>
    %80 = vector.shape_cast %79 : vector<2x16xf32> to vector<2x16x1xf32>
    %81 = vector.broadcast %80 : vector<2x16x1xf32> to vector<2x16x16xf32>
    %82 = arith.divf %78, %81 : vector<2x16x16xf32>
    "tpu.trace_start"() <{level = 10 : i32, message = "bts,bsd->btd"}> : () -> ()
    %cst_25 = arith.constant dense<0.000000e+00> : vector<2x16x8xf32>
    %83 = tpu.matmul %82, %65, %cst_25 {dimension_numbers = #tpu.dot_dimension_numbers<[2], [1], [1], [2], [0, 0, 0, 1, 1, 2], [0], [0]>} : vector<2x16x16xf32>, vector<2x16x8xf32>, vector<2x16x8xf32> -> vector<2x16x8xf32>
    "tpu.trace_stop"() : () -> ()
    %84 = vector.extract_strided_slice %58 {offsets = [0, 0, 8], sizes = [2, 16, 8], strides = [1, 1, 1]} : vector<2x16x32xf32> to vector<2x16x8xf32>
    %85 = vector.extract_strided_slice %60 {offsets = [0, 0, 8], sizes = [2, 16, 8], strides = [1, 1, 1]} : vector<2x16x32xf32> to vector<2x16x8xf32>
    %86 = vector.extract_strided_slice %62 {offsets = [0, 0, 8], sizes = [2, 16, 8], strides = [1, 1, 1]} : vector<2x16x32xf32> to vector<2x16x8xf32>
    "tpu.trace_start"() <{level = 10 : i32, message = "btd,bsd->bts"}> : () -> ()
    %cst_26 = arith.constant dense<0.000000e+00> : vector<2x16x16xf32>
    %87 = tpu.matmul %84, %85, %cst_26 {dimension_numbers = #tpu.dot_dimension_numbers<[2], [2], [1], [1], [0, 0, 0, 1, 1, 1], [0], [0]>} : vector<2x16x8xf32>, vector<2x16x8xf32>, vector<2x16x16xf32> -> vector<2x16x16xf32>
    "tpu.trace_stop"() : () -> ()
    %cst_27 = arith.constant 0.176776692 : f32
    %88 = vector.broadcast %cst_27 : f32 to vector<2x16x16xf32>
    %89 = arith.mulf %87, %88 : vector<2x16x16xf32>
    %90 = vector.shape_cast %14 : vector<16x16xi1> to vector<1x16x16xi1>
    %cst_28 = arith.constant -1.000000e+30 : f32
    %91 = vector.shape_cast %90 : vector<1x16x16xi1> to vector<1x16x16xi1>
    %92 = vector.broadcast %91 : vector<1x16x16xi1> to vector<2x16x16xi1>
    %93 = vector.broadcast %cst_28 : f32 to vector<2x16x16xf32>
    %94 = arith.select %92, %89, %93 : vector<2x16x16xi1>, vector<2x16x16xf32>
    %cst_29 = arith.constant dense<0xFF800000> : vector<2x16xf32>
    %95 = vector.multi_reduction <maximumf>, %94, %cst_29 [2] : vector<2x16x16xf32> to vector<2x16xf32>
    %96 = vector.shape_cast %95 : vector<2x16xf32> to vector<2x16x1xf32>
    %97 = vector.broadcast %96 : vector<2x16x1xf32> to vector<2x16x16xf32>
    %98 = arith.subf %94, %97 : vector<2x16x16xf32>
    %99 = math.exp %98 : vector<2x16x16xf32>
    %cst_30 = arith.constant dense<0.000000e+00> : vector<2x16xf32>
    %100 = vector.multi_reduction <add>, %99, %cst_30 [2] : vector<2x16x16xf32> to vector<2x16xf32>
    %101 = vector.shape_cast %100 : vector<2x16xf32> to vector<2x16x1xf32>
    %102 = vector.broadcast %101 : vector<2x16x1xf32> to vector<2x16x16xf32>
    %103 = arith.divf %99, %102 : vector<2x16x16xf32>
    "tpu.trace_start"() <{level = 10 : i32, message = "bts,bsd->btd"}> : () -> ()
    %cst_31 = arith.constant dense<0.000000e+00> : vector<2x16x8xf32>
    %104 = tpu.matmul %103, %86, %cst_31 {dimension_numbers = #tpu.dot_dimension_numbers<[2], [1], [1], [2], [0, 0, 0, 1, 1, 2], [0], [0]>} : vector<2x16x16xf32>, vector<2x16x8xf32>, vector<2x16x8xf32> -> vector<2x16x8xf32>
    "tpu.trace_stop"() : () -> ()
    %105 = vector.extract_strided_slice %58 {offsets = [0, 0, 16], sizes = [2, 16, 8], strides = [1, 1, 1]} : vector<2x16x32xf32> to vector<2x16x8xf32>
    %106 = vector.extract_strided_slice %60 {offsets = [0, 0, 16], sizes = [2, 16, 8], strides = [1, 1, 1]} : vector<2x16x32xf32> to vector<2x16x8xf32>
    %107 = vector.extract_strided_slice %62 {offsets = [0, 0, 16], sizes = [2, 16, 8], strides = [1, 1, 1]} : vector<2x16x32xf32> to vector<2x16x8xf32>
    "tpu.trace_start"() <{level = 10 : i32, message = "btd,bsd->bts"}> : () -> ()
    %cst_32 = arith.constant dense<0.000000e+00> : vector<2x16x16xf32>
    %108 = tpu.matmul %105, %106, %cst_32 {dimension_numbers = #tpu.dot_dimension_numbers<[2], [2], [1], [1], [0, 0, 0, 1, 1, 1], [0], [0]>} : vector<2x16x8xf32>, vector<2x16x8xf32>, vector<2x16x16xf32> -> vector<2x16x16xf32>
    "tpu.trace_stop"() : () -> ()
    %cst_33 = arith.constant 0.176776692 : f32
    %109 = vector.broadcast %cst_33 : f32 to vector<2x16x16xf32>
    %110 = arith.mulf %108, %109 : vector<2x16x16xf32>
    %111 = vector.shape_cast %14 : vector<16x16xi1> to vector<1x16x16xi1>
    %cst_34 = arith.constant -1.000000e+30 : f32
    %112 = vector.shape_cast %111 : vector<1x16x16xi1> to vector<1x16x16xi1>
    %113 = vector.broadcast %112 : vector<1x16x16xi1> to vector<2x16x16xi1>
    %114 = vector.broadcast %cst_34 : f32 to vector<2x16x16xf32>
    %115 = arith.select %113, %110, %114 : vector<2x16x16xi1>, vector<2x16x16xf32>
    %cst_35 = arith.constant dense<0xFF800000> : vector<2x16xf32>
    %116 = vector.multi_reduction <maximumf>, %115, %cst_35 [2] : vector<2x16x16xf32> to vector<2x16xf32>
    %117 = vector.shape_cast %116 : vector<2x16xf32> to vector<2x16x1xf32>
    %118 = vector.broadcast %117 : vector<2x16x1xf32> to vector<2x16x16xf32>
    %119 = arith.subf %115, %118 : vector<2x16x16xf32>
    %120 = math.exp %119 : vector<2x16x16xf32>
    %cst_36 = arith.constant dense<0.000000e+00> : vector<2x16xf32>
    %121 = vector.multi_reduction <add>, %120, %cst_36 [2] : vector<2x16x16xf32> to vector<2x16xf32>
    %122 = vector.shape_cast %121 : vector<2x16xf32> to vector<2x16x1xf32>
    %123 = vector.broadcast %122 : vector<2x16x1xf32> to vector<2x16x16xf32>
    %124 = arith.divf %120, %123 : vector<2x16x16xf32>
    "tpu.trace_start"() <{level = 10 : i32, message = "bts,bsd->btd"}> : () -> ()
    %cst_37 = arith.constant dense<0.000000e+00> : vector<2x16x8xf32>
    %125 = tpu.matmul %124, %107, %cst_37 {dimension_numbers = #tpu.dot_dimension_numbers<[2], [1], [1], [2], [0, 0, 0, 1, 1, 2], [0], [0]>} : vector<2x16x16xf32>, vector<2x16x8xf32>, vector<2x16x8xf32> -> vector<2x16x8xf32>
    "tpu.trace_stop"() : () -> ()
    %126 = vector.extract_strided_slice %58 {offsets = [0, 0, 24], sizes = [2, 16, 8], strides = [1, 1, 1]} : vector<2x16x32xf32> to vector<2x16x8xf32>
    %127 = vector.extract_strided_slice %60 {offsets = [0, 0, 24], sizes = [2, 16, 8], strides = [1, 1, 1]} : vector<2x16x32xf32> to vector<2x16x8xf32>
    %128 = vector.extract_strided_slice %62 {offsets = [0, 0, 24], sizes = [2, 16, 8], strides = [1, 1, 1]} : vector<2x16x32xf32> to vector<2x16x8xf32>
    "tpu.trace_start"() <{level = 10 : i32, message = "btd,bsd->bts"}> : () -> ()
    %cst_38 = arith.constant dense<0.000000e+00> : vector<2x16x16xf32>
    %129 = tpu.matmul %126, %127, %cst_38 {dimension_numbers = #tpu.dot_dimension_numbers<[2], [2], [1], [1], [0, 0, 0, 1, 1, 1], [0], [0]>} : vector<2x16x8xf32>, vector<2x16x8xf32>, vector<2x16x16xf32> -> vector<2x16x16xf32>
    "tpu.trace_stop"() : () -> ()
    %cst_39 = arith.constant 0.176776692 : f32
    %130 = vector.broadcast %cst_39 : f32 to vector<2x16x16xf32>
    %131 = arith.mulf %129, %130 : vector<2x16x16xf32>
    %132 = vector.shape_cast %14 : vector<16x16xi1> to vector<1x16x16xi1>
    %cst_40 = arith.constant -1.000000e+30 : f32
    %133 = vector.shape_cast %132 : vector<1x16x16xi1> to vector<1x16x16xi1>
    %134 = vector.broadcast %133 : vector<1x16x16xi1> to vector<2x16x16xi1>
    %135 = vector.broadcast %cst_40 : f32 to vector<2x16x16xf32>
    %136 = arith.select %134, %131, %135 : vector<2x16x16xi1>, vector<2x16x16xf32>
    %cst_41 = arith.constant dense<0xFF800000> : vector<2x16xf32>
    %137 = vector.multi_reduction <maximumf>, %136, %cst_41 [2] : vector<2x16x16xf32> to vector<2x16xf32>
    %138 = vector.shape_cast %137 : vector<2x16xf32> to vector<2x16x1xf32>
    %139 = vector.broadcast %138 : vector<2x16x1xf32> to vector<2x16x16xf32>
    %140 = arith.subf %136, %139 : vector<2x16x16xf32>
    %141 = math.exp %140 : vector<2x16x16xf32>
    %cst_42 = arith.constant dense<0.000000e+00> : vector<2x16xf32>
    %142 = vector.multi_reduction <add>, %141, %cst_42 [2] : vector<2x16x16xf32> to vector<2x16xf32>
    %143 = vector.shape_cast %142 : vector<2x16xf32> to vector<2x16x1xf32>
    %144 = vector.broadcast %143 : vector<2x16x1xf32> to vector<2x16x16xf32>
    %145 = arith.divf %141, %144 : vector<2x16x16xf32>
    "tpu.trace_start"() <{level = 10 : i32, message = "bts,bsd->btd"}> : () -> ()
    %cst_43 = arith.constant dense<0.000000e+00> : vector<2x16x8xf32>
    %146 = tpu.matmul %145, %128, %cst_43 {dimension_numbers = #tpu.dot_dimension_numbers<[2], [1], [1], [2], [0, 0, 0, 1, 1, 2], [0], [0]>} : vector<2x16x16xf32>, vector<2x16x8xf32>, vector<2x16x8xf32> -> vector<2x16x8xf32>
    "tpu.trace_stop"() : () -> ()
    %147 = tpu.concatenate %83, %104, %125, %146 in 2 : vector<2x16x8xf32>, vector<2x16x8xf32>, vector<2x16x8xf32>, vector<2x16x8xf32> -> vector<2x16x32xf32>
    %148 = vector.shape_cast %147 : vector<2x16x32xf32> to vector<32x32xf32>
    %c0_44 = arith.constant 0 : index
    %c0_45 = arith.constant 0 : index
    %149 = vector.load %arg7[%c0_44, %c0_45] : memref<32x32xf32, #tpu.memory_space<vmem>>, vector<32x32xf32>
    %cst_46 = arith.constant dense<0.000000e+00> : vector<32x32xf32>
    %150 = tpu.matmul %148, %149, %cst_46 {dimension_numbers = #tpu.dot_dimension_numbers<[1], [0], [0], [1], [0, 0, 1, 1], [], []>} : vector<32x32xf32>, vector<32x32xf32>, vector<32x32xf32> -> vector<32x32xf32>
    %c0_47 = arith.constant 0 : index
    %c0_48 = arith.constant 0 : index
    %151 = vector.load %arg8[%c0_47, %c0_48] : memref<1x32xf32, #tpu.memory_space<vmem>>, vector<1x32xf32>
    %152 = vector.broadcast %151 : vector<1x32xf32> to vector<32x32xf32>
    %153 = arith.addf %150, %152 : vector<32x32xf32>
    %154 = arith.addf %30, %153 : vector<32x32xf32>
    %c0_49 = arith.constant 0 : index
    %c0_50 = arith.constant 0 : index
    %155 = vector.load %arg9[%c0_49, %c0_50] : memref<1x32xf32, #tpu.memory_space<vmem>>, vector<1x32xf32>
    %c0_51 = arith.constant 0 : index
    %c0_52 = arith.constant 0 : index
    %156 = vector.load %arg10[%c0_51, %c0_52] : memref<1x32xf32, #tpu.memory_space<vmem>>, vector<1x32xf32>
    %cst_53 = arith.constant dense<0.000000e+00> : vector<32xf32>
    %157 = vector.multi_reduction <add>, %154, %cst_53 [1] : vector<32x32xf32> to vector<32xf32>
    %158 = vector.shape_cast %157 : vector<32xf32> to vector<32x1xf32>
    %cst_54 = arith.constant 3.200000e+01 : f32
    %159 = vector.broadcast %cst_54 : f32 to vector<32x1xf32>
    %160 = arith.divf %158, %159 : vector<32x1xf32>
    %161 = vector.broadcast %160 : vector<32x1xf32> to vector<32x32xf32>
    %162 = arith.subf %154, %161 : vector<32x32xf32>
    %163 = arith.mulf %162, %162 : vector<32x32xf32>
    %cst_55 = arith.constant dense<0.000000e+00> : vector<32xf32>
    %164 = vector.multi_reduction <add>, %163, %cst_55 [1] : vector<32x32xf32> to vector<32xf32>
    %165 = vector.shape_cast %164 : vector<32xf32> to vector<32x1xf32>
    %cst_56 = arith.constant 3.200000e+01 : f32
    %166 = vector.broadcast %cst_56 : f32 to vector<32x1xf32>
    %167 = arith.divf %165, %166 : vector<32x1xf32>
    %168 = vector.broadcast %160 : vector<32x1xf32> to vector<32x32xf32>
    %169 = arith.subf %154, %168 : vector<32x32xf32>
    %cst_57 = arith.constant 9.99999974E-6 : f32
    %170 = vector.broadcast %cst_57 : f32 to vector<32x1xf32>
    %171 = arith.addf %167, %170 : vector<32x1xf32>
    %172 = math.rsqrt %171 : vector<32x1xf32>
    %173 = vector.broadcast %172 : vector<32x1xf32> to vector<32x32xf32>
    %174 = arith.mulf %169, %173 : vector<32x32xf32>
    %175 = vector.broadcast %155 : vector<1x32xf32> to vector<32x32xf32>
    %176 = arith.mulf %174, %175 : vector<32x32xf32>
    %177 = vector.broadcast %156 : vector<1x32xf32> to vector<32x32xf32>
    %178 = arith.addf %176, %177 : vector<32x32xf32>
    %c0_58 = arith.constant 0 : index
    %c0_59 = arith.constant 0 : index
    %179 = vector.load %arg11[%c0_58, %c0_59] : memref<32x128xf32, #tpu.memory_space<vmem>>, vector<32x128xf32>
    %cst_60 = arith.constant dense<0.000000e+00> : vector<32x128xf32>
    %180 = tpu.matmul %178, %179, %cst_60 {dimension_numbers = #tpu.dot_dimension_numbers<[1], [0], [0], [1], [0, 0, 1, 1], [], []>} : vector<32x32xf32>, vector<32x128xf32>, vector<32x128xf32> -> vector<32x128xf32>
    %c0_61 = arith.constant 0 : index
    %c0_62 = arith.constant 0 : index
    %181 = vector.load %arg12[%c0_61, %c0_62] : memref<1x128xf32, #tpu.memory_space<vmem>>, vector<1x128xf32>
    %182 = vector.broadcast %181 : vector<1x128xf32> to vector<32x128xf32>
    %183 = arith.addf %180, %182 : vector<32x128xf32>
    %cst_63 = arith.constant 5.000000e-01 : f32
    %184 = vector.broadcast %cst_63 : f32 to vector<32x128xf32>
    %185 = arith.mulf %184, %183 : vector<32x128xf32>
    %cst_64 = arith.constant 0.707106769 : f32
    %186 = vector.broadcast %cst_64 : f32 to vector<32x128xf32>
    %187 = arith.mulf %183, %186 : vector<32x128xf32>
    %cst_65 = arith.constant 0.000000e+00 : f32
    %188 = vector.broadcast %cst_65 : f32 to vector<32x128xf32>
    %189 = arith.cmpf oge, %187, %188 : vector<32x128xf32>
    %cst_66 = arith.constant 1.000000e+00 : f32
    %cst_67 = arith.constant -1.000000e+00 : f32
    %190 = vector.broadcast %cst_66 : f32 to vector<32x128xf32>
    %191 = vector.broadcast %cst_67 : f32 to vector<32x128xf32>
    %192 = arith.select %189, %190, %191 : vector<32x128xi1>, vector<32x128xf32>
    %193 = math.absf %187 : vector<32x128xf32>
    %cst_68 = arith.constant 0.327591091 : f32
    %194 = vector.broadcast %cst_68 : f32 to vector<32x128xf32>
    %195 = arith.mulf %194, %193 : vector<32x128xf32>
    %cst_69 = arith.constant 1.000000e+00 : f32
    %196 = vector.broadcast %cst_69 : f32 to vector<32x128xf32>
    %197 = arith.addf %196, %195 : vector<32x128xf32>
    %cst_70 = arith.constant 1.000000e+00 : f32
    %198 = vector.broadcast %cst_70 : f32 to vector<32x128xf32>
    %199 = arith.divf %198, %197 : vector<32x128xf32>
    %cst_71 = arith.constant 1.06140542 : f32
    %200 = vector.broadcast %cst_71 : f32 to vector<32x128xf32>
    %201 = arith.mulf %200, %199 : vector<32x128xf32>
    %cst_72 = arith.constant -1.45315206 : f32
    %202 = vector.broadcast %cst_72 : f32 to vector<32x128xf32>
    %203 = arith.addf %201, %202 : vector<32x128xf32>
    %204 = arith.mulf %203, %199 : vector<32x128xf32>
    %cst_73 = arith.constant 1.42141378 : f32
    %205 = vector.broadcast %cst_73 : f32 to vector<32x128xf32>
    %206 = arith.addf %204, %205 : vector<32x128xf32>
    %207 = arith.mulf %206, %199 : vector<32x128xf32>
    %cst_74 = arith.constant -0.284496725 : f32
    %208 = vector.broadcast %cst_74 : f32 to vector<32x128xf32>
    %209 = arith.addf %207, %208 : vector<32x128xf32>
    %210 = arith.mulf %209, %199 : vector<32x128xf32>
    %cst_75 = arith.constant 0.254829586 : f32
    %211 = vector.broadcast %cst_75 : f32 to vector<32x128xf32>
    %212 = arith.addf %210, %211 : vector<32x128xf32>
    %213 = arith.mulf %212, %199 : vector<32x128xf32>
    %cst_76 = arith.constant 0.000000e+00 : f32
    %214 = vector.broadcast %cst_76 : f32 to vector<32x128xf32>
    %215 = arith.subf %214, %193 : vector<32x128xf32>
    %216 = arith.mulf %215, %193 : vector<32x128xf32>
    %217 = math.exp %216 : vector<32x128xf32>
    %218 = arith.mulf %213, %217 : vector<32x128xf32>
    %cst_77 = arith.constant 1.000000e+00 : f32
    %219 = vector.broadcast %cst_77 : f32 to vector<32x128xf32>
    %220 = arith.subf %219, %218 : vector<32x128xf32>
    %221 = arith.mulf %192, %220 : vector<32x128xf32>
    %cst_78 = arith.constant 1.000000e+00 : f32
    %222 = vector.broadcast %cst_78 : f32 to vector<32x128xf32>
    %223 = arith.addf %222, %221 : vector<32x128xf32>
    %224 = arith.mulf %185, %223 : vector<32x128xf32>
    %c0_79 = arith.constant 0 : index
    %c0_80 = arith.constant 0 : index
    %225 = vector.load %arg13[%c0_79, %c0_80] : memref<128x32xf32, #tpu.memory_space<vmem>>, vector<128x32xf32>
    %cst_81 = arith.constant dense<0.000000e+00> : vector<32x32xf32>
    %226 = tpu.matmul %224, %225, %cst_81 {dimension_numbers = #tpu.dot_dimension_numbers<[1], [0], [0], [1], [0, 0, 1, 1], [], []>} : vector<32x128xf32>, vector<128x32xf32>, vector<32x32xf32> -> vector<32x32xf32>
    %c0_82 = arith.constant 0 : index
    %c0_83 = arith.constant 0 : index
    %227 = vector.load %arg14[%c0_82, %c0_83] : memref<1x32xf32, #tpu.memory_space<vmem>>, vector<1x32xf32>
    %228 = vector.broadcast %227 : vector<1x32xf32> to vector<32x32xf32>
    %229 = arith.addf %226, %228 : vector<32x32xf32>
    %230 = arith.addf %154, %229 : vector<32x32xf32>
    %c0_84 = arith.constant 0 : index
    %c0_85 = arith.constant 0 : index
    %231 = vector.load %arg15[%c0_84, %c0_85] : memref<1x32xf32, #tpu.memory_space<vmem>>, vector<1x32xf32>
    %c0_86 = arith.constant 0 : index
    %c0_87 = arith.constant 0 : index
    %232 = vector.load %arg16[%c0_86, %c0_87] : memref<1x32xf32, #tpu.memory_space<vmem>>, vector<1x32xf32>
    %cst_88 = arith.constant dense<0.000000e+00> : vector<32xf32>
    %233 = vector.multi_reduction <add>, %230, %cst_88 [1] : vector<32x32xf32> to vector<32xf32>
    %234 = vector.shape_cast %233 : vector<32xf32> to vector<32x1xf32>
    %cst_89 = arith.constant 3.200000e+01 : f32
    %235 = vector.broadcast %cst_89 : f32 to vector<32x1xf32>
    %236 = arith.divf %234, %235 : vector<32x1xf32>
    %237 = vector.broadcast %236 : vector<32x1xf32> to vector<32x32xf32>
    %238 = arith.subf %230, %237 : vector<32x32xf32>
    %239 = arith.mulf %238, %238 : vector<32x32xf32>
    %cst_90 = arith.constant dense<0.000000e+00> : vector<32xf32>
    %240 = vector.multi_reduction <add>, %239, %cst_90 [1] : vector<32x32xf32> to vector<32xf32>
    %241 = vector.shape_cast %240 : vector<32xf32> to vector<32x1xf32>
    %cst_91 = arith.constant 3.200000e+01 : f32
    %242 = vector.broadcast %cst_91 : f32 to vector<32x1xf32>
    %243 = arith.divf %241, %242 : vector<32x1xf32>
    %244 = vector.broadcast %236 : vector<32x1xf32> to vector<32x32xf32>
    %245 = arith.subf %230, %244 : vector<32x32xf32>
    %cst_92 = arith.constant 9.99999974E-6 : f32
    %246 = vector.broadcast %cst_92 : f32 to vector<32x1xf32>
    %247 = arith.addf %243, %246 : vector<32x1xf32>
    %248 = math.rsqrt %247 : vector<32x1xf32>
    %249 = vector.broadcast %248 : vector<32x1xf32> to vector<32x32xf32>
    %250 = arith.mulf %245, %249 : vector<32x32xf32>
    %251 = vector.broadcast %231 : vector<1x32xf32> to vector<32x32xf32>
    %252 = arith.mulf %250, %251 : vector<32x32xf32>
    %253 = vector.broadcast %232 : vector<1x32xf32> to vector<32x32xf32>
    %254 = arith.addf %252, %253 : vector<32x32xf32>
    %255 = vector.shape_cast %254 : vector<32x32xf32> to vector<2x16x32xf32>
    %256 = vector.shape_cast %11 : vector<16x32xf32> to vector<1x16x32xf32>
    %257 = vector.broadcast %256 : vector<1x16x32xf32> to vector<2x16x32xf32>
    %258 = arith.mulf %255, %257 : vector<2x16x32xf32>
    %cst_93 = arith.constant dense<0.000000e+00> : vector<2x32xf32>
    %259 = vector.multi_reduction <add>, %258, %cst_93 [1] : vector<2x16x32xf32> to vector<2x32xf32>
    %260 = vector.shape_cast %7 : vector<16x32xf32> to vector<1x16x32xf32>
    %261 = vector.broadcast %260 : vector<1x16x32xf32> to vector<2x16x32xf32>
    %262 = arith.mulf %255, %261 : vector<2x16x32xf32>
    %cst_94 = arith.constant dense<0.000000e+00> : vector<2x32xf32>
    %263 = vector.multi_reduction <add>, %262, %cst_94 [1] : vector<2x16x32xf32> to vector<2x32xf32>
    %cst_95 = arith.constant 1.250000e-01 : f32
    %264 = vector.broadcast %cst_95 : f32 to vector<2x32xf32>
    %265 = arith.mulf %263, %264 : vector<2x32xf32>
    %c0_96 = arith.constant 0 : index
    %c0_97 = arith.constant 0 : index
    %266 = vector.load %arg15[%c0_96, %c0_97] : memref<1x32xf32, #tpu.memory_space<vmem>>, vector<1x32xf32>
    %c0_98 = arith.constant 0 : index
    %c0_99 = arith.constant 0 : index
    %267 = vector.load %arg16[%c0_98, %c0_99] : memref<1x32xf32, #tpu.memory_space<vmem>>, vector<1x32xf32>
    %cst_100 = arith.constant dense<0.000000e+00> : vector<2xf32>
    %268 = vector.multi_reduction <add>, %265, %cst_100 [1] : vector<2x32xf32> to vector<2xf32>
    %269 = vector.shape_cast %268 : vector<2xf32> to vector<2x1xf32>
    %cst_101 = arith.constant 3.200000e+01 : f32
    %270 = vector.broadcast %cst_101 : f32 to vector<2x1xf32>
    %271 = arith.divf %269, %270 : vector<2x1xf32>
    %272 = vector.broadcast %271 : vector<2x1xf32> to vector<2x32xf32>
    %273 = arith.subf %265, %272 : vector<2x32xf32>
    %274 = arith.mulf %273, %273 : vector<2x32xf32>
    %cst_102 = arith.constant dense<0.000000e+00> : vector<2xf32>
    %275 = vector.multi_reduction <add>, %274, %cst_102 [1] : vector<2x32xf32> to vector<2xf32>
    %276 = vector.shape_cast %275 : vector<2xf32> to vector<2x1xf32>
    %cst_103 = arith.constant 3.200000e+01 : f32
    %277 = vector.broadcast %cst_103 : f32 to vector<2x1xf32>
    %278 = arith.divf %276, %277 : vector<2x1xf32>
    %279 = vector.broadcast %271 : vector<2x1xf32> to vector<2x32xf32>
    %280 = arith.subf %265, %279 : vector<2x32xf32>
    %cst_104 = arith.constant 9.99999974E-6 : f32
    %281 = vector.broadcast %cst_104 : f32 to vector<2x1xf32>
    %282 = arith.addf %278, %281 : vector<2x1xf32>
    %283 = math.rsqrt %282 : vector<2x1xf32>
    %284 = vector.broadcast %283 : vector<2x1xf32> to vector<2x32xf32>
    %285 = arith.mulf %280, %284 : vector<2x32xf32>
    %286 = vector.broadcast %266 : vector<1x32xf32> to vector<2x32xf32>
    %287 = arith.mulf %285, %286 : vector<2x32xf32>
    %288 = vector.broadcast %267 : vector<1x32xf32> to vector<2x32xf32>
    %289 = arith.addf %287, %288 : vector<2x32xf32>
    %290 = tpu.concatenate %289, %259 in 1 : vector<2x32xf32>, vector<2x32xf32> -> vector<2x64xf32>
    %c0_105 = arith.constant 0 : index
    %c0_106 = arith.constant 0 : index
    %291 = vector.load %arg18[%c0_105, %c0_106] : memref<64x64xf32, #tpu.memory_space<vmem>>, vector<64x64xf32>
    %c0_107 = arith.constant 0 : index
    %c0_108 = arith.constant 0 : index
    %292 = vector.load %arg19[%c0_107, %c0_108] : memref<1x64xf32, #tpu.memory_space<vmem>>, vector<1x64xf32>
    %c0_109 = arith.constant 0 : index
    %c0_110 = arith.constant 0 : index
    %293 = vector.load %arg20[%c0_109, %c0_110] : memref<64x64xf32, #tpu.memory_space<vmem>>, vector<64x64xf32>
    %c0_111 = arith.constant 0 : index
    %c0_112 = arith.constant 0 : index
    %294 = vector.load %arg21[%c0_111, %c0_112] : memref<1x64xf32, #tpu.memory_space<vmem>>, vector<1x64xf32>
    %c0_113 = arith.constant 0 : index
    %c0_114 = arith.constant 0 : index
    %295 = vector.load %arg22[%c0_113, %c0_114] : memref<1x64xf32, #tpu.memory_space<vmem>>, vector<1x64xf32>
    %c0_115 = arith.constant 0 : index
    %c0_116 = arith.constant 0 : index
    %296 = vector.load %arg23[%c0_115, %c0_116] : memref<1x64xf32, #tpu.memory_space<vmem>>, vector<1x64xf32>
    %cst_117 = arith.constant dense<0.000000e+00> : vector<2x64xf32>
    %297 = tpu.matmul %290, %291, %cst_117 {dimension_numbers = #tpu.dot_dimension_numbers<[1], [0], [0], [1], [0, 0, 1, 1], [], []>} : vector<2x64xf32>, vector<64x64xf32>, vector<2x64xf32> -> vector<2x64xf32>
    %298 = vector.broadcast %292 : vector<1x64xf32> to vector<2x64xf32>
    %299 = arith.addf %297, %298 : vector<2x64xf32>
    %cst_118 = arith.constant 5.000000e-01 : f32
    %300 = vector.broadcast %cst_118 : f32 to vector<2x64xf32>
    %301 = arith.mulf %300, %299 : vector<2x64xf32>
    %cst_119 = arith.constant 0.707106769 : f32
    %302 = vector.broadcast %cst_119 : f32 to vector<2x64xf32>
    %303 = arith.mulf %299, %302 : vector<2x64xf32>
    %cst_120 = arith.constant 0.000000e+00 : f32
    %304 = vector.broadcast %cst_120 : f32 to vector<2x64xf32>
    %305 = arith.cmpf oge, %303, %304 : vector<2x64xf32>
    %cst_121 = arith.constant 1.000000e+00 : f32
    %cst_122 = arith.constant -1.000000e+00 : f32
    %306 = vector.broadcast %cst_121 : f32 to vector<2x64xf32>
    %307 = vector.broadcast %cst_122 : f32 to vector<2x64xf32>
    %308 = arith.select %305, %306, %307 : vector<2x64xi1>, vector<2x64xf32>
    %309 = math.absf %303 : vector<2x64xf32>
    %cst_123 = arith.constant 0.327591091 : f32
    %310 = vector.broadcast %cst_123 : f32 to vector<2x64xf32>
    %311 = arith.mulf %310, %309 : vector<2x64xf32>
    %cst_124 = arith.constant 1.000000e+00 : f32
    %312 = vector.broadcast %cst_124 : f32 to vector<2x64xf32>
    %313 = arith.addf %312, %311 : vector<2x64xf32>
    %cst_125 = arith.constant 1.000000e+00 : f32
    %314 = vector.broadcast %cst_125 : f32 to vector<2x64xf32>
    %315 = arith.divf %314, %313 : vector<2x64xf32>
    %cst_126 = arith.constant 1.06140542 : f32
    %316 = vector.broadcast %cst_126 : f32 to vector<2x64xf32>
    %317 = arith.mulf %316, %315 : vector<2x64xf32>
    %cst_127 = arith.constant -1.45315206 : f32
    %318 = vector.broadcast %cst_127 : f32 to vector<2x64xf32>
    %319 = arith.addf %317, %318 : vector<2x64xf32>
    %320 = arith.mulf %319, %315 : vector<2x64xf32>
    %cst_128 = arith.constant 1.42141378 : f32
    %321 = vector.broadcast %cst_128 : f32 to vector<2x64xf32>
    %322 = arith.addf %320, %321 : vector<2x64xf32>
    %323 = arith.mulf %322, %315 : vector<2x64xf32>
    %cst_129 = arith.constant -0.284496725 : f32
    %324 = vector.broadcast %cst_129 : f32 to vector<2x64xf32>
    %325 = arith.addf %323, %324 : vector<2x64xf32>
    %326 = arith.mulf %325, %315 : vector<2x64xf32>
    %cst_130 = arith.constant 0.254829586 : f32
    %327 = vector.broadcast %cst_130 : f32 to vector<2x64xf32>
    %328 = arith.addf %326, %327 : vector<2x64xf32>
    %329 = arith.mulf %328, %315 : vector<2x64xf32>
    %cst_131 = arith.constant 0.000000e+00 : f32
    %330 = vector.broadcast %cst_131 : f32 to vector<2x64xf32>
    %331 = arith.subf %330, %309 : vector<2x64xf32>
    %332 = arith.mulf %331, %309 : vector<2x64xf32>
    %333 = math.exp %332 : vector<2x64xf32>
    %334 = arith.mulf %329, %333 : vector<2x64xf32>
    %cst_132 = arith.constant 1.000000e+00 : f32
    %335 = vector.broadcast %cst_132 : f32 to vector<2x64xf32>
    %336 = arith.subf %335, %334 : vector<2x64xf32>
    %337 = arith.mulf %308, %336 : vector<2x64xf32>
    %cst_133 = arith.constant 1.000000e+00 : f32
    %338 = vector.broadcast %cst_133 : f32 to vector<2x64xf32>
    %339 = arith.addf %338, %337 : vector<2x64xf32>
    %340 = arith.mulf %301, %339 : vector<2x64xf32>
    %cst_134 = arith.constant dense<0.000000e+00> : vector<2x64xf32>
    %341 = tpu.matmul %340, %293, %cst_134 {dimension_numbers = #tpu.dot_dimension_numbers<[1], [0], [0], [1], [0, 0, 1, 1], [], []>} : vector<2x64xf32>, vector<64x64xf32>, vector<2x64xf32> -> vector<2x64xf32>
    %342 = vector.broadcast %294 : vector<1x64xf32> to vector<2x64xf32>
    %343 = arith.addf %341, %342 : vector<2x64xf32>
    %344 = arith.addf %343, %299 : vector<2x64xf32>
    %cst_135 = arith.constant dense<0.000000e+00> : vector<2xf32>
    %345 = vector.multi_reduction <add>, %344, %cst_135 [1] : vector<2x64xf32> to vector<2xf32>
    %346 = vector.shape_cast %345 : vector<2xf32> to vector<2x1xf32>
    %cst_136 = arith.constant 6.400000e+01 : f32
    %347 = vector.broadcast %cst_136 : f32 to vector<2x1xf32>
    %348 = arith.divf %346, %347 : vector<2x1xf32>
    %349 = vector.broadcast %348 : vector<2x1xf32> to vector<2x64xf32>
    %350 = arith.subf %344, %349 : vector<2x64xf32>
    %351 = arith.mulf %350, %350 : vector<2x64xf32>
    %cst_137 = arith.constant dense<0.000000e+00> : vector<2xf32>
    %352 = vector.multi_reduction <add>, %351, %cst_137 [1] : vector<2x64xf32> to vector<2xf32>
    %353 = vector.shape_cast %352 : vector<2xf32> to vector<2x1xf32>
    %cst_138 = arith.constant 6.400000e+01 : f32
    %354 = vector.broadcast %cst_138 : f32 to vector<2x1xf32>
    %355 = arith.divf %353, %354 : vector<2x1xf32>
    %356 = vector.broadcast %348 : vector<2x1xf32> to vector<2x64xf32>
    %357 = arith.subf %344, %356 : vector<2x64xf32>
    %cst_139 = arith.constant 9.99999974E-6 : f32
    %358 = vector.broadcast %cst_139 : f32 to vector<2x1xf32>
    %359 = arith.addf %355, %358 : vector<2x1xf32>
    %360 = math.rsqrt %359 : vector<2x1xf32>
    %361 = vector.broadcast %360 : vector<2x1xf32> to vector<2x64xf32>
    %362 = arith.mulf %357, %361 : vector<2x64xf32>
    %363 = vector.broadcast %295 : vector<1x64xf32> to vector<2x64xf32>
    %364 = arith.mulf %362, %363 : vector<2x64xf32>
    %365 = vector.broadcast %296 : vector<1x64xf32> to vector<2x64xf32>
    %366 = arith.addf %364, %365 : vector<2x64xf32>
    %c0_140 = arith.constant 0 : index
    %c0_141 = arith.constant 0 : index
    %367 = vector.load %arg17[%c0_140, %c0_141] : memref<2x768xf32, #tpu.memory_space<vmem>>, vector<2x768xf32>
    %c0_142 = arith.constant 0 : index
    %c0_143 = arith.constant 0 : index
    %368 = vector.load %arg24[%c0_142, %c0_143] : memref<768x64xf32, #tpu.memory_space<vmem>>, vector<768x64xf32>
    %c0_144 = arith.constant 0 : index
    %c0_145 = arith.constant 0 : index
    %369 = vector.load %arg25[%c0_144, %c0_145] : memref<1x64xf32, #tpu.memory_space<vmem>>, vector<1x64xf32>
    %c0_146 = arith.constant 0 : index
    %c0_147 = arith.constant 0 : index
    %370 = vector.load %arg26[%c0_146, %c0_147] : memref<64x64xf32, #tpu.memory_space<vmem>>, vector<64x64xf32>
    %c0_148 = arith.constant 0 : index
    %c0_149 = arith.constant 0 : index
    %371 = vector.load %arg27[%c0_148, %c0_149] : memref<1x64xf32, #tpu.memory_space<vmem>>, vector<1x64xf32>
    %c0_150 = arith.constant 0 : index
    %c0_151 = arith.constant 0 : index
    %372 = vector.load %arg28[%c0_150, %c0_151] : memref<1x64xf32, #tpu.memory_space<vmem>>, vector<1x64xf32>
    %c0_152 = arith.constant 0 : index
    %c0_153 = arith.constant 0 : index
    %373 = vector.load %arg29[%c0_152, %c0_153] : memref<1x64xf32, #tpu.memory_space<vmem>>, vector<1x64xf32>
    %cst_154 = arith.constant dense<0.000000e+00> : vector<2x64xf32>
    %374 = tpu.matmul %367, %368, %cst_154 {dimension_numbers = #tpu.dot_dimension_numbers<[1], [0], [0], [1], [0, 0, 1, 1], [], []>} : vector<2x768xf32>, vector<768x64xf32>, vector<2x64xf32> -> vector<2x64xf32>
    %375 = vector.broadcast %369 : vector<1x64xf32> to vector<2x64xf32>
    %376 = arith.addf %374, %375 : vector<2x64xf32>
    %cst_155 = arith.constant 5.000000e-01 : f32
    %377 = vector.broadcast %cst_155 : f32 to vector<2x64xf32>
    %378 = arith.mulf %377, %376 : vector<2x64xf32>
    %cst_156 = arith.constant 0.707106769 : f32
    %379 = vector.broadcast %cst_156 : f32 to vector<2x64xf32>
    %380 = arith.mulf %376, %379 : vector<2x64xf32>
    %cst_157 = arith.constant 0.000000e+00 : f32
    %381 = vector.broadcast %cst_157 : f32 to vector<2x64xf32>
    %382 = arith.cmpf oge, %380, %381 : vector<2x64xf32>
    %cst_158 = arith.constant 1.000000e+00 : f32
    %cst_159 = arith.constant -1.000000e+00 : f32
    %383 = vector.broadcast %cst_158 : f32 to vector<2x64xf32>
    %384 = vector.broadcast %cst_159 : f32 to vector<2x64xf32>
    %385 = arith.select %382, %383, %384 : vector<2x64xi1>, vector<2x64xf32>
    %386 = math.absf %380 : vector<2x64xf32>
    %cst_160 = arith.constant 0.327591091 : f32
    %387 = vector.broadcast %cst_160 : f32 to vector<2x64xf32>
    %388 = arith.mulf %387, %386 : vector<2x64xf32>
    %cst_161 = arith.constant 1.000000e+00 : f32
    %389 = vector.broadcast %cst_161 : f32 to vector<2x64xf32>
    %390 = arith.addf %389, %388 : vector<2x64xf32>
    %cst_162 = arith.constant 1.000000e+00 : f32
    %391 = vector.broadcast %cst_162 : f32 to vector<2x64xf32>
    %392 = arith.divf %391, %390 : vector<2x64xf32>
    %cst_163 = arith.constant 1.06140542 : f32
    %393 = vector.broadcast %cst_163 : f32 to vector<2x64xf32>
    %394 = arith.mulf %393, %392 : vector<2x64xf32>
    %cst_164 = arith.constant -1.45315206 : f32
    %395 = vector.broadcast %cst_164 : f32 to vector<2x64xf32>
    %396 = arith.addf %394, %395 : vector<2x64xf32>
    %397 = arith.mulf %396, %392 : vector<2x64xf32>
    %cst_165 = arith.constant 1.42141378 : f32
    %398 = vector.broadcast %cst_165 : f32 to vector<2x64xf32>
    %399 = arith.addf %397, %398 : vector<2x64xf32>
    %400 = arith.mulf %399, %392 : vector<2x64xf32>
    %cst_166 = arith.constant -0.284496725 : f32
    %401 = vector.broadcast %cst_166 : f32 to vector<2x64xf32>
    %402 = arith.addf %400, %401 : vector<2x64xf32>
    %403 = arith.mulf %402, %392 : vector<2x64xf32>
    %cst_167 = arith.constant 0.254829586 : f32
    %404 = vector.broadcast %cst_167 : f32 to vector<2x64xf32>
    %405 = arith.addf %403, %404 : vector<2x64xf32>
    %406 = arith.mulf %405, %392 : vector<2x64xf32>
    %cst_168 = arith.constant 0.000000e+00 : f32
    %407 = vector.broadcast %cst_168 : f32 to vector<2x64xf32>
    %408 = arith.subf %407, %386 : vector<2x64xf32>
    %409 = arith.mulf %408, %386 : vector<2x64xf32>
    %410 = math.exp %409 : vector<2x64xf32>
    %411 = arith.mulf %406, %410 : vector<2x64xf32>
    %cst_169 = arith.constant 1.000000e+00 : f32
    %412 = vector.broadcast %cst_169 : f32 to vector<2x64xf32>
    %413 = arith.subf %412, %411 : vector<2x64xf32>
    %414 = arith.mulf %385, %413 : vector<2x64xf32>
    %cst_170 = arith.constant 1.000000e+00 : f32
    %415 = vector.broadcast %cst_170 : f32 to vector<2x64xf32>
    %416 = arith.addf %415, %414 : vector<2x64xf32>
    %417 = arith.mulf %378, %416 : vector<2x64xf32>
    %cst_171 = arith.constant dense<0.000000e+00> : vector<2x64xf32>
    %418 = tpu.matmul %417, %370, %cst_171 {dimension_numbers = #tpu.dot_dimension_numbers<[1], [0], [0], [1], [0, 0, 1, 1], [], []>} : vector<2x64xf32>, vector<64x64xf32>, vector<2x64xf32> -> vector<2x64xf32>
    %419 = vector.broadcast %371 : vector<1x64xf32> to vector<2x64xf32>
    %420 = arith.addf %418, %419 : vector<2x64xf32>
    %421 = arith.addf %420, %376 : vector<2x64xf32>
    %cst_172 = arith.constant dense<0.000000e+00> : vector<2xf32>
    %422 = vector.multi_reduction <add>, %421, %cst_172 [1] : vector<2x64xf32> to vector<2xf32>
    %423 = vector.shape_cast %422 : vector<2xf32> to vector<2x1xf32>
    %cst_173 = arith.constant 6.400000e+01 : f32
    %424 = vector.broadcast %cst_173 : f32 to vector<2x1xf32>
    %425 = arith.divf %423, %424 : vector<2x1xf32>
    %426 = vector.broadcast %425 : vector<2x1xf32> to vector<2x64xf32>
    %427 = arith.subf %421, %426 : vector<2x64xf32>
    %428 = arith.mulf %427, %427 : vector<2x64xf32>
    %cst_174 = arith.constant dense<0.000000e+00> : vector<2xf32>
    %429 = vector.multi_reduction <add>, %428, %cst_174 [1] : vector<2x64xf32> to vector<2xf32>
    %430 = vector.shape_cast %429 : vector<2xf32> to vector<2x1xf32>
    %cst_175 = arith.constant 6.400000e+01 : f32
    %431 = vector.broadcast %cst_175 : f32 to vector<2x1xf32>
    %432 = arith.divf %430, %431 : vector<2x1xf32>
    %433 = vector.broadcast %425 : vector<2x1xf32> to vector<2x64xf32>
    %434 = arith.subf %421, %433 : vector<2x64xf32>
    %cst_176 = arith.constant 9.99999974E-6 : f32
    %435 = vector.broadcast %cst_176 : f32 to vector<2x1xf32>
    %436 = arith.addf %432, %435 : vector<2x1xf32>
    %437 = math.rsqrt %436 : vector<2x1xf32>
    %438 = vector.broadcast %437 : vector<2x1xf32> to vector<2x64xf32>
    %439 = arith.mulf %434, %438 : vector<2x64xf32>
    %440 = vector.broadcast %372 : vector<1x64xf32> to vector<2x64xf32>
    %441 = arith.mulf %439, %440 : vector<2x64xf32>
    %442 = vector.broadcast %373 : vector<1x64xf32> to vector<2x64xf32>
    %443 = arith.addf %441, %442 : vector<2x64xf32>
    %cst_177 = arith.constant dense<0.000000e+00> : vector<2x2xf32>
    %444 = tpu.matmul %366, %443, %cst_177 {dimension_numbers = #tpu.dot_dimension_numbers<[1], [1], [0], [0], [0, 0, 1, 0], [], []>} : vector<2x64xf32>, vector<2x64xf32>, vector<2x2xf32> -> vector<2x2xf32>
    %cst_178 = arith.constant dense<0.000000e+00> : vector<2x2xf32>
    %445 = tpu.matmul %366, %366, %cst_178 {dimension_numbers = #tpu.dot_dimension_numbers<[1], [1], [0], [0], [0, 0, 1, 0], [], []>} : vector<2x64xf32>, vector<2x64xf32>, vector<2x2xf32> -> vector<2x2xf32>
    %cst_179 = arith.constant dense<0.000000e+00> : vector<2x2xf32>
    %446 = tpu.matmul %443, %443, %cst_179 {dimension_numbers = #tpu.dot_dimension_numbers<[1], [1], [0], [0], [0, 0, 1, 0], [], []>} : vector<2x64xf32>, vector<2x64xf32>, vector<2x2xf32> -> vector<2x2xf32>
    %447 = arith.addf %445, %446 : vector<2x2xf32>
    %cst_180 = arith.constant 5.000000e-01 : f32
    %448 = vector.broadcast %cst_180 : f32 to vector<2x2xf32>
    %449 = arith.mulf %447, %448 : vector<2x2xf32>
    %cst_181 = arith.constant dense<0xFF800000> : vector<2xf32>
    %450 = vector.multi_reduction <maximumf>, %449, %cst_181 [1] : vector<2x2xf32> to vector<2xf32>
    %451 = vector.shape_cast %450 : vector<2xf32> to vector<2x1xf32>
    %452 = vector.broadcast %451 : vector<2x1xf32> to vector<2x2xf32>
    %453 = arith.subf %449, %452 : vector<2x2xf32>
    %454 = math.exp %453 : vector<2x2xf32>
    %cst_182 = arith.constant dense<0.000000e+00> : vector<2xf32>
    %455 = vector.multi_reduction <add>, %454, %cst_182 [1] : vector<2x2xf32> to vector<2xf32>
    %456 = vector.shape_cast %455 : vector<2xf32> to vector<2x1xf32>
    %457 = vector.broadcast %456 : vector<2x1xf32> to vector<2x2xf32>
    %458 = arith.divf %454, %457 : vector<2x2xf32>
    %cst_183 = arith.constant dense<0xFF800000> : vector<2xf32>
    %459 = vector.multi_reduction <maximumf>, %444, %cst_183 [1] : vector<2x2xf32> to vector<2xf32>
    %460 = vector.shape_cast %459 : vector<2xf32> to vector<2x1xf32>
    %461 = vector.broadcast %460 : vector<2x1xf32> to vector<2x2xf32>
    %462 = arith.subf %444, %461 : vector<2x2xf32>
    %463 = math.exp %462 : vector<2x2xf32>
    %cst_184 = arith.constant dense<0.000000e+00> : vector<2xf32>
    %464 = vector.multi_reduction <add>, %463, %cst_184 [1] : vector<2x2xf32> to vector<2xf32>
    %465 = vector.shape_cast %464 : vector<2xf32> to vector<2x1xf32>
    %466 = math.log %465 : vector<2x1xf32>
    %467 = arith.addf %466, %460 : vector<2x1xf32>
    %468 = vector.broadcast %467 : vector<2x1xf32> to vector<2x2xf32>
    %469 = arith.subf %444, %468 : vector<2x2xf32>
    %cst_185 = arith.constant dense<0xFF800000> : vector<2xf32>
    %470 = vector.multi_reduction <maximumf>, %444, %cst_185 [0] : vector<2x2xf32> to vector<2xf32>
    %471 = vector.shape_cast %470 : vector<2xf32> to vector<1x2xf32>
    %472 = vector.broadcast %471 : vector<1x2xf32> to vector<2x2xf32>
    %473 = arith.subf %444, %472 : vector<2x2xf32>
    %474 = math.exp %473 : vector<2x2xf32>
    %cst_186 = arith.constant dense<0.000000e+00> : vector<2xf32>
    %475 = vector.multi_reduction <add>, %474, %cst_186 [0] : vector<2x2xf32> to vector<2xf32>
    %476 = vector.shape_cast %475 : vector<2xf32> to vector<1x2xf32>
    %477 = math.log %476 : vector<1x2xf32>
    %478 = arith.addf %477, %471 : vector<1x2xf32>
    %479 = vector.broadcast %478 : vector<1x2xf32> to vector<2x2xf32>
    %480 = arith.subf %444, %479 : vector<2x2xf32>
    %481 = arith.addf %469, %480 : vector<2x2xf32>
    %482 = arith.mulf %458, %481 : vector<2x2xf32>
    %cst_187 = arith.constant dense<0.000000e+00> : vector<2xf32>
    %483 = vector.multi_reduction <add>, %482, %cst_187 [1] : vector<2x2xf32> to vector<2xf32>
    %484 = vector.shape_cast %483 : vector<2xf32> to vector<2x1xf32>
    %cst_188 = arith.constant dense<0.000000e+00> : vector<1xf32>
    %485 = vector.multi_reduction <add>, %484, %cst_188 [0] : vector<2x1xf32> to vector<1xf32>
    %486 = vector.shape_cast %485 : vector<1xf32> to vector<1x1xf32>
    %cst_189 = arith.constant -2.500000e-01 : f32
    %487 = vector.broadcast %cst_189 : f32 to vector<1x1xf32>
    %488 = arith.mulf %486, %487 : vector<1x1xf32>
    %c0_190 = arith.constant 0 : index
    %c0_191 = arith.constant 0 : index
    %489 = vector.load %arg30[%c0_190, %c0_191] : memref<1x1xf32, #tpu.memory_space<vmem>>, vector<1x1xf32>
    tpu.vector_store %arg30[%c0_190, %c0_191], %488 {strides = array<i32>} : memref<1x1xf32, #tpu.memory_space<vmem>>, vector<1x1xf32>,
    return
  }
}

</mosaic_0001>

<llo_original>
// kernel: tpu_custom_call.1
$region0: #{tpu_custom_call.1}
  #allocation0 [shape = 'u32[]', space=smem, size = 0x4, offset = 0x4, fixed_abs, tag = 'smem constant byte address 0x4 - core index']
  #allocation1 [shape = 'u32[144,128]{1,0:T(1,128)}', space=vmem, size = 0x12000, scoped, tag = 'internal scratch']
  %s0 = inlined_call_operand.smem [shape: u32[31], index: -1, kind: input, shape index: {}]
  %s1 = sld [smem:[%s0]]
  %s2 = scalar_lea.smem %s0, 1
  %s3 = sld [smem:[%s2]]
  %s4 = scalar_lea.smem %s0, 2
  %s5 = sld [smem:[%s4]]
  %s6 = scalar_lea.smem %s0, 3
  %s7 = sld [smem:[%s6]]
  %s8 = scalar_lea.smem %s0, 4
  %s9 = sld [smem:[%s8]]
  %s10 = scalar_lea.smem %s0, 5
  %s11 = sld [smem:[%s10]]
  %s12 = scalar_lea.smem %s0, 6
  %s13 = sld [smem:[%s12]]
  %s14 = scalar_lea.smem %s0, 7
  %s15 = sld [smem:[%s14]]
  %s16 = scalar_lea.smem %s0, 8
  %s17 = sld [smem:[%s16]]
  %s18 = scalar_lea.smem %s0, 9
  %s19 = sld [smem:[%s18]]
  %s20 = scalar_lea.smem %s0, 10
  %s21 = sld [smem:[%s20]]
  %s22 = scalar_lea.smem %s0, 11
  %s23 = sld [smem:[%s22]]
  %s24 = scalar_lea.smem %s0, 12
  %s25 = sld [smem:[%s24]]
  %s26 = scalar_lea.smem %s0, 13
  %s27 = sld [smem:[%s26]]
  %s28 = scalar_lea.smem %s0, 14
  %s29 = sld [smem:[%s28]]
  %s30 = scalar_lea.smem %s0, 15
  %s31 = sld [smem:[%s30]]
  %s32 = scalar_lea.smem %s0, 16
  %s33 = sld [smem:[%s32]]
  %s34 = scalar_lea.smem %s0, 17
  %s35 = sld [smem:[%s34]]
  %s36 = scalar_lea.smem %s0, 18
  %s37 = sld [smem:[%s36]]
  %s38 = scalar_lea.smem %s0, 19
  %s39 = sld [smem:[%s38]]
  %s40 = scalar_lea.smem %s0, 20
  %s41 = sld [smem:[%s40]]
  %s42 = scalar_lea.smem %s0, 21
  %s43 = sld [smem:[%s42]]
  %s44 = scalar_lea.smem %s0, 22
  %s45 = sld [smem:[%s44]]
  %s46 = scalar_lea.smem %s0, 23
  %s47 = sld [smem:[%s46]]
  %s48 = scalar_lea.smem %s0, 24
  %s49 = sld [smem:[%s48]]
  %s50 = scalar_lea.smem %s0, 25
  %s51 = sld [smem:[%s50]]
  %s52 = scalar_lea.smem %s0, 26
  %s53 = sld [smem:[%s52]]
  %s54 = scalar_lea.smem %s0, 27
  %s55 = sld [smem:[%s54]]
  %s56 = scalar_lea.smem %s0, 28
  %s57 = sld [smem:[%s56]]
  %s58 = scalar_lea.smem %s0, 29
  %s59 = sld [smem:[%s58]]
  %s60 = scalar_lea.smem %s0, 30
  %s61 = sld [smem:[%s60]]
  %s62 = sld [smem:[#allocation0]]
  $region130: #{tpu_custom_call.1} parent=0
    _
  %s64 = ssub.s32 1, %s62
  %s65 = scalar_select 0, %s64, %s62
  $region1: #{tpu_custom_call.1} parent=0
    #allocation2 [shape = 'u8[512]{0}', space=vmem, size = 0x400, scoped, tag = 'output window, operand 0, single buffered']
    #allocation3 [shape = 's32[1]{0}', space=sflag, size = 0x4, scoped, tag = 'scoped memory for tpu_custom_call.1']
    %66 = vsyncpa [#allocation3], 0
    // Predicated region
    $region2: #{tpu_custom_call.1} parent=1 // pred_check
      _
    $region3: #{tpu_custom_call.1} parent=1 // pred_check_branch
      %68 = sbr.rel (0) target = $region5
    $region4: #{tpu_custom_call.1} parent=1 // pred_region
      _
    $region5: #{tpu_custom_call.1} parent=1 // pred_fallthru
      _
    // Predicated region
    $region6: #{tpu_custom_call.1} parent=1 // pred_check
      _
    $region7: #{tpu_custom_call.1} parent=1 // pred_check_branch
      %70 = sbr.rel (0) target = $region9
    $region8: #{tpu_custom_call.1} parent=1 // pred_region
      _
    $region9: #{tpu_custom_call.1} parent=1 // pred_fallthru
      _
    // Predicated region
    $region10: #{tpu_custom_call.1} parent=1 // pred_check
      _
    $region11: #{tpu_custom_call.1} parent=1 // pred_check_branch
      %72 = sbr.rel (0) target = $region13
    $region12: #{tpu_custom_call.1} parent=1 // pred_region
      _
    $region13: #{tpu_custom_call.1} parent=1 // pred_fallthru
      _
    // Predicated region
    $region14: #{tpu_custom_call.1} parent=1 // pred_check
      _
    $region15: #{tpu_custom_call.1} parent=1 // pred_check_branch
      %74 = sbr.rel (0) target = $region17
    $region16: #{tpu_custom_call.1} parent=1 // pred_region
      _
    $region17: #{tpu_custom_call.1} parent=1 // pred_fallthru
      _
    // Predicated region
    $region18: #{tpu_custom_call.1} parent=1 // pred_check
      _
    $region19: #{tpu_custom_call.1} parent=1 // pred_check_branch
      %76 = sbr.rel (0) target = $region21
    $region20: #{tpu_custom_call.1} parent=1 // pred_region
      _
    $region21: #{tpu_custom_call.1} parent=1 // pred_fallthru
      _
    // Predicated region
    $region22: #{tpu_custom_call.1} parent=1 // pred_check
      _
    $region23: #{tpu_custom_call.1} parent=1 // pred_check_branch
      %78 = sbr.rel (0) target = $region25
    $region24: #{tpu_custom_call.1} parent=1 // pred_region
      _
    $region25: #{tpu_custom_call.1} parent=1 // pred_fallthru
      _
    // Predicated region
    $region26: #{tpu_custom_call.1} parent=1 // pred_check
      _
    $region27: #{tpu_custom_call.1} parent=1 // pred_check_branch
      %80 = sbr.rel (0) target = $region29
    $region28: #{tpu_custom_call.1} parent=1 // pred_region
      _
    $region29: #{tpu_custom_call.1} parent=1 // pred_fallthru
      _
    // Predicated region
    $region30: #{tpu_custom_call.1} parent=1 // pred_check
      _
    $region31: #{tpu_custom_call.1} parent=1 // pred_check_branch
      %82 = sbr.rel (0) target = $region33
    $region32: #{tpu_custom_call.1} parent=1 // pred_region
      _
    $region33: #{tpu_custom_call.1} parent=1 // pred_fallthru
      _
    // Predicated region
    $region34: #{tpu_custom_call.1} parent=1 // pred_check
      _
    $region35: #{tpu_custom_call.1} parent=1 // pred_check_branch
      %84 = sbr.rel (0) target = $region37
    $region36: #{tpu_custom_call.1} parent=1 // pred_region
      _
    $region37: #{tpu_custom_call.1} parent=1 // pred_fallthru
      _
    // Predicated region
    $region38: #{tpu_custom_call.1} parent=1 // pred_check
      _
    $region39: #{tpu_custom_call.1} parent=1 // pred_check_branch
      %86 = sbr.rel (0) target = $region41
    $region40: #{tpu_custom_call.1} parent=1 // pred_region
      _
    $region41: #{tpu_custom_call.1} parent=1 // pred_fallthru
      _
    // Predicated region
    $region42: #{tpu_custom_call.1} parent=1 // pred_check
      _
    $region43: #{tpu_custom_call.1} parent=1 // pred_check_branch
      %88 = sbr.rel (0) target = $region45
    $region44: #{tpu_custom_call.1} parent=1 // pred_region
      _
    $region45: #{tpu_custom_call.1} parent=1 // pred_fallthru
      _
    // Predicated region
    $region46: #{tpu_custom_call.1} parent=1 // pred_check
      _
    $region47: #{tpu_custom_call.1} parent=1 // pred_check_branch
      %90 = sbr.rel (0) target = $region49
    $region48: #{tpu_custom_call.1} parent=1 // pred_region
      _
    $region49: #{tpu_custom_call.1} parent=1 // pred_fallthru
      _
    // Predicated region
    $region50: #{tpu_custom_call.1} parent=1 // pred_check
      _
    $region51: #{tpu_custom_call.1} parent=1 // pred_check_branch
      %92 = sbr.rel (0) target = $region53
    $region52: #{tpu_custom_call.1} parent=1 // pred_region
      _
    $region53: #{tpu_custom_call.1} parent=1 // pred_fallthru
      _
    // Predicated region
    $region54: #{tpu_custom_call.1} parent=1 // pred_check
      _
    $region55: #{tpu_custom_call.1} parent=1 // pred_check_branch
      %94 = sbr.rel (0) target = $region57
    $region56: #{tpu_custom_call.1} parent=1 // pred_region
      _
    $region57: #{tpu_custom_call.1} parent=1 // pred_fallthru
      _
    // Predicated region
    $region58: #{tpu_custom_call.1} parent=1 // pred_check
      _
    $region59: #{tpu_custom_call.1} parent=1 // pred_check_branch
      %96 = sbr.rel (0) target = $region61
    $region60: #{tpu_custom_call.1} parent=1 // pred_region
      _
    $region61: #{tpu_custom_call.1} parent=1 // pred_fallthru
      _
    // Predicated region
    $region62: #{tpu_custom_call.1} parent=1 // pred_check
      _
    $region63: #{tpu_custom_call.1} parent=1 // pred_check_branch
      %98 = sbr.rel (0) target = $region65
    $region64: #{tpu_custom_call.1} parent=1 // pred_region
      _
    $region65: #{tpu_custom_call.1} parent=1 // pred_fallthru
      _
    // Predicated region
    $region66: #{tpu_custom_call.1} parent=1 // pred_check
      _
    $region67: #{tpu_custom_call.1} parent=1 // pred_check_branch
      %100 = sbr.rel (0) target = $region69
    $region68: #{tpu_custom_call.1} parent=1 // pred_region
      _
    $region69: #{tpu_custom_call.1} parent=1 // pred_fallthru
      _
    // Predicated region
    $region70: #{tpu_custom_call.1} parent=1 // pred_check
      _
    $region71: #{tpu_custom_call.1} parent=1 // pred_check_branch
      %102 = sbr.rel (0) target = $region73
    $region72: #{tpu_custom_call.1} parent=1 // pred_region
      _
    $region73: #{tpu_custom_call.1} parent=1 // pred_fallthru
      _
    // Predicated region
    $region74: #{tpu_custom_call.1} parent=1 // pred_check
      _
    $region75: #{tpu_custom_call.1} parent=1 // pred_check_branch
      %104 = sbr.rel (0) target = $region77
    $region76: #{tpu_custom_call.1} parent=1 // pred_region
      _
    $region77: #{tpu_custom_call.1} parent=1 // pred_fallthru
      _
    // Predicated region
    $region78: #{tpu_custom_call.1} parent=1 // pred_check
      _
    $region79: #{tpu_custom_call.1} parent=1 // pred_check_branch
      %106 = sbr.rel (0) target = $region81
    $region80: #{tpu_custom_call.1} parent=1 // pred_region
      _
    $region81: #{tpu_custom_call.1} parent=1 // pred_fallthru
      _
    // Predicated region
    $region82: #{tpu_custom_call.1} parent=1 // pred_check
      _
    $region83: #{tpu_custom_call.1} parent=1 // pred_check_branch
      %108 = sbr.rel (0) target = $region85
    $region84: #{tpu_custom_call.1} parent=1 // pred_region
      _
    $region85: #{tpu_custom_call.1} parent=1 // pred_fallthru
      _
    // Predicated region
    $region86: #{tpu_custom_call.1} parent=1 // pred_check
      _
    $region87: #{tpu_custom_call.1} parent=1 // pred_check_branch
      %110 = sbr.rel (0) target = $region89
    $region88: #{tpu_custom_call.1} parent=1 // pred_region
      _
    $region89: #{tpu_custom_call.1} parent=1 // pred_fallthru
      _
    // Predicated region
    $region90: #{tpu_custom_call.1} parent=1 // pred_check
      _
    $region91: #{tpu_custom_call.1} parent=1 // pred_check_branch
      %112 = sbr.rel (0) target = $region93
    $region92: #{tpu_custom_call.1} parent=1 // pred_region
      _
    $region93: #{tpu_custom_call.1} parent=1 // pred_fallthru
      _
    // Predicated region
    $region94: #{tpu_custom_call.1} parent=1 // pred_check
      _
    $region95: #{tpu_custom_call.1} parent=1 // pred_check_branch
      %114 = sbr.rel (0) target = $region97
    $region96: #{tpu_custom_call.1} parent=1 // pred_region
      _
    $region97: #{tpu_custom_call.1} parent=1 // pred_fallthru
      _
    // Predicated region
    $region98: #{tpu_custom_call.1} parent=1 // pred_check
      _
    $region99: #{tpu_custom_call.1} parent=1 // pred_check_branch
      %116 = sbr.rel (0) target = $region101
    $region100: #{tpu_custom_call.1} parent=1 // pred_region
      _
    $region101: #{tpu_custom_call.1} parent=1 // pred_fallthru
      _
    // Predicated region
    $region102: #{tpu_custom_call.1} parent=1 // pred_check
      _
    $region103: #{tpu_custom_call.1} parent=1 // pred_check_branch
      %118 = sbr.rel (0) target = $region105
    $region104: #{tpu_custom_call.1} parent=1 // pred_region
      _
    $region105: #{tpu_custom_call.1} parent=1 // pred_fallthru
      _
    // Predicated region
    $region106: #{tpu_custom_call.1} parent=1 // pred_check
      _
    $region107: #{tpu_custom_call.1} parent=1 // pred_check_branch
      %120 = sbr.rel (0) target = $region109
    $region108: #{tpu_custom_call.1} parent=1 // pred_region
      _
    $region109: #{tpu_custom_call.1} parent=1 // pred_fallthru
      _
    // Predicated region
    $region110: #{tpu_custom_call.1} parent=1 // pred_check
      _
    $region111: #{tpu_custom_call.1} parent=1 // pred_check_branch
      %122 = sbr.rel (0) target = $region113
    $region112: #{tpu_custom_call.1} parent=1 // pred_region
      _
    $region113: #{tpu_custom_call.1} parent=1 // pred_fallthru
      _
    // Predicated region
    $region114: #{tpu_custom_call.1} parent=1 // pred_check
      _
    $region115: #{tpu_custom_call.1} parent=1 // pred_check_branch
      %124 = sbr.rel (0) target = $region117
    $region116: #{tpu_custom_call.1} parent=1 // pred_region
      _
    $region117: #{tpu_custom_call.1} parent=1 // pred_fallthru
      _
    // Predicated region
    $region118: #{tpu_custom_call.1} parent=1 // pred_check
      _
    $region119: #{tpu_custom_call.1} parent=1 // pred_check_branch
      %126 = sbr.rel (0) target = $region121
    $region120: #{tpu_custom_call.1} parent=1 // pred_region
      _
    $region121: #{tpu_custom_call.1} parent=1 // pred_fallthru
      _
    %v127 = vlaneseq
    %v128 = vshrl.u32 %v127, 7
    %v129 = vadd.s32 %v128, 8
    %vm130 = vcmp.ge.s32.totalorder %v128, 1
    %vm131 = vcmp.ge.s32.totalorder %v129, 1
    %vm132 = vcmp.le.s32.totalorder %v128, 8
    %vm133 = vcmp.le.s32.totalorder %v129, 8
    %vm134 = vmand %vm130, %vm132
    %vm135 = vmand %vm131, %vm133
    %v136 = vsel %vm134, 1, 0
    %v137 = vsel %vm135, 1, 0
    %v138 = vcvt.s32.f32 %v136
    %v139 = vcvt.s32.f32 %v137
    %vm140 = vcmp.eq.s32.totalorder %v128, 0
    %vm141 = vcmp.eq.s32.totalorder %v129, 0
    %v142 = vsel %vm140, 1, 0
    %v143 = vsel %vm141, 1, 0
    %v144 = vcvt.s32.f32 %v142
    %v145 = vcvt.s32.f32 %v143
    %v146 = vlaneseq
    %v147 = vand.u32 %v146, 127
    %vm148 = vcmp.lt.s32.totalorder %v147, 9
    %v149 = vld [vmem:[%s1] sm:$0xff]
    %v150 = vld [vmem:[%s1 + $0x8] sm:$0xff]
    %v151 = vld [vmem:[%s1 + $0x10] sm:$0xff]
    %v152 = vld [vmem:[%s1 + $0x18] sm:$0xff]
    %v153 = vld [vmem:[%s5] sm:$0xff]
    %v154 = vld [vmem:[%s7] sm:$0x1]
    %v156 = vlaneseq
    %v157 = vshrl.u32 %v156, 7
    %v158 = vsub.s32 0, %v157
    %v159 = vrot.slane %v154, %v158
    %vm161 = vcmask 64512
    %v163 = vsel %vm161, %v149, 0
    %v166 = vsel %vm161, %v150, 0
    %v169 = vsel %vm161, %v151, 0
    %v172 = vsel %vm161, %v152, 0
    %174 = vmatprep.subr.mxu0 0.0
    %175 = vmatpush1.msra.mxu0 %v153
    %176 = vmatprep.subr.mxu0 0.0
    %177 = vmatpush1.msra.mxu0 0.0
    %178 = vmatprep.subr.mxu0 0.0
    %179 = vmatpush1.msra.mxu0 0.0
    %180 = vmatprep.subr.mxu0 0.0
    %181 = vmatpush1.msra.mxu0 0.0
    %182 = vmatprep.subr.mxu0 0.0
    %183 = vmatpush1.msra.mxu0 0.0
    %184 = vmatprep.subr.mxu0 0.0
    %185 = vmatpush1.msra.mxu0 0.0
    %186 = vmatprep.subr.mxu0 0.0
    %187 = vmatpush1.msra.mxu0 0.0
    %188 = vmatprep.subr.mxu0 0.0
    %189 = vmatpush1.msra.mxu0 0.0
    %190 = vmatprep.subr.mxu0 0.0
    %191 = vmatpush1.msra.mxu0 0.0
    %192 = vmatprep.subr.mxu0 0.0
    %193 = vmatpush1.msra.mxu0 0.0
    %194 = vmatprep.subr.mxu0 0.0
    %195 = vmatpush1.msra.mxu0 0.0
    %196 = vmatprep.subr.mxu0 0.0
    %197 = vmatpush1.msra.mxu0 0.0
    %198 = vmatprep.subr.mxu0 0.0
    %199 = vmatpush1.msra.mxu0 0.0
    %200 = vmatprep.subr.mxu0 0.0
    %201 = vmatpush1.msra.mxu0 0.0
    %202 = vmatprep.subr.mxu0 0.0
    %203 = vmatpush1.msra.mxu0 0.0
    %204 = vmatprep.subr.mxu0 0.0
    %205 = vmatpush1.msra.mxu0 0.0
    %206 = vmatprep.subr.mxu0 0.0
    %207 = vmatpush1.msra.mxu0 0.0
    %208 = vmatprep.subr.mxu0 0.0
    %209 = vmatpush1.msra.mxu0 0.0
    %210 = vmatprep.subr.mxu0 0.0
    %211 = vmatpush1.msra.mxu0 0.0
    %212 = vmatprep.subr.mxu0 0.0
    %213 = vmatpush1.msra.mxu0 0.0
    %214 = vmatprep.subr.mxu0 0.0
    %215 = vmatpush1.msra.mxu0 0.0
    %216 = vmatprep.subr.mxu0 0.0
    %217 = vmatpush1.msra.mxu0 0.0
    %218 = vmatprep.subr.mxu0 0.0
    %219 = vmatpush1.msra.mxu0 0.0
    %220 = vmatprep.subr.mxu0 0.0
    %221 = vmatpush1.msra.mxu0 0.0
    %222 = vmatprep.subr.mxu0 0.0
    %223 = vmatpush1.msra.mxu0 0.0
    %224 = vmatprep.subr.mxu0 0.0
    %225 = vmatpush1.msra.mxu0 0.0
    %226 = vmatprep.subr.mxu0 0.0
    %227 = vmatpush1.msra.mxu0 0.0
    %228 = vmatprep.subr.mxu0 0.0
    %229 = vmatpush1.msra.mxu0 0.0
    %230 = vmatprep.subr.mxu0 0.0
    %231 = vmatpush1.msra.mxu0 0.0
    %232 = vmatprep.subr.mxu0 0.0
    %233 = vmatpush1.msra.mxu0 0.0
    %234 = vmatprep.subr.mxu0 0.0
    %235 = vmatpush1.msra.mxu0 0.0
    %236 = vmatprep.subr.mxu0 0.0
    %237 = vmatpush1.msra.mxu0 0.0
    %238 = vmatprep.mubr.f32.mxu0 0.0
    %239 = vmatmul.mubr.f32.gmra.mrb[0].mxu0 %v163
    %v240 = vpop.f32.mrb[0].mxu0
    %v241 = vadd.f32 %v159, %v240
    %v242 = vpop.f32.mrb[0].mxu0
    %243 = vmatprep.mubr.f32.mxu0 0.0
    %244 = vmatmul.mubr.f32.gmra.mrb[0].mxu0 %v166
    %v245 = vpop.f32.mrb[0].mxu0
    %v246 = vadd.f32 %v159, %v245
    %v247 = vpop.f32.mrb[0].mxu0
    %248 = vmatprep.mubr.f32.mxu0 0.0
    %249 = vmatmul.mubr.f32.gmra.mrb[0].mxu0 %v169
    %v250 = vpop.f32.mrb[0].mxu0
    %v251 = vadd.f32 %v159, %v250
    %v252 = vpop.f32.mrb[0].mxu0
    %253 = vmatprep.mubr.f32.mxu0 0.0
    %254 = vmatmul.mubr.f32.gmra.mrb[0].mxu0 %v172
    %v255 = vpop.f32.mrb[0].mxu0
    %v256 = vadd.f32 %v159, %v255
    %v257 = vpop.f32.mrb[0].mxu0
    %258 = vdwg.mxu0
    %v259 = vmul.f32 %v241, %v138
    %v260 = vmul.f32 %v246, %v139
    %v261 = vmul.f32 %v251, %v138
    %v262 = vmul.f32 %v256, %v139
    %v263 = vld [vmem:[%s3] sm:$0xff]
    %v264 = vld [vmem:[%s3 + $0x8] sm:$0xff]
    %v265 = vadd.f32 %v259, %v263
    %v266 = vadd.f32 %v260, %v264
    %v267 = vadd.f32 %v261, %v263
    %v268 = vadd.f32 %v262, %v264
    %v269 = vld [vmem:[%s9] sm:$0x1]
    %v270 = vld [vmem:[%s11] sm:$0x1]
    %vm271 = vcmask 261120
    %v272 = vsel %vm271, %v265, 0.0
    %273 = vadd.xlane.f32.xlu0 %v272
    %v274 = vpop.xlane.xlu0 %273
    %v275 = vsel %vm271, %v266, 0.0
    %276 = vadd.xlane.f32.xlu0 %v275
    %v277 = vpop.xlane.xlu0 %276
    %v278 = vsel %vm271, %v267, 0.0
    %279 = vadd.xlane.f32.xlu0 %v278
    %v280 = vpop.xlane.xlu0 %279
    %v281 = vsel %vm271, %v268, 0.0
    %282 = vadd.xlane.f32.xlu0 %v281
    %v283 = vpop.xlane.xlu0 %282
    %v284 = vrcp.pop 32.0
    %v285 = vmul.f32 %v274, %v284
    %v286 = vmul.f32 %v277, %v284
    %v287 = vmul.f32 %v280, %v284
    %v288 = vmul.f32 %v283, %v284
    %v289 = vsub.f32 %v265, %v285
    %v290 = vsub.f32 %v266, %v286
    %v291 = vsub.f32 %v267, %v287
    %v292 = vsub.f32 %v268, %v288
    %v293 = vmul.f32 %v289, %v289
    %v294 = vmul.f32 %v290, %v290
    %v295 = vmul.f32 %v291, %v291
    %v296 = vmul.f32 %v292, %v292
    %v297 = vsel %vm271, %v293, 0.0
    %298 = vadd.xlane.f32.xlu0 %v297
    %v299 = vpop.xlane.xlu0 %298
    %v300 = vsel %vm271, %v294, 0.0
    %301 = vadd.xlane.f32.xlu0 %v300
    %v302 = vpop.xlane.xlu0 %301
    %v303 = vsel %vm271, %v295, 0.0
    %304 = vadd.xlane.f32.xlu0 %v303
    %v305 = vpop.xlane.xlu0 %304
    %v306 = vsel %vm271, %v296, 0.0
    %307 = vadd.xlane.f32.xlu0 %v306
    %v308 = vpop.xlane.xlu0 %307
    %v309 = vmul.f32 %v299, %v284
    %v310 = vmul.f32 %v302, %v284
    %v311 = vmul.f32 %v305, %v284
    %v312 = vmul.f32 %v308, %v284
    %v313 = vadd.f32 %v309, 1e-05
    %v314 = vadd.f32 %v310, 1e-05
    %v315 = vadd.f32 %v311, 1e-05
    %v316 = vadd.f32 %v312, 1e-05
    %v317 = vrsqrt.pop %v313
    %v318 = vrsqrt.pop %v314
    %v319 = vrsqrt.pop %v315
    %v320 = vrsqrt.pop %v316
    %v321 = vmul.f32 %v289, %v317
    %v322 = vmul.f32 %v290, %v318
    %v323 = vmul.f32 %v291, %v319
    %v324 = vmul.f32 %v292, %v320
    %v326 = vlaneseq
    %v327 = vshrl.u32 %v326, 7
    %v328 = vsub.s32 0, %v327
    %v329 = vrot.slane %v269, %v328
    %v331 = vmul.f32 %v321, %v329
    %v332 = vmul.f32 %v322, %v329
    %v333 = vmul.f32 %v323, %v329
    %v334 = vmul.f32 %v324, %v329
    %v336 = vlaneseq
    %v337 = vshrl.u32 %v336, 7
    %v338 = vsub.s32 0, %v337
    %v339 = vrot.slane %v270, %v338
    %v341 = vadd.f32 %v331, %v339
    %v342 = vadd.f32 %v332, %v339
    %v343 = vadd.f32 %v333, %v339
    %v344 = vadd.f32 %v334, %v339
    %v345 = vld [vmem:[%s13] sm:$0xff]
    %v346 = vld [vmem:[%s13 + $0x8] sm:$0xff]
    %v347 = vld [vmem:[%s13 + $0x10] sm:$0xff]
    %v348 = vld [vmem:[%s13 + $0x18] sm:$0xff]
    %v350 = vsel %vm271, %v341, 0
    %v353 = vsel %vm271, %v342, 0
    %v356 = vsel %vm271, %v343, 0
    %v359 = vsel %vm271, %v344, 0
    %361 = vmatprep.subr.mxu0 0.0
    %362 = vmatpush1.msra.mxu0 %v345
    %363 = vmatprep.subr.mxu0 0.0
    %364 = vmatpush1.msra.mxu0 %v346
    %365 = vmatprep.subr.mxu0 0.0
    %366 = vmatpush1.msra.mxu0 %v347
    %367 = vmatprep.subr.mxu0 0.0
    %368 = vmatpush1.msra.mxu0 %v348
    %369 = vmatprep.subr.mxu0 0.0
    %370 = vmatpush1.msra.mxu0 0.0
    %371 = vmatprep.subr.mxu0 0.0
    %372 = vmatpush1.msra.mxu0 0.0
    %373 = vmatprep.subr.mxu0 0.0
    %374 = vmatpush1.msra.mxu0 0.0
    %375 = vmatprep.subr.mxu0 0.0
    %376 = vmatpush1.msra.mxu0 0.0
    %377 = vmatprep.subr.mxu0 0.0
    %378 = vmatpush1.msra.mxu0 0.0
    %379 = vmatprep.subr.mxu0 0.0
    %380 = vmatpush1.msra.mxu0 0.0
    %381 = vmatprep.subr.mxu0 0.0
    %382 = vmatpush1.msra.mxu0 0.0
    %383 = vmatprep.subr.mxu0 0.0
    %384 = vmatpush1.msra.mxu0 0.0
    %385 = vmatprep.subr.mxu0 0.0
    %386 = vmatpush1.msra.mxu0 0.0
    %387 = vmatprep.subr.mxu0 0.0
    %388 = vmatpush1.msra.mxu0 0.0
    %389 = vmatprep.subr.mxu0 0.0
    %390 = vmatpush1.msra.mxu0 0.0
    %391 = vmatprep.subr.mxu0 0.0
    %392 = vmatpush1.msra.mxu0 0.0
    %393 = vmatprep.subr.mxu0 0.0
    %394 = vmatpush1.msra.mxu0 0.0
    %395 = vmatprep.subr.mxu0 0.0
    %396 = vmatpush1.msra.mxu0 0.0
    %397 = vmatprep.subr.mxu0 0.0
    %398 = vmatpush1.msra.mxu0 0.0
    %399 = vmatprep.subr.mxu0 0.0
    %400 = vmatpush1.msra.mxu0 0.0
    %401 = vmatprep.subr.mxu0 0.0
    %402 = vmatpush1.msra.mxu0 0.0
    %403 = vmatprep.subr.mxu0 0.0
    %404 = vmatpush1.msra.mxu0 0.0
    %405 = vmatprep.subr.mxu0 0.0
    %406 = vmatpush1.msra.mxu0 0.0
    %407 = vmatprep.subr.mxu0 0.0
    %408 = vmatpush1.msra.mxu0 0.0
    %409 = vmatprep.subr.mxu0 0.0
    %410 = vmatpush1.msra.mxu0 0.0
    %411 = vmatprep.subr.mxu0 0.0
    %412 = vmatpush1.msra.mxu0 0.0
    %413 = vmatprep.subr.mxu0 0.0
    %414 = vmatpush1.msra.mxu0 0.0
    %415 = vmatprep.subr.mxu0 0.0
    %416 = vmatpush1.msra.mxu0 0.0
    %417 = vmatprep.subr.mxu0 0.0
    %418 = vmatpush1.msra.mxu0 0.0
    %419 = vmatprep.subr.mxu0 0.0
    %420 = vmatpush1.msra.mxu0 0.0
    %421 = vmatprep.subr.mxu0 0.0
    %422 = vmatpush1.msra.mxu0 0.0
    %423 = vmatprep.subr.mxu0 0.0
    %424 = vmatpush1.msra.mxu0 0.0
    %425 = vmatprep.mubr.f32.mxu0 0.0
    %426 = vmatmul.mubr.f32.gmra.mrb[0].mxu0 %v350
    %v427 = vpop.f32.mrb[0].mxu0
    %v428 = vadd.f32 0.0, %v427
    %v429 = vpop.f32.mrb[0].mxu0
    %430 = vmatprep.mubr.f32.mxu0 0.0
    %431 = vmatmul.mubr.f32.gmra.mrb[0].mxu0 %v353
    %v432 = vpop.f32.mrb[0].mxu0
    %v433 = vadd.f32 0.0, %v432
    %v434 = vpop.f32.mrb[0].mxu0
    %435 = vmatprep.mubr.f32.mxu0 0.0
    %436 = vmatmul.mubr.f32.gmra.mrb[0].mxu0 %v356
    %v437 = vpop.f32.mrb[0].mxu0
    %v438 = vadd.f32 0.0, %v437
    %v439 = vpop.f32.mrb[0].mxu0
    %440 = vmatprep.mubr.f32.mxu0 0.0
    %441 = vmatmul.mubr.f32.gmra.mrb[0].mxu0 %v359
    %v442 = vpop.f32.mrb[0].mxu0
    %v443 = vadd.f32 0.0, %v442
    %v444 = vpop.f32.mrb[0].mxu0
    %445 = vdwg.mxu0
    %448 = vrot.lane.b32.xlu0 %v428, 96
    %v449 = vpop.permute.xlu0 %448
    %450 = vrot.lane.b32.xlu0 %v433, 96
    %v451 = vpop.permute.xlu0 %450
    %v452 = vsel %vm161, %v428, 0
    %v454 = vsel %vm161, %v433, 0
    %v456 = vsel %vm161, %v449, 0
    %v458 = vsel %vm161, %v451, 0
    %460 = vmatprep.subr.mxu0 0.0
    %461 = vmatpush1.xpose.msra.mxu0 %v456
    %462 = vmatprep.subr.mxu0 0.0
    %463 = vmatpush1.xpose.msra.mxu0 %v458
    %464 = vmatprep.subr.mxu0 0.0
    %465 = vmatpush1.xpose.msra.mxu0 0.0
    %466 = vmatprep.subr.mxu0 0.0
    %467 = vmatpush1.xpose.msra.mxu0 0.0
    %468 = vmatprep.subr.mxu0 0.0
    %469 = vmatpush1.xpose.msra.mxu0 0.0
    %470 = vmatprep.subr.mxu0 0.0
    %471 = vmatpush1.xpose.msra.mxu0 0.0
    %472 = vmatprep.subr.mxu0 0.0
    %473 = vmatpush1.xpose.msra.mxu0 0.0
    %474 = vmatprep.subr.mxu0 0.0
    %475 = vmatpush1.xpose.msra.mxu0 0.0
    %476 = vmatprep.subr.mxu0 0.0
    %477 = vmatpush1.xpose.msra.mxu0 0.0
    %478 = vmatprep.subr.mxu0 0.0
    %479 = vmatpush1.xpose.msra.mxu0 0.0
    %480 = vmatprep.subr.mxu0 0.0
    %481 = vmatpush1.xpose.msra.mxu0 0.0
    %482 = vmatprep.subr.mxu0 0.0
    %483 = vmatpush1.xpose.msra.mxu0 0.0
    %484 = vmatprep.subr.mxu0 0.0
    %485 = vmatpush1.xpose.msra.mxu0 0.0
    %486 = vmatprep.subr.mxu0 0.0
    %487 = vmatpush1.xpose.msra.mxu0 0.0
    %488 = vmatprep.subr.mxu0 0.0
    %489 = vmatpush1.xpose.msra.mxu0 0.0
    %490 = vmatprep.subr.mxu0 0.0
    %491 = vmatpush1.xpose.msra.mxu0 0.0
    %492 = vmatprep.subr.mxu0 0.0
    %493 = vmatpush1.xpose.msra.mxu0 0.0
    %494 = vmatprep.subr.mxu0 0.0
    %495 = vmatpush1.xpose.msra.mxu0 0.0
    %496 = vmatprep.subr.mxu0 0.0
    %497 = vmatpush1.xpose.msra.mxu0 0.0
    %498 = vmatprep.subr.mxu0 0.0
    %499 = vmatpush1.xpose.msra.mxu0 0.0
    %500 = vmatprep.subr.mxu0 0.0
    %501 = vmatpush1.xpose.msra.mxu0 0.0
    %502 = vmatprep.subr.mxu0 0.0
    %503 = vmatpush1.xpose.msra.mxu0 0.0
    %504 = vmatprep.subr.mxu0 0.0
    %505 = vmatpush1.xpose.msra.mxu0 0.0
    %506 = vmatprep.subr.mxu0 0.0
    %507 = vmatpush1.xpose.msra.mxu0 0.0
    %508 = vmatprep.subr.mxu0 0.0
    %509 = vmatpush1.xpose.msra.mxu0 0.0
    %510 = vmatprep.subr.mxu0 0.0
    %511 = vmatpush1.xpose.msra.mxu0 0.0
    %512 = vmatprep.subr.mxu0 0.0
    %513 = vmatpush1.xpose.msra.mxu0 0.0
    %514 = vmatprep.subr.mxu0 0.0
    %515 = vmatpush1.xpose.msra.mxu0 0.0
    %516 = vmatprep.subr.mxu0 0.0
    %517 = vmatpush1.xpose.msra.mxu0 0.0
    %518 = vmatprep.subr.mxu0 0.0
    %519 = vmatpush1.xpose.msra.mxu0 0.0
    %520 = vmatprep.subr.mxu0 0.0
    %521 = vmatpush1.xpose.msra.mxu0 0.0
    %522 = vmatprep.subr.mxu0 0.0
    %523 = vmatpush1.xpose.msra.mxu0 0.0
    %524 = vmatprep.mubr.f32.mxu0 0.0
    %525 = vmatmul.mubr.f32.gmra.mrb[0].mxu0 %v452
    %v526 = vpop.f32.mrb[0].mxu0
    %v527 = vadd.f32 0.0, %v526
    %v528 = vpop.f32.mrb[0].mxu0
    %529 = vmatprep.mubr.f32.mxu0 0.0
    %530 = vmatmul.mubr.f32.gmra.mrb[0].mxu0 %v454
    %v531 = vpop.f32.mrb[0].mxu0
    %v532 = vadd.f32 0.0, %v531
    %v533 = vpop.f32.mrb[0].mxu0
    %534 = vdwg.mxu0
    %537 = vrot.lane.b32.xlu0 %v438, 96
    %v538 = vpop.permute.xlu0 %537
    %539 = vrot.lane.b32.xlu0 %v443, 96
    %v540 = vpop.permute.xlu0 %539
    %v541 = vsel %vm161, %v438, 0
    %v543 = vsel %vm161, %v443, 0
    %v545 = vsel %vm161, %v538, 0
    %v547 = vsel %vm161, %v540, 0
    %549 = vmatprep.subr.mxu0 0.0
    %550 = vmatpush1.xpose.msra.mxu0 %v545
    %551 = vmatprep.subr.mxu0 0.0
    %552 = vmatpush1.xpose.msra.mxu0 %v547
    %553 = vmatprep.subr.mxu0 0.0
    %554 = vmatpush1.xpose.msra.mxu0 0.0
    %555 = vmatprep.subr.mxu0 0.0
    %556 = vmatpush1.xpose.msra.mxu0 0.0
    %557 = vmatprep.subr.mxu0 0.0
    %558 = vmatpush1.xpose.msra.mxu0 0.0
    %559 = vmatprep.subr.mxu0 0.0
    %560 = vmatpush1.xpose.msra.mxu0 0.0
    %561 = vmatprep.subr.mxu0 0.0
    %562 = vmatpush1.xpose.msra.mxu0 0.0
    %563 = vmatprep.subr.mxu0 0.0
    %564 = vmatpush1.xpose.msra.mxu0 0.0
    %565 = vmatprep.subr.mxu0 0.0
    %566 = vmatpush1.xpose.msra.mxu0 0.0
    %567 = vmatprep.subr.mxu0 0.0
    %568 = vmatpush1.xpose.msra.mxu0 0.0
    %569 = vmatprep.subr.mxu0 0.0
    %570 = vmatpush1.xpose.msra.mxu0 0.0
    %571 = vmatprep.subr.mxu0 0.0
    %572 = vmatpush1.xpose.msra.mxu0 0.0
    %573 = vmatprep.subr.mxu0 0.0
    %574 = vmatpush1.xpose.msra.mxu0 0.0
    %575 = vmatprep.subr.mxu0 0.0
    %576 = vmatpush1.xpose.msra.mxu0 0.0
    %577 = vmatprep.subr.mxu0 0.0
    %578 = vmatpush1.xpose.msra.mxu0 0.0
    %579 = vmatprep.subr.mxu0 0.0
    %580 = vmatpush1.xpose.msra.mxu0 0.0
    %581 = vmatprep.subr.mxu0 0.0
    %582 = vmatpush1.xpose.msra.mxu0 0.0
    %583 = vmatprep.subr.mxu0 0.0
    %584 = vmatpush1.xpose.msra.mxu0 0.0
    %585 = vmatprep.subr.mxu0 0.0
    %586 = vmatpush1.xpose.msra.mxu0 0.0
    %587 = vmatprep.subr.mxu0 0.0
    %588 = vmatpush1.xpose.msra.mxu0 0.0
    %589 = vmatprep.subr.mxu0 0.0
    %590 = vmatpush1.xpose.msra.mxu0 0.0
    %591 = vmatprep.subr.mxu0 0.0
    %592 = vmatpush1.xpose.msra.mxu0 0.0
    %593 = vmatprep.subr.mxu0 0.0
    %594 = vmatpush1.xpose.msra.mxu0 0.0
    %595 = vmatprep.subr.mxu0 0.0
    %596 = vmatpush1.xpose.msra.mxu0 0.0
    %597 = vmatprep.subr.mxu0 0.0
    %598 = vmatpush1.xpose.msra.mxu0 0.0
    %599 = vmatprep.subr.mxu0 0.0
    %600 = vmatpush1.xpose.msra.mxu0 0.0
    %601 = vmatprep.subr.mxu0 0.0
    %602 = vmatpush1.xpose.msra.mxu0 0.0
    %603 = vmatprep.subr.mxu0 0.0
    %604 = vmatpush1.xpose.msra.mxu0 0.0
    %605 = vmatprep.subr.mxu0 0.0
    %606 = vmatpush1.xpose.msra.mxu0 0.0
    %607 = vmatprep.subr.mxu0 0.0
    %608 = vmatpush1.xpose.msra.mxu0 0.0
    %609 = vmatprep.subr.mxu0 0.0
    %610 = vmatpush1.xpose.msra.mxu0 0.0
    %611 = vmatprep.subr.mxu0 0.0
    %612 = vmatpush1.xpose.msra.mxu0 0.0
    %613 = vmatprep.mubr.f32.mxu0 0.0
    %614 = vmatmul.mubr.f32.gmra.mrb[0].mxu0 %v541
    %v615 = vpop.f32.mrb[0].mxu0
    %v616 = vadd.f32 0.0, %v615
    %v617 = vpop.f32.mrb[0].mxu0
    %618 = vmatprep.mubr.f32.mxu0 0.0
    %619 = vmatmul.mubr.f32.gmra.mrb[0].mxu0 %v543
    %v620 = vpop.f32.mrb[0].mxu0
    %v621 = vadd.f32 0.0, %v620
    %v622 = vpop.f32.mrb[0].mxu0
    %623 = vdwg.mxu0
    %v624 = vmul.f32 %v527, 0.17677669
    %v625 = vmul.f32 %v532, 0.17677669
    %v626 = vmul.f32 %v616, 0.17677669
    %v627 = vmul.f32 %v621, 0.17677669
    %v628 = vsel %vm148, 1, 0
    %vm629 = vcmp.eq.s32.totalorder %v628, 1
    %v630 = vsel %vm629, %v624, -1e+30
    %v631 = vsel %vm629, %v625, -1e+30
    %v632 = vsel %vm629, %v626, -1e+30
    %v633 = vsel %vm629, %v627, -1e+30
    %vm634 = vcmask 130048
    %v635 = vsel %vm634, %v630, -inf
    %636 = vmax.xlane.f32.xlu0 %v635
    %v637 = vpop.xlane.xlu0 %636
    %v638 = vsel %vm634, %v631, -inf
    %639 = vmax.xlane.f32.xlu0 %v638
    %v640 = vpop.xlane.xlu0 %639
    %v641 = vsel %vm634, %v632, -inf
    %642 = vmax.xlane.f32.xlu0 %v641
    %v643 = vpop.xlane.xlu0 %642
    %v644 = vsel %vm634, %v633, -inf
    %645 = vmax.xlane.f32.xlu0 %v644
    %v646 = vpop.xlane.xlu0 %645
    %v647 = vsub.f32 %v630, %v637
    %v648 = vsub.f32 %v631, %v640
    %v649 = vsub.f32 %v632, %v643
    %v650 = vsub.f32 %v633, %v646
    %v651 = vmul.f32 %v647, 1.442695
    %v652 = vpow.pop %v651
    %v653 = vmul.f32 %v648, 1.442695
    %v654 = vpow.pop %v653
    %v655 = vmul.f32 %v649, 1.442695
    %v656 = vpow.pop %v655
    %v657 = vmul.f32 %v650, 1.442695
    %v658 = vpow.pop %v657
    %v659 = vsel %vm634, %v652, 0.0
    %660 = vadd.xlane.f32.xlu0 %v659
    %v661 = vpop.xlane.xlu0 %660
    %v662 = vsel %vm634, %v654, 0.0
    %663 = vadd.xlane.f32.xlu0 %v662
    %v664 = vpop.xlane.xlu0 %663
    %v665 = vsel %vm634, %v656, 0.0
    %666 = vadd.xlane.f32.xlu0 %v665
    %v667 = vpop.xlane.xlu0 %666
    %v668 = vsel %vm634, %v658, 0.0
    %669 = vadd.xlane.f32.xlu0 %v668
    %v670 = vpop.xlane.xlu0 %669
    %v671 = vrcp.pop %v661
    %v672 = vmul.f32 %v652, %v671
    %v673 = vrcp.pop %v664
    %v674 = vmul.f32 %v654, %v673
    %v675 = vrcp.pop %v667
    %v676 = vmul.f32 %v656, %v675
    %v677 = vrcp.pop %v670
    %v678 = vmul.f32 %v658, %v677
    %679 = vrot.lane.b32.xlu0 %v428, 64
    %v680 = vpop.permute.xlu0 %679
    %681 = vrot.lane.b32.xlu0 %v433, 64
    %v682 = vpop.permute.xlu0 %681
    %v686 = vsel %vm634, %v672, 0
    %v689 = vsel %vm634, %v674, 0
    %691 = vmatprep.subr.mxu0 0.0
    %692 = vmatpush1.msra.mxu0 %v680
    %693 = vmatprep.subr.mxu0 0.0
    %694 = vmatpush1.msra.mxu0 %v682
    %695 = vmatprep.subr.mxu0 0.0
    %696 = vmatpush1.msra.mxu0 0.0
    %697 = vmatprep.subr.mxu0 0.0
    %698 = vmatpush1.msra.mxu0 0.0
    %699 = vmatprep.subr.mxu0 0.0
    %700 = vmatpush1.msra.mxu0 0.0
    %701 = vmatprep.subr.mxu0 0.0
    %702 = vmatpush1.msra.mxu0 0.0
    %703 = vmatprep.subr.mxu0 0.0
    %704 = vmatpush1.msra.mxu0 0.0
    %705 = vmatprep.subr.mxu0 0.0
    %706 = vmatpush1.msra.mxu0 0.0
    %707 = vmatprep.subr.mxu0 0.0
    %708 = vmatpush1.msra.mxu0 0.0
    %709 = vmatprep.subr.mxu0 0.0
    %710 = vmatpush1.msra.mxu0 0.0
    %711 = vmatprep.subr.mxu0 0.0
    %712 = vmatpush1.msra.mxu0 0.0
    %713 = vmatprep.subr.mxu0 0.0
    %714 = vmatpush1.msra.mxu0 0.0
    %715 = vmatprep.subr.mxu0 0.0
    %716 = vmatpush1.msra.mxu0 0.0
    %717 = vmatprep.subr.mxu0 0.0
    %718 = vmatpush1.msra.mxu0 0.0
    %719 = vmatprep.subr.mxu0 0.0
    %720 = vmatpush1.msra.mxu0 0.0
    %721 = vmatprep.subr.mxu0 0.0
    %722 = vmatpush1.msra.mxu0 0.0
    %723 = vmatprep.subr.mxu0 0.0
    %724 = vmatpush1.msra.mxu0 0.0
    %725 = vmatprep.subr.mxu0 0.0
    %726 = vmatpush1.msra.mxu0 0.0
    %727 = vmatprep.subr.mxu0 0.0
    %728 = vmatpush1.msra.mxu0 0.0
    %729 = vmatprep.subr.mxu0 0.0
    %730 = vmatpush1.msra.mxu0 0.0
    %731 = vmatprep.subr.mxu0 0.0
    %732 = vmatpush1.msra.mxu0 0.0
    %733 = vmatprep.subr.mxu0 0.0
    %734 = vmatpush1.msra.mxu0 0.0
    %735 = vmatprep.subr.mxu0 0.0
    %736 = vmatpush1.msra.mxu0 0.0
    %737 = vmatprep.subr.mxu0 0.0
    %738 = vmatpush1.msra.mxu0 0.0
    %739 = vmatprep.subr.mxu0 0.0
    %740 = vmatpush1.msra.mxu0 0.0
    %741 = vmatprep.subr.mxu0 0.0
    %742 = vmatpush1.msra.mxu0 0.0
    %743 = vmatprep.subr.mxu0 0.0
    %744 = vmatpush1.msra.mxu0 0.0
    %745 = vmatprep.subr.mxu0 0.0
    %746 = vmatpush1.msra.mxu0 0.0
    %747 = vmatprep.subr.mxu0 0.0
    %748 = vmatpush1.msra.mxu0 0.0
    %749 = vmatprep.subr.mxu0 0.0
    %750 = vmatpush1.msra.mxu0 0.0
    %751 = vmatprep.subr.mxu0 0.0
    %752 = vmatpush1.msra.mxu0 0.0
    %753 = vmatprep.subr.mxu0 0.0
    %754 = vmatpush1.msra.mxu0 0.0
    %755 = vmatprep.mubr.f32.mxu0 0.0
    %756 = vmatmul.mubr.f32.gmra.mrb[0].mxu0 %v686
    %v757 = vpop.f32.mrb[0].mxu0
    %v758 = vadd.f32 0.0, %v757
    %v759 = vpop.f32.mrb[0].mxu0
    %760 = vmatprep.mubr.f32.mxu0 0.0
    %761 = vmatmul.mubr.f32.gmra.mrb[0].mxu0 %v689
    %v762 = vpop.f32.mrb[0].mxu0
    %v763 = vadd.f32 0.0, %v762
    %v764 = vpop.f32.mrb[0].mxu0
    %765 = vdwg.mxu0
    %766 = vrot.lane.b32.xlu0 %v438, 64
    %v767 = vpop.permute.xlu0 %766
    %768 = vrot.lane.b32.xlu0 %v443, 64
    %v769 = vpop.permute.xlu0 %768
    %v773 = vsel %vm634, %v676, 0
    %v776 = vsel %vm634, %v678, 0
    %778 = vmatprep.subr.mxu0 0.0
    %779 = vmatpush1.msra.mxu0 %v767
    %780 = vmatprep.subr.mxu0 0.0
    %781 = vmatpush1.msra.mxu0 %v769
    %782 = vmatprep.subr.mxu0 0.0
    %783 = vmatpush1.msra.mxu0 0.0
    %784 = vmatprep.subr.mxu0 0.0
    %785 = vmatpush1.msra.mxu0 0.0
    %786 = vmatprep.subr.mxu0 0.0
    %787 = vmatpush1.msra.mxu0 0.0
    %788 = vmatprep.subr.mxu0 0.0
    %789 = vmatpush1.msra.mxu0 0.0
    %790 = vmatprep.subr.mxu0 0.0
    %791 = vmatpush1.msra.mxu0 0.0
    %792 = vmatprep.subr.mxu0 0.0
    %793 = vmatpush1.msra.mxu0 0.0
    %794 = vmatprep.subr.mxu0 0.0
    %795 = vmatpush1.msra.mxu0 0.0
    %796 = vmatprep.subr.mxu0 0.0
    %797 = vmatpush1.msra.mxu0 0.0
    %798 = vmatprep.subr.mxu0 0.0
    %799 = vmatpush1.msra.mxu0 0.0
    %800 = vmatprep.subr.mxu0 0.0
    %801 = vmatpush1.msra.mxu0 0.0
    %802 = vmatprep.subr.mxu0 0.0
    %803 = vmatpush1.msra.mxu0 0.0
    %804 = vmatprep.subr.mxu0 0.0
    %805 = vmatpush1.msra.mxu0 0.0
    %806 = vmatprep.subr.mxu0 0.0
    %807 = vmatpush1.msra.mxu0 0.0
    %808 = vmatprep.subr.mxu0 0.0
    %809 = vmatpush1.msra.mxu0 0.0
    %810 = vmatprep.subr.mxu0 0.0
    %811 = vmatpush1.msra.mxu0 0.0
    %812 = vmatprep.subr.mxu0 0.0
    %813 = vmatpush1.msra.mxu0 0.0
    %814 = vmatprep.subr.mxu0 0.0
    %815 = vmatpush1.msra.mxu0 0.0
    %816 = vmatprep.subr.mxu0 0.0
    %817 = vmatpush1.msra.mxu0 0.0
    %818 = vmatprep.subr.mxu0 0.0
    %819 = vmatpush1.msra.mxu0 0.0
    %820 = vmatprep.subr.mxu0 0.0
    %821 = vmatpush1.msra.mxu0 0.0
    %822 = vmatprep.subr.mxu0 0.0
    %823 = vmatpush1.msra.mxu0 0.0
    %824 = vmatprep.subr.mxu0 0.0
    %825 = vmatpush1.msra.mxu0 0.0
    %826 = vmatprep.subr.mxu0 0.0
    %827 = vmatpush1.msra.mxu0 0.0
    %828 = vmatprep.subr.mxu0 0.0
    %829 = vmatpush1.msra.mxu0 0.0
    %830 = vmatprep.subr.mxu0 0.0
    %831 = vmatpush1.msra.mxu0 0.0
    %832 = vmatprep.subr.mxu0 0.0
    %833 = vmatpush1.msra.mxu0 0.0
    %834 = vmatprep.subr.mxu0 0.0
    %835 = vmatpush1.msra.mxu0 0.0
    %836 = vmatprep.subr.mxu0 0.0
    %837 = vmatpush1.msra.mxu0 0.0
    %838 = vmatprep.subr.mxu0 0.0
    %839 = vmatpush1.msra.mxu0 0.0
    %840 = vmatprep.subr.mxu0 0.0
    %841 = vmatpush1.msra.mxu0 0.0
    %842 = vmatprep.mubr.f32.mxu0 0.0
    %843 = vmatmul.mubr.f32.gmra.mrb[0].mxu0 %v773
    %v844 = vpop.f32.mrb[0].mxu0
    %v845 = vadd.f32 0.0, %v844
    %v846 = vpop.f32.mrb[0].mxu0
    %847 = vmatprep.mubr.f32.mxu0 0.0
    %848 = vmatmul.mubr.f32.gmra.mrb[0].mxu0 %v776
    %v849 = vpop.f32.mrb[0].mxu0
    %v850 = vadd.f32 0.0, %v849
    %v851 = vpop.f32.mrb[0].mxu0
    %852 = vdwg.mxu0
    %853 = vrot.lane.b32.xlu0 %v428, 120
    %v854 = vpop.permute.xlu0 %853
    %855 = vrot.lane.b32.xlu0 %v433, 120
    %v856 = vpop.permute.xlu0 %855
    %857 = vrot.lane.b32.xlu0 %v428, 88
    %v858 = vpop.permute.xlu0 %857
    %859 = vrot.lane.b32.xlu0 %v433, 88
    %v860 = vpop.permute.xlu0 %859
    %v861 = vsel %vm161, %v854, 0
    %v863 = vsel %vm161, %v856, 0
    %v865 = vsel %vm161, %v858, 0
    %v867 = vsel %vm161, %v860, 0
    %869 = vmatprep.subr.mxu0 0.0
    %870 = vmatpush1.xpose.msra.mxu0 %v865
    %871 = vmatprep.subr.mxu0 0.0
    %872 = vmatpush1.xpose.msra.mxu0 %v867
    %873 = vmatprep.subr.mxu0 0.0
    %874 = vmatpush1.xpose.msra.mxu0 0.0
    %875 = vmatprep.subr.mxu0 0.0
    %876 = vmatpush1.xpose.msra.mxu0 0.0
    %877 = vmatprep.subr.mxu0 0.0
    %878 = vmatpush1.xpose.msra.mxu0 0.0
    %879 = vmatprep.subr.mxu0 0.0
    %880 = vmatpush1.xpose.msra.mxu0 0.0
    %881 = vmatprep.subr.mxu0 0.0
    %882 = vmatpush1.xpose.msra.mxu0 0.0
    %883 = vmatprep.subr.mxu0 0.0
    %884 = vmatpush1.xpose.msra.mxu0 0.0
    %885 = vmatprep.subr.mxu0 0.0
    %886 = vmatpush1.xpose.msra.mxu0 0.0
    %887 = vmatprep.subr.mxu0 0.0
    %888 = vmatpush1.xpose.msra.mxu0 0.0
    %889 = vmatprep.subr.mxu0 0.0
    %890 = vmatpush1.xpose.msra.mxu0 0.0
    %891 = vmatprep.subr.mxu0 0.0
    %892 = vmatpush1.xpose.msra.mxu0 0.0
    %893 = vmatprep.subr.mxu0 0.0
    %894 = vmatpush1.xpose.msra.mxu0 0.0
    %895 = vmatprep.subr.mxu0 0.0
    %896 = vmatpush1.xpose.msra.mxu0 0.0
    %897 = vmatprep.subr.mxu0 0.0
    %898 = vmatpush1.xpose.msra.mxu0 0.0
    %899 = vmatprep.subr.mxu0 0.0
    %900 = vmatpush1.xpose.msra.mxu0 0.0
    %901 = vmatprep.subr.mxu0 0.0
    %902 = vmatpush1.xpose.msra.mxu0 0.0
    %903 = vmatprep.subr.mxu0 0.0
    %904 = vmatpush1.xpose.msra.mxu0 0.0
    %905 = vmatprep.subr.mxu0 0.0
    %906 = vmatpush1.xpose.msra.mxu0 0.0
    %907 = vmatprep.subr.mxu0 0.0
    %908 = vmatpush1.xpose.msra.mxu0 0.0
    %909 = vmatprep.subr.mxu0 0.0
    %910 = vmatpush1.xpose.msra.mxu0 0.0
    %911 = vmatprep.subr.mxu0 0.0
    %912 = vmatpush1.xpose.msra.mxu0 0.0
    %913 = vmatprep.subr.mxu0 0.0
    %914 = vmatpush1.xpose.msra.mxu0 0.0
    %915 = vmatprep.subr.mxu0 0.0
    %916 = vmatpush1.xpose.msra.mxu0 0.0
    %917 = vmatprep.subr.mxu0 0.0
    %918 = vmatpush1.xpose.msra.mxu0 0.0
    %919 = vmatprep.subr.mxu0 0.0
    %920 = vmatpush1.xpose.msra.mxu0 0.0
    %921 = vmatprep.subr.mxu0 0.0
    %922 = vmatpush1.xpose.msra.mxu0 0.0
    %923 = vmatprep.subr.mxu0 0.0
    %924 = vmatpush1.xpose.msra.mxu0 0.0
    %925 = vmatprep.subr.mxu0 0.0
    %926 = vmatpush1.xpose.msra.mxu0 0.0
    %927 = vmatprep.subr.mxu0 0.0
    %928 = vmatpush1.xpose.msra.mxu0 0.0
    %929 = vmatprep.subr.mxu0 0.0
    %930 = vmatpush1.xpose.msra.mxu0 0.0
    %931 = vmatprep.subr.mxu0 0.0
    %932 = vmatpush1.xpose.msra.mxu0 0.0
    %933 = vmatprep.mubr.f32.mxu0 0.0
    %934 = vmatmul.mubr.f32.gmra.mrb[0].mxu0 %v861
    %v935 = vpop.f32.mrb[0].mxu0
    %v936 = vadd.f32 0.0, %v935
    %v937 = vpop.f32.mrb[0].mxu0
    %938 = vmatprep.mubr.f32.mxu0 0.0
    %939 = vmatmul.mubr.f32.gmra.mrb[0].mxu0 %v863
    %v940 = vpop.f32.mrb[0].mxu0
    %v941 = vadd.f32 0.0, %v940
    %v942 = vpop.f32.mrb[0].mxu0
    %943 = vdwg.mxu0
    %944 = vrot.lane.b32.xlu0 %v438, 120
    %v945 = vpop.permute.xlu0 %944
    %946 = vrot.lane.b32.xlu0 %v443, 120
    %v947 = vpop.permute.xlu0 %946
    %948 = vrot.lane.b32.xlu0 %v438, 88
    %v949 = vpop.permute.xlu0 %948
    %950 = vrot.lane.b32.xlu0 %v443, 88
    %v951 = vpop.permute.xlu0 %950
    %v952 = vsel %vm161, %v945, 0
    %v954 = vsel %vm161, %v947, 0
    %v956 = vsel %vm161, %v949, 0
    %v958 = vsel %vm161, %v951, 0
    %960 = vmatprep.subr.mxu0 0.0
    %961 = vmatpush1.xpose.msra.mxu0 %v956
    %962 = vmatprep.subr.mxu0 0.0
    %963 = vmatpush1.xpose.msra.mxu0 %v958
    %964 = vmatprep.subr.mxu0 0.0
    %965 = vmatpush1.xpose.msra.mxu0 0.0
    %966 = vmatprep.subr.mxu0 0.0
    %967 = vmatpush1.xpose.msra.mxu0 0.0
    %968 = vmatprep.subr.mxu0 0.0
    %969 = vmatpush1.xpose.msra.mxu0 0.0
    %970 = vmatprep.subr.mxu0 0.0
    %971 = vmatpush1.xpose.msra.mxu0 0.0
    %972 = vmatprep.subr.mxu0 0.0
    %973 = vmatpush1.xpose.msra.mxu0 0.0
    %974 = vmatprep.subr.mxu0 0.0
    %975 = vmatpush1.xpose.msra.mxu0 0.0
    %976 = vmatprep.subr.mxu0 0.0
    %977 = vmatpush1.xpose.msra.mxu0 0.0
    %978 = vmatprep.subr.mxu0 0.0
    %979 = vmatpush1.xpose.msra.mxu0 0.0
    %980 = vmatprep.subr.mxu0 0.0
    %981 = vmatpush1.xpose.msra.mxu0 0.0
    %982 = vmatprep.subr.mxu0 0.0
    %983 = vmatpush1.xpose.msra.mxu0 0.0
    %984 = vmatprep.subr.mxu0 0.0
    %985 = vmatpush1.xpose.msra.mxu0 0.0
    %986 = vmatprep.subr.mxu0 0.0
    %987 = vmatpush1.xpose.msra.mxu0 0.0
    %988 = vmatprep.subr.mxu0 0.0
    %989 = vmatpush1.xpose.msra.mxu0 0.0
    %990 = vmatprep.subr.mxu0 0.0
    %991 = vmatpush1.xpose.msra.mxu0 0.0
    %992 = vmatprep.subr.mxu0 0.0
    %993 = vmatpush1.xpose.msra.mxu0 0.0
    %994 = vmatprep.subr.mxu0 0.0
    %995 = vmatpush1.xpose.msra.mxu0 0.0
    %996 = vmatprep.subr.mxu0 0.0
    %997 = vmatpush1.xpose.msra.mxu0 0.0
    %998 = vmatprep.subr.mxu0 0.0
    %999 = vmatpush1.xpose.msra.mxu0 0.0
    %1000 = vmatprep.subr.mxu0 0.0
    %1001 = vmatpush1.xpose.msra.mxu0 0.0
    %1002 = vmatprep.subr.mxu0 0.0
    %1003 = vmatpush1.xpose.msra.mxu0 0.0
    %1004 = vmatprep.subr.mxu0 0.0
    %1005 = vmatpush1.xpose.msra.mxu0 0.0
    %1006 = vmatprep.subr.mxu0 0.0
    %1007 = vmatpush1.xpose.msra.mxu0 0.0
    %1008 = vmatprep.subr.mxu0 0.0
    %1009 = vmatpush1.xpose.msra.mxu0 0.0
    %1010 = vmatprep.subr.mxu0 0.0
    %1011 = vmatpush1.xpose.msra.mxu0 0.0
    %1012 = vmatprep.subr.mxu0 0.0
    %1013 = vmatpush1.xpose.msra.mxu0 0.0
    %1014 = vmatprep.subr.mxu0 0.0
    %1015 = vmatpush1.xpose.msra.mxu0 0.0
    %1016 = vmatprep.subr.mxu0 0.0
    %1017 = vmatpush1.xpose.msra.mxu0 0.0
    %1018 = vmatprep.subr.mxu0 0.0
    %1019 = vmatpush1.xpose.msra.mxu0 0.0
    %1020 = vmatprep.subr.mxu0 0.0
    %1021 = vmatpush1.xpose.msra.mxu0 0.0
    %1022 = vmatprep.subr.mxu0 0.0
    %1023 = vmatpush1.xpose.msra.mxu0 0.0
    %1024 = vmatprep.mubr.f32.mxu0 0.0
    %1025 = vmatmul.mubr.f32.gmra.mrb[0].mxu0 %v952
    %v1026 = vpop.f32.mrb[0].mxu0
    %v1027 = vadd.f32 0.0, %v1026
    %v1028 = vpop.f32.mrb[0].mxu0
    %1029 = vmatprep.mubr.f32.mxu0 0.0
    %1030 = vmatmul.mubr.f32.gmra.mrb[0].mxu0 %v954
    %v1031 = vpop.f32.mrb[0].mxu0
    %v1032 = vadd.f32 0.0, %v1031
    %v1033 = vpop.f32.mrb[0].mxu0
    %1034 = vdwg.mxu0
    %v1035 = vmul.f32 %v936, 0.17677669
    %v1036 = vmul.f32 %v941, 0.17677669
    %v1037 = vmul.f32 %v1027, 0.17677669
    %v1038 = vmul.f32 %v1032, 0.17677669
    %v1039 = vsel %vm629, %v1035, -1e+30
    %v1040 = vsel %vm629, %v1036, -1e+30
    %v1041 = vsel %vm629, %v1037, -1e+30
    %v1042 = vsel %vm629, %v1038, -1e+30
    %v1043 = vsel %vm634, %v1039, -inf
    %1044 = vmax.xlane.f32.xlu0 %v1043
    %v1045 = vpop.xlane.xlu0 %1044
    %v1046 = vsel %vm634, %v1040, -inf
    %1047 = vmax.xlane.f32.xlu0 %v1046
    %v1048 = vpop.xlane.xlu0 %1047
    %v1049 = vsel %vm634, %v1041, -inf
    %1050 = vmax.xlane.f32.xlu0 %v1049
    %v1051 = vpop.xlane.xlu0 %1050
    %v1052 = vsel %vm634, %v1042, -inf
    %1053 = vmax.xlane.f32.xlu0 %v1052
    %v1054 = vpop.xlane.xlu0 %1053
    %v1055 = vsub.f32 %v1039, %v1045
    %v1056 = vsub.f32 %v1040, %v1048
    %v1057 = vsub.f32 %v1041, %v1051
    %v1058 = vsub.f32 %v1042, %v1054
    %v1059 = vmul.f32 %v1055, 1.442695
    %v1060 = vpow.pop %v1059
    %v1061 = vmul.f32 %v1056, 1.442695
    %v1062 = vpow.pop %v1061
    %v1063 = vmul.f32 %v1057, 1.442695
    %v1064 = vpow.pop %v1063
    %v1065 = vmul.f32 %v1058, 1.442695
    %v1066 = vpow.pop %v1065
    %v1067 = vsel %vm634, %v1060, 0.0
    %1068 = vadd.xlane.f32.xlu0 %v1067
    %v1069 = vpop.xlane.xlu0 %1068
    %v1070 = vsel %vm634, %v1062, 0.0
    %1071 = vadd.xlane.f32.xlu0 %v1070
    %v1072 = vpop.xlane.xlu0 %1071
    %v1073 = vsel %vm634, %v1064, 0.0
    %1074 = vadd.xlane.f32.xlu0 %v1073
    %v1075 = vpop.xlane.xlu0 %1074
    %v1076 = vsel %vm634, %v1066, 0.0
    %1077 = vadd.xlane.f32.xlu0 %v1076
    %v1078 = vpop.xlane.xlu0 %1077
    %v1079 = vrcp.pop %v1069
    %v1080 = vmul.f32 %v1060, %v1079
    %v1081 = vrcp.pop %v1072
    %v1082 = vmul.f32 %v1062, %v1081
    %v1083 = vrcp.pop %v1075
    %v1084 = vmul.f32 %v1064, %v1083
    %v1085 = vrcp.pop %v1078
    %v1086 = vmul.f32 %v1066, %v1085
    %1087 = vrot.lane.b32.xlu0 %v428, 56
    %v1088 = vpop.permute.xlu0 %1087
    %1089 = vrot.lane.b32.xlu0 %v433, 56
    %v1090 = vpop.permute.xlu0 %1089
    %v1094 = vsel %vm634, %v1080, 0
    %v1097 = vsel %vm634, %v1082, 0
    %1099 = vmatprep.subr.mxu0 0.0
    %1100 = vmatpush1.msra.mxu0 %v1088
    %1101 = vmatprep.subr.mxu0 0.0
    %1102 = vmatpush1.msra.mxu0 %v1090
    %1103 = vmatprep.subr.mxu0 0.0
    %1104 = vmatpush1.msra.mxu0 0.0
    %1105 = vmatprep.subr.mxu0 0.0
    %1106 = vmatpush1.msra.mxu0 0.0
    %1107 = vmatprep.subr.mxu0 0.0
    %1108 = vmatpush1.msra.mxu0 0.0
    %1109 = vmatprep.subr.mxu0 0.0
    %1110 = vmatpush1.msra.mxu0 0.0
    %1111 = vmatprep.subr.mxu0 0.0
    %1112 = vmatpush1.msra.mxu0 0.0
    %1113 = vmatprep.subr.mxu0 0.0
    %1114 = vmatpush1.msra.mxu0 0.0
    %1115 = vmatprep.subr.mxu0 0.0
    %1116 = vmatpush1.msra.mxu0 0.0
    %1117 = vmatprep.subr.mxu0 0.0
    %1118 = vmatpush1.msra.mxu0 0.0
    %1119 = vmatprep.subr.mxu0 0.0
    %1120 = vmatpush1.msra.mxu0 0.0
    %1121 = vmatprep.subr.mxu0 0.0
    %1122 = vmatpush1.msra.mxu0 0.0
    %1123 = vmatprep.subr.mxu0 0.0
    %1124 = vmatpush1.msra.mxu0 0.0
    %1125 = vmatprep.subr.mxu0 0.0
    %1126 = vmatpush1.msra.mxu0 0.0
    %1127 = vmatprep.subr.mxu0 0.0
    %1128 = vmatpush1.msra.mxu0 0.0
    %1129 = vmatprep.subr.mxu0 0.0
    %1130 = vmatpush1.msra.mxu0 0.0
    %1131 = vmatprep.subr.mxu0 0.0
    %1132 = vmatpush1.msra.mxu0 0.0
    %1133 = vmatprep.subr.mxu0 0.0
    %1134 = vmatpush1.msra.mxu0 0.0
    %1135 = vmatprep.subr.mxu0 0.0
    %1136 = vmatpush1.msra.mxu0 0.0
    %1137 = vmatprep.subr.mxu0 0.0
    %1138 = vmatpush1.msra.mxu0 0.0
    %1139 = vmatprep.subr.mxu0 0.0
    %1140 = vmatpush1.msra.mxu0 0.0
    %1141 = vmatprep.subr.mxu0 0.0
    %1142 = vmatpush1.msra.mxu0 0.0
    %1143 = vmatprep.subr.mxu0 0.0
    %1144 = vmatpush1.msra.mxu0 0.0
    %1145 = vmatprep.subr.mxu0 0.0
    %1146 = vmatpush1.msra.mxu0 0.0
    %1147 = vmatprep.subr.mxu0 0.0
    %1148 = vmatpush1.msra.mxu0 0.0
    %1149 = vmatprep.subr.mxu0 0.0
    %1150 = vmatpush1.msra.mxu0 0.0
    %1151 = vmatprep.subr.mxu0 0.0
    %1152 = vmatpush1.msra.mxu0 0.0
    %1153 = vmatprep.subr.mxu0 0.0
    %1154 = vmatpush1.msra.mxu0 0.0
    %1155 = vmatprep.subr.mxu0 0.0
    %1156 = vmatpush1.msra.mxu0 0.0
    %1157 = vmatprep.subr.mxu0 0.0
    %1158 = vmatpush1.msra.mxu0 0.0
    %1159 = vmatprep.subr.mxu0 0.0
    %1160 = vmatpush1.msra.mxu0 0.0
    %1161 = vmatprep.subr.mxu0 0.0
    %1162 = vmatpush1.msra.mxu0 0.0
    %1163 = vmatprep.mubr.f32.mxu0 0.0
    %1164 = vmatmul.mubr.f32.gmra.mrb[0].mxu0 %v1094
    %v1165 = vpop.f32.mrb[0].mxu0
    %v1166 = vadd.f32 0.0, %v1165
    %v1167 = vpop.f32.mrb[0].mxu0
    %1168 = vmatprep.mubr.f32.mxu0 0.0
    %1169 = vmatmul.mubr.f32.gmra.mrb[0].mxu0 %v1097
    %v1170 = vpop.f32.mrb[0].mxu0
    %v1171 = vadd.f32 0.0, %v1170
    %v1172 = vpop.f32.mrb[0].mxu0
    %1173 = vdwg.mxu0
    %1174 = vrot.lane.b32.xlu0 %v438, 56
    %v1175 = vpop.permute.xlu0 %1174
    %1176 = vrot.lane.b32.xlu0 %v443, 56
    %v1177 = vpop.permute.xlu0 %1176
    %v1181 = vsel %vm634, %v1084, 0
    %v1184 = vsel %vm634, %v1086, 0
    %1186 = vmatprep.subr.mxu0 0.0
    %1187 = vmatpush1.msra.mxu0 %v1175
    %1188 = vmatprep.subr.mxu0 0.0
    %1189 = vmatpush1.msra.mxu0 %v1177
    %1190 = vmatprep.subr.mxu0 0.0
    %1191 = vmatpush1.msra.mxu0 0.0
    %1192 = vmatprep.subr.mxu0 0.0
    %1193 = vmatpush1.msra.mxu0 0.0
    %1194 = vmatprep.subr.mxu0 0.0
    %1195 = vmatpush1.msra.mxu0 0.0
    %1196 = vmatprep.subr.mxu0 0.0
    %1197 = vmatpush1.msra.mxu0 0.0
    %1198 = vmatprep.subr.mxu0 0.0
    %1199 = vmatpush1.msra.mxu0 0.0
    %1200 = vmatprep.subr.mxu0 0.0
    %1201 = vmatpush1.msra.mxu0 0.0
    %1202 = vmatprep.subr.mxu0 0.0
    %1203 = vmatpush1.msra.mxu0 0.0
    %1204 = vmatprep.subr.mxu0 0.0
    %1205 = vmatpush1.msra.mxu0 0.0
    %1206 = vmatprep.subr.mxu0 0.0
    %1207 = vmatpush1.msra.mxu0 0.0
    %1208 = vmatprep.subr.mxu0 0.0
    %1209 = vmatpush1.msra.mxu0 0.0
    %1210 = vmatprep.subr.mxu0 0.0
    %1211 = vmatpush1.msra.mxu0 0.0
    %1212 = vmatprep.subr.mxu0 0.0
    %1213 = vmatpush1.msra.mxu0 0.0
    %1214 = vmatprep.subr.mxu0 0.0
    %1215 = vmatpush1.msra.mxu0 0.0
    %1216 = vmatprep.subr.mxu0 0.0
    %1217 = vmatpush1.msra.mxu0 0.0
    %1218 = vmatprep.subr.mxu0 0.0
    %1219 = vmatpush1.msra.mxu0 0.0
    %1220 = vmatprep.subr.mxu0 0.0
    %1221 = vmatpush1.msra.mxu0 0.0
    %1222 = vmatprep.subr.mxu0 0.0
    %1223 = vmatpush1.msra.mxu0 0.0
    %1224 = vmatprep.subr.mxu0 0.0
    %1225 = vmatpush1.msra.mxu0 0.0
    %1226 = vmatprep.subr.mxu0 0.0
    %1227 = vmatpush1.msra.mxu0 0.0
    %1228 = vmatprep.subr.mxu0 0.0
    %1229 = vmatpush1.msra.mxu0 0.0
    %1230 = vmatprep.subr.mxu0 0.0
    %1231 = vmatpush1.msra.mxu0 0.0
    %1232 = vmatprep.subr.mxu0 0.0
    %1233 = vmatpush1.msra.mxu0 0.0
    %1234 = vmatprep.subr.mxu0 0.0
    %1235 = vmatpush1.msra.mxu0 0.0
    %1236 = vmatprep.subr.mxu0 0.0
    %1237 = vmatpush1.msra.mxu0 0.0
    %1238 = vmatprep.subr.mxu0 0.0
    %1239 = vmatpush1.msra.mxu0 0.0
    %1240 = vmatprep.subr.mxu0 0.0
    %1241 = vmatpush1.msra.mxu0 0.0
    %1242 = vmatprep.subr.mxu0 0.0
    %1243 = vmatpush1.msra.mxu0 0.0
    %1244 = vmatprep.subr.mxu0 0.0
    %1245 = vmatpush1.msra.mxu0 0.0
    %1246 = vmatprep.subr.mxu0 0.0
    %1247 = vmatpush1.msra.mxu0 0.0
    %1248 = vmatprep.subr.mxu0 0.0
    %1249 = vmatpush1.msra.mxu0 0.0
    %1250 = vmatprep.mubr.f32.mxu0 0.0
    %1251 = vmatmul.mubr.f32.gmra.mrb[0].mxu0 %v1181
    %v1252 = vpop.f32.mrb[0].mxu0
    %v1253 = vadd.f32 0.0, %v1252
    %v1254 = vpop.f32.mrb[0].mxu0
    %1255 = vmatprep.mubr.f32.mxu0 0.0
    %1256 = vmatmul.mubr.f32.gmra.mrb[0].mxu0 %v1184
    %v1257 = vpop.f32.mrb[0].mxu0
    %v1258 = vadd.f32 0.0, %v1257
    %v1259 = vpop.f32.mrb[0].mxu0
    %1260 = vdwg.mxu0
    %1261 = vrot.lane.b32.xlu0 %v428, 112
    %v1262 = vpop.permute.xlu0 %1261
    %1263 = vrot.lane.b32.xlu0 %v433, 112
    %v1264 = vpop.permute.xlu0 %1263
    %1265 = vrot.lane.b32.xlu0 %v428, 80
    %v1266 = vpop.permute.xlu0 %1265
    %1267 = vrot.lane.b32.xlu0 %v433, 80
    %v1268 = vpop.permute.xlu0 %1267
    %v1269 = vsel %vm161, %v1262, 0
    %v1271 = vsel %vm161, %v1264, 0
    %v1273 = vsel %vm161, %v1266, 0
    %v1275 = vsel %vm161, %v1268, 0
    %1277 = vmatprep.subr.mxu0 0.0
    %1278 = vmatpush1.xpose.msra.mxu0 %v1273
    %1279 = vmatprep.subr.mxu0 0.0
    %1280 = vmatpush1.xpose.msra.mxu0 %v1275
    %1281 = vmatprep.subr.mxu0 0.0
    %1282 = vmatpush1.xpose.msra.mxu0 0.0
    %1283 = vmatprep.subr.mxu0 0.0
    %1284 = vmatpush1.xpose.msra.mxu0 0.0
    %1285 = vmatprep.subr.mxu0 0.0
    %1286 = vmatpush1.xpose.msra.mxu0 0.0
    %1287 = vmatprep.subr.mxu0 0.0
    %1288 = vmatpush1.xpose.msra.mxu0 0.0
    %1289 = vmatprep.subr.mxu0 0.0
    %1290 = vmatpush1.xpose.msra.mxu0 0.0
    %1291 = vmatprep.subr.mxu0 0.0
    %1292 = vmatpush1.xpose.msra.mxu0 0.0
    %1293 = vmatprep.subr.mxu0 0.0
    %1294 = vmatpush1.xpose.msra.mxu0 0.0
    %1295 = vmatprep.subr.mxu0 0.0
    %1296 = vmatpush1.xpose.msra.mxu0 0.0
    %1297 = vmatprep.subr.mxu0 0.0
    %1298 = vmatpush1.xpose.msra.mxu0 0.0
    %1299 = vmatprep.subr.mxu0 0.0
    %1300 = vmatpush1.xpose.msra.mxu0 0.0
    %1301 = vmatprep.subr.mxu0 0.0
    %1302 = vmatpush1.xpose.msra.mxu0 0.0
    %1303 = vmatprep.subr.mxu0 0.0
    %1304 = vmatpush1.xpose.msra.mxu0 0.0
    %1305 = vmatprep.subr.mxu0 0.0
    %1306 = vmatpush1.xpose.msra.mxu0 0.0
    %1307 = vmatprep.subr.mxu0 0.0
    %1308 = vmatpush1.xpose.msra.mxu0 0.0
    %1309 = vmatprep.subr.mxu0 0.0
    %1310 = vmatpush1.xpose.msra.mxu0 0.0
    %1311 = vmatprep.subr.mxu0 0.0
    %1312 = vmatpush1.xpose.msra.mxu0 0.0
    %1313 = vmatprep.subr.mxu0 0.0
    %1314 = vmatpush1.xpose.msra.mxu0 0.0
    %1315 = vmatprep.subr.mxu0 0.0
    %1316 = vmatpush1.xpose.msra.mxu0 0.0
    %1317 = vmatprep.subr.mxu0 0.0
    %1318 = vmatpush1.xpose.msra.mxu0 0.0
    %1319 = vmatprep.subr.mxu0 0.0
    %1320 = vmatpush1.xpose.msra.mxu0 0.0
    %1321 = vmatprep.subr.mxu0 0.0
    %1322 = vmatpush1.xpose.msra.mxu0 0.0
    %1323 = vmatprep.subr.mxu0 0.0
    %1324 = vmatpush1.xpose.msra.mxu0 0.0
    %1325 = vmatprep.subr.mxu0 0.0
    %1326 = vmatpush1.xpose.msra.mxu0 0.0
    %1327 = vmatprep.subr.mxu0 0.0
    %1328 = vmatpush1.xpose.msra.mxu0 0.0
    %1329 = vmatprep.subr.mxu0 0.0
    %1330 = vmatpush1.xpose.msra.mxu0 0.0
    %1331 = vmatprep.subr.mxu0 0.0
    %1332 = vmatpush1.xpose.msra.mxu0 0.0
    %1333 = vmatprep.subr.mxu0 0.0
    %1334 = vmatpush1.xpose.msra.mxu0 0.0
    %1335 = vmatprep.subr.mxu0 0.0
    %1336 = vmatpush1.xpose.msra.mxu0 0.0
    %1337 = vmatprep.subr.mxu0 0.0
    %1338 = vmatpush1.xpose.msra.mxu0 0.0
    %1339 = vmatprep.subr.mxu0 0.0
    %1340 = vmatpush1.xpose.msra.mxu0 0.0
    %1341 = vmatprep.mubr.f32.mxu0 0.0
    %1342 = vmatmul.mubr.f32.gmra.mrb[0].mxu0 %v1269
    %v1343 = vpop.f32.mrb[0].mxu0
    %v1344 = vadd.f32 0.0, %v1343
    %v1345 = vpop.f32.mrb[0].mxu0
    %1346 = vmatprep.mubr.f32.mxu0 0.0
    %1347 = vmatmul.mubr.f32.gmra.mrb[0].mxu0 %v1271
    %v1348 = vpop.f32.mrb[0].mxu0
    %v1349 = vadd.f32 0.0, %v1348
    %v1350 = vpop.f32.mrb[0].mxu0
    %1351 = vdwg.mxu0
    %1352 = vrot.lane.b32.xlu0 %v438, 112
    %v1353 = vpop.permute.xlu0 %1352
    %1354 = vrot.lane.b32.xlu0 %v443, 112
    %v1355 = vpop.permute.xlu0 %1354
    %1356 = vrot.lane.b32.xlu0 %v438, 80
    %v1357 = vpop.permute.xlu0 %1356
    %1358 = vrot.lane.b32.xlu0 %v443, 80
    %v1359 = vpop.permute.xlu0 %1358
    %v1360 = vsel %vm161, %v1353, 0
    %v1362 = vsel %vm161, %v1355, 0
    %v1364 = vsel %vm161, %v1357, 0
    %v1366 = vsel %vm161, %v1359, 0
    %1368 = vmatprep.subr.mxu0 0.0
    %1369 = vmatpush1.xpose.msra.mxu0 %v1364
    %1370 = vmatprep.subr.mxu0 0.0
    %1371 = vmatpush1.xpose.msra.mxu0 %v1366
    %1372 = vmatprep.subr.mxu0 0.0
    %1373 = vmatpush1.xpose.msra.mxu0 0.0
    %1374 = vmatprep.subr.mxu0 0.0
    %1375 = vmatpush1.xpose.msra.mxu0 0.0
    %1376 = vmatprep.subr.mxu0 0.0
    %1377 = vmatpush1.xpose.msra.mxu0 0.0
    %1378 = vmatprep.subr.mxu0 0.0
    %1379 = vmatpush1.xpose.msra.mxu0 0.0
    %1380 = vmatprep.subr.mxu0 0.0
    %1381 = vmatpush1.xpose.msra.mxu0 0.0
    %1382 = vmatprep.subr.mxu0 0.0
    %1383 = vmatpush1.xpose.msra.mxu0 0.0
    %1384 = vmatprep.subr.mxu0 0.0
    %1385 = vmatpush1.xpose.msra.mxu0 0.0
    %1386 = vmatprep.subr.mxu0 0.0
    %1387 = vmatpush1.xpose.msra.mxu0 0.0
    %1388 = vmatprep.subr.mxu0 0.0
    %1389 = vmatpush1.xpose.msra.mxu0 0.0
    %1390 = vmatprep.subr.mxu0 0.0
    %1391 = vmatpush1.xpose.msra.mxu0 0.0
    %1392 = vmatprep.subr.mxu0 0.0
    %1393 = vmatpush1.xpose.msra.mxu0 0.0
    %1394 = vmatprep.subr.mxu0 0.0
    %1395 = vmatpush1.xpose.msra.mxu0 0.0
    %1396 = vmatprep.subr.mxu0 0.0
    %1397 = vmatpush1.xpose.msra.mxu0 0.0
    %1398 = vmatprep.subr.mxu0 0.0
    %1399 = vmatpush1.xpose.msra.mxu0 0.0
    %1400 = vmatprep.subr.mxu0 0.0
    %1401 = vmatpush1.xpose.msra.mxu0 0.0
    %1402 = vmatprep.subr.mxu0 0.0
    %1403 = vmatpush1.xpose.msra.mxu0 0.0
    %1404 = vmatprep.subr.mxu0 0.0
    %1405 = vmatpush1.xpose.msra.mxu0 0.0
    %1406 = vmatprep.subr.mxu0 0.0
    %1407 = vmatpush1.xpose.msra.mxu0 0.0
    %1408 = vmatprep.subr.mxu0 0.0
    %1409 = vmatpush1.xpose.msra.mxu0 0.0
    %1410 = vmatprep.subr.mxu0 0.0
    %1411 = vmatpush1.xpose.msra.mxu0 0.0
    %1412 = vmatprep.subr.mxu0 0.0
    %1413 = vmatpush1.xpose.msra.mxu0 0.0
    %1414 = vmatprep.subr.mxu0 0.0
    %1415 = vmatpush1.xpose.msra.mxu0 0.0
    %1416 = vmatprep.subr.mxu0 0.0
    %1417 = vmatpush1.xpose.msra.mxu0 0.0
    %1418 = vmatprep.subr.mxu0 0.0
    %1419 = vmatpush1.xpose.msra.mxu0 0.0
    %1420 = vmatprep.subr.mxu0 0.0
    %1421 = vmatpush1.xpose.msra.mxu0 0.0
    %1422 = vmatprep.subr.mxu0 0.0
    %1423 = vmatpush1.xpose.msra.mxu0 0.0
    %1424 = vmatprep.subr.mxu0 0.0
    %1425 = vmatpush1.xpose.msra.mxu0 0.0
    %1426 = vmatprep.subr.mxu0 0.0
    %1427 = vmatpush1.xpose.msra.mxu0 0.0
    %1428 = vmatprep.subr.mxu0 0.0
    %1429 = vmatpush1.xpose.msra.mxu0 0.0
    %1430 = vmatprep.subr.mxu0 0.0
    %1431 = vmatpush1.xpose.msra.mxu0 0.0
    %1432 = vmatprep.mubr.f32.mxu0 0.0
    %1433 = vmatmul.mubr.f32.gmra.mrb[0].mxu0 %v1360
    %v1434 = vpop.f32.mrb[0].mxu0
    %v1435 = vadd.f32 0.0, %v1434
    %v1436 = vpop.f32.mrb[0].mxu0
    %1437 = vmatprep.mubr.f32.mxu0 0.0
    %1438 = vmatmul.mubr.f32.gmra.mrb[0].mxu0 %v1362
    %v1439 = vpop.f32.mrb[0].mxu0
    %v1440 = vadd.f32 0.0, %v1439
    %v1441 = vpop.f32.mrb[0].mxu0
    %1442 = vdwg.mxu0
    %v1443 = vmul.f32 %v1344, 0.17677669
    %v1444 = vmul.f32 %v1349, 0.17677669
    %v1445 = vmul.f32 %v1435, 0.17677669
    %v1446 = vmul.f32 %v1440, 0.17677669
    %v1447 = vsel %vm629, %v1443, -1e+30
    %v1448 = vsel %vm629, %v1444, -1e+30
    %v1449 = vsel %vm629, %v1445, -1e+30
    %v1450 = vsel %vm629, %v1446, -1e+30
    %v1451 = vsel %vm634, %v1447, -inf
    %1452 = vmax.xlane.f32.xlu0 %v1451
    %v1453 = vpop.xlane.xlu0 %1452
    %v1454 = vsel %vm634, %v1448, -inf
    %1455 = vmax.xlane.f32.xlu0 %v1454
    %v1456 = vpop.xlane.xlu0 %1455
    %v1457 = vsel %vm634, %v1449, -inf
    %1458 = vmax.xlane.f32.xlu0 %v1457
    %v1459 = vpop.xlane.xlu0 %1458
    %v1460 = vsel %vm634, %v1450, -inf
    %1461 = vmax.xlane.f32.xlu0 %v1460
    %v1462 = vpop.xlane.xlu0 %1461
    %v1463 = vsub.f32 %v1447, %v1453
    %v1464 = vsub.f32 %v1448, %v1456
    %v1465 = vsub.f32 %v1449, %v1459
    %v1466 = vsub.f32 %v1450, %v1462
    %v1467 = vmul.f32 %v1463, 1.442695
    %v1468 = vpow.pop %v1467
    %v1469 = vmul.f32 %v1464, 1.442695
    %v1470 = vpow.pop %v1469
    %v1471 = vmul.f32 %v1465, 1.442695
    %v1472 = vpow.pop %v1471
    %v1473 = vmul.f32 %v1466, 1.442695
    %v1474 = vpow.pop %v1473
    %v1475 = vsel %vm634, %v1468, 0.0
    %1476 = vadd.xlane.f32.xlu0 %v1475
    %v1477 = vpop.xlane.xlu0 %1476
    %v1478 = vsel %vm634, %v1470, 0.0
    %1479 = vadd.xlane.f32.xlu0 %v1478
    %v1480 = vpop.xlane.xlu0 %1479
    %v1481 = vsel %vm634, %v1472, 0.0
    %1482 = vadd.xlane.f32.xlu0 %v1481
    %v1483 = vpop.xlane.xlu0 %1482
    %v1484 = vsel %vm634, %v1474, 0.0
    %1485 = vadd.xlane.f32.xlu0 %v1484
    %v1486 = vpop.xlane.xlu0 %1485
    %v1487 = vrcp.pop %v1477
    %v1488 = vmul.f32 %v1468, %v1487
    %v1489 = vrcp.pop %v1480
    %v1490 = vmul.f32 %v1470, %v1489
    %v1491 = vrcp.pop %v1483
    %v1492 = vmul.f32 %v1472, %v1491
    %v1493 = vrcp.pop %v1486
    %v1494 = vmul.f32 %v1474, %v1493
    %1495 = vrot.lane.b32.xlu0 %v428, 48
    %v1496 = vpop.permute.xlu0 %1495
    %1497 = vrot.lane.b32.xlu0 %v433, 48
    %v1498 = vpop.permute.xlu0 %1497
    %v1502 = vsel %vm634, %v1488, 0
    %v1505 = vsel %vm634, %v1490, 0
    %1507 = vmatprep.subr.mxu0 0.0
    %1508 = vmatpush1.msra.mxu0 %v1496
    %1509 = vmatprep.subr.mxu0 0.0
    %1510 = vmatpush1.msra.mxu0 %v1498
    %1511 = vmatprep.subr.mxu0 0.0
    %1512 = vmatpush1.msra.mxu0 0.0
    %1513 = vmatprep.subr.mxu0 0.0
    %1514 = vmatpush1.msra.mxu0 0.0
    %1515 = vmatprep.subr.mxu0 0.0
    %1516 = vmatpush1.msra.mxu0 0.0
    %1517 = vmatprep.subr.mxu0 0.0
    %1518 = vmatpush1.msra.mxu0 0.0
    %1519 = vmatprep.subr.mxu0 0.0
    %1520 = vmatpush1.msra.mxu0 0.0
    %1521 = vmatprep.subr.mxu0 0.0
    %1522 = vmatpush1.msra.mxu0 0.0
    %1523 = vmatprep.subr.mxu0 0.0
    %1524 = vmatpush1.msra.mxu0 0.0
    %1525 = vmatprep.subr.mxu0 0.0
    %1526 = vmatpush1.msra.mxu0 0.0
    %1527 = vmatprep.subr.mxu0 0.0
    %1528 = vmatpush1.msra.mxu0 0.0
    %1529 = vmatprep.subr.mxu0 0.0
    %1530 = vmatpush1.msra.mxu0 0.0
    %1531 = vmatprep.subr.mxu0 0.0
    %1532 = vmatpush1.msra.mxu0 0.0
    %1533 = vmatprep.subr.mxu0 0.0
    %1534 = vmatpush1.msra.mxu0 0.0
    %1535 = vmatprep.subr.mxu0 0.0
    %1536 = vmatpush1.msra.mxu0 0.0
    %1537 = vmatprep.subr.mxu0 0.0
    %1538 = vmatpush1.msra.mxu0 0.0
    %1539 = vmatprep.subr.mxu0 0.0
    %1540 = vmatpush1.msra.mxu0 0.0
    %1541 = vmatprep.subr.mxu0 0.0
    %1542 = vmatpush1.msra.mxu0 0.0
    %1543 = vmatprep.subr.mxu0 0.0
    %1544 = vmatpush1.msra.mxu0 0.0
    %1545 = vmatprep.subr.mxu0 0.0
    %1546 = vmatpush1.msra.mxu0 0.0
    %1547 = vmatprep.subr.mxu0 0.0
    %1548 = vmatpush1.msra.mxu0 0.0
    %1549 = vmatprep.subr.mxu0 0.0
    %1550 = vmatpush1.msra.mxu0 0.0
    %1551 = vmatprep.subr.mxu0 0.0
    %1552 = vmatpush1.msra.mxu0 0.0
    %1553 = vmatprep.subr.mxu0 0.0
    %1554 = vmatpush1.msra.mxu0 0.0
    %1555 = vmatprep.subr.mxu0 0.0
    %1556 = vmatpush1.msra.mxu0 0.0
    %1557 = vmatprep.subr.mxu0 0.0
    %1558 = vmatpush1.msra.mxu0 0.0
    %1559 = vmatprep.subr.mxu0 0.0
    %1560 = vmatpush1.msra.mxu0 0.0
    %1561 = vmatprep.subr.mxu0 0.0
    %1562 = vmatpush1.msra.mxu0 0.0
    %1563 = vmatprep.subr.mxu0 0.0
    %1564 = vmatpush1.msra.mxu0 0.0
    %1565 = vmatprep.subr.mxu0 0.0
    %1566 = vmatpush1.msra.mxu0 0.0
    %1567 = vmatprep.subr.mxu0 0.0
    %1568 = vmatpush1.msra.mxu0 0.0
    %1569 = vmatprep.subr.mxu0 0.0
    %1570 = vmatpush1.msra.mxu0 0.0
    %1571 = vmatprep.mubr.f32.mxu0 0.0
    %1572 = vmatmul.mubr.f32.gmra.mrb[0].mxu0 %v1502
    %v1573 = vpop.f32.mrb[0].mxu0
    %v1574 = vadd.f32 0.0, %v1573
    %v1575 = vpop.f32.mrb[0].mxu0
    %1576 = vmatprep.mubr.f32.mxu0 0.0
    %1577 = vmatmul.mubr.f32.gmra.mrb[0].mxu0 %v1505
    %v1578 = vpop.f32.mrb[0].mxu0
    %v1579 = vadd.f32 0.0, %v1578
    %v1580 = vpop.f32.mrb[0].mxu0
    %1581 = vdwg.mxu0
    %1582 = vrot.lane.b32.xlu0 %v438, 48
    %v1583 = vpop.permute.xlu0 %1582
    %1584 = vrot.lane.b32.xlu0 %v443, 48
    %v1585 = vpop.permute.xlu0 %1584
    %v1589 = vsel %vm634, %v1492, 0
    %v1592 = vsel %vm634, %v1494, 0
    %1594 = vmatprep.subr.mxu0 0.0
    %1595 = vmatpush1.msra.mxu0 %v1583
    %1596 = vmatprep.subr.mxu0 0.0
    %1597 = vmatpush1.msra.mxu0 %v1585
    %1598 = vmatprep.subr.mxu0 0.0
    %1599 = vmatpush1.msra.mxu0 0.0
    %1600 = vmatprep.subr.mxu0 0.0
    %1601 = vmatpush1.msra.mxu0 0.0
    %1602 = vmatprep.subr.mxu0 0.0
    %1603 = vmatpush1.msra.mxu0 0.0
    %1604 = vmatprep.subr.mxu0 0.0
    %1605 = vmatpush1.msra.mxu0 0.0
    %1606 = vmatprep.subr.mxu0 0.0
    %1607 = vmatpush1.msra.mxu0 0.0
    %1608 = vmatprep.subr.mxu0 0.0
    %1609 = vmatpush1.msra.mxu0 0.0
    %1610 = vmatprep.subr.mxu0 0.0
    %1611 = vmatpush1.msra.mxu0 0.0
    %1612 = vmatprep.subr.mxu0 0.0
    %1613 = vmatpush1.msra.mxu0 0.0
    %1614 = vmatprep.subr.mxu0 0.0
    %1615 = vmatpush1.msra.mxu0 0.0
    %1616 = vmatprep.subr.mxu0 0.0
    %1617 = vmatpush1.msra.mxu0 0.0
    %1618 = vmatprep.subr.mxu0 0.0
    %1619 = vmatpush1.msra.mxu0 0.0
    %1620 = vmatprep.subr.mxu0 0.0
    %1621 = vmatpush1.msra.mxu0 0.0
    %1622 = vmatprep.subr.mxu0 0.0
    %1623 = vmatpush1.msra.mxu0 0.0
    %1624 = vmatprep.subr.mxu0 0.0
    %1625 = vmatpush1.msra.mxu0 0.0
    %1626 = vmatprep.subr.mxu0 0.0
    %1627 = vmatpush1.msra.mxu0 0.0
    %1628 = vmatprep.subr.mxu0 0.0
    %1629 = vmatpush1.msra.mxu0 0.0
    %1630 = vmatprep.subr.mxu0 0.0
    %1631 = vmatpush1.msra.mxu0 0.0
    %1632 = vmatprep.subr.mxu0 0.0
    %1633 = vmatpush1.msra.mxu0 0.0
    %1634 = vmatprep.subr.mxu0 0.0
    %1635 = vmatpush1.msra.mxu0 0.0
    %1636 = vmatprep.subr.mxu0 0.0
    %1637 = vmatpush1.msra.mxu0 0.0
    %1638 = vmatprep.subr.mxu0 0.0
    %1639 = vmatpush1.msra.mxu0 0.0
    %1640 = vmatprep.subr.mxu0 0.0
    %1641 = vmatpush1.msra.mxu0 0.0
    %1642 = vmatprep.subr.mxu0 0.0
    %1643 = vmatpush1.msra.mxu0 0.0
    %1644 = vmatprep.subr.mxu0 0.0
    %1645 = vmatpush1.msra.mxu0 0.0
    %1646 = vmatprep.subr.mxu0 0.0
    %1647 = vmatpush1.msra.mxu0 0.0
    %1648 = vmatprep.subr.mxu0 0.0
    %1649 = vmatpush1.msra.mxu0 0.0
    %1650 = vmatprep.subr.mxu0 0.0
    %1651 = vmatpush1.msra.mxu0 0.0
    %1652 = vmatprep.subr.mxu0 0.0
    %1653 = vmatpush1.msra.mxu0 0.0
    %1654 = vmatprep.subr.mxu0 0.0
    %1655 = vmatpush1.msra.mxu0 0.0
    %1656 = vmatprep.subr.mxu0 0.0
    %1657 = vmatpush1.msra.mxu0 0.0
    %1658 = vmatprep.mubr.f32.mxu0 0.0
    %1659 = vmatmul.mubr.f32.gmra.mrb[0].mxu0 %v1589
    %v1660 = vpop.f32.mrb[0].mxu0
    %v1661 = vadd.f32 0.0, %v1660
    %v1662 = vpop.f32.mrb[0].mxu0
    %1663 = vmatprep.mubr.f32.mxu0 0.0
    %1664 = vmatmul.mubr.f32.gmra.mrb[0].mxu0 %v1592
    %v1665 = vpop.f32.mrb[0].mxu0
    %v1666 = vadd.f32 0.0, %v1665
    %v1667 = vpop.f32.mrb[0].mxu0
    %1668 = vdwg.mxu0
    %1669 = vrot.lane.b32.xlu0 %v428, 104
    %v1670 = vpop.permute.xlu0 %1669
    %1671 = vrot.lane.b32.xlu0 %v433, 104
    %v1672 = vpop.permute.xlu0 %1671
    %1673 = vrot.lane.b32.xlu0 %v428, 72
    %v1674 = vpop.permute.xlu0 %1673
    %1675 = vrot.lane.b32.xlu0 %v433, 72
    %v1676 = vpop.permute.xlu0 %1675
    %v1677 = vsel %vm161, %v1670, 0
    %v1679 = vsel %vm161, %v1672, 0
    %v1681 = vsel %vm161, %v1674, 0
    %v1683 = vsel %vm161, %v1676, 0
    %1685 = vmatprep.subr.mxu0 0.0
    %1686 = vmatpush1.xpose.msra.mxu0 %v1681
    %1687 = vmatprep.subr.mxu0 0.0
    %1688 = vmatpush1.xpose.msra.mxu0 %v1683
    %1689 = vmatprep.subr.mxu0 0.0
    %1690 = vmatpush1.xpose.msra.mxu0 0.0
    %1691 = vmatprep.subr.mxu0 0.0
    %1692 = vmatpush1.xpose.msra.mxu0 0.0
    %1693 = vmatprep.subr.mxu0 0.0
    %1694 = vmatpush1.xpose.msra.mxu0 0.0
    %1695 = vmatprep.subr.mxu0 0.0
    %1696 = vmatpush1.xpose.msra.mxu0 0.0
    %1697 = vmatprep.subr.mxu0 0.0
    %1698 = vmatpush1.xpose.msra.mxu0 0.0
    %1699 = vmatprep.subr.mxu0 0.0
    %1700 = vmatpush1.xpose.msra.mxu0 0.0
    %1701 = vmatprep.subr.mxu0 0.0
    %1702 = vmatpush1.xpose.msra.mxu0 0.0
    %1703 = vmatprep.subr.mxu0 0.0
    %1704 = vmatpush1.xpose.msra.mxu0 0.0
    %1705 = vmatprep.subr.mxu0 0.0
    %1706 = vmatpush1.xpose.msra.mxu0 0.0
    %1707 = vmatprep.subr.mxu0 0.0
    %1708 = vmatpush1.xpose.msra.mxu0 0.0
    %1709 = vmatprep.subr.mxu0 0.0
    %1710 = vmatpush1.xpose.msra.mxu0 0.0
    %1711 = vmatprep.subr.mxu0 0.0
    %1712 = vmatpush1.xpose.msra.mxu0 0.0
    %1713 = vmatprep.subr.mxu0 0.0
    %1714 = vmatpush1.xpose.msra.mxu0 0.0
    %1715 = vmatprep.subr.mxu0 0.0
    %1716 = vmatpush1.xpose.msra.mxu0 0.0
    %1717 = vmatprep.subr.mxu0 0.0
    %1718 = vmatpush1.xpose.msra.mxu0 0.0
    %1719 = vmatprep.subr.mxu0 0.0
    %1720 = vmatpush1.xpose.msra.mxu0 0.0
    %1721 = vmatprep.subr.mxu0 0.0
    %1722 = vmatpush1.xpose.msra.mxu0 0.0
    %1723 = vmatprep.subr.mxu0 0.0
    %1724 = vmatpush1.xpose.msra.mxu0 0.0
    %1725 = vmatprep.subr.mxu0 0.0
    %1726 = vmatpush1.xpose.msra.mxu0 0.0
    %1727 = vmatprep.subr.mxu0 0.0
    %1728 = vmatpush1.xpose.msra.mxu0 0.0
    %1729 = vmatprep.subr.mxu0 0.0
    %1730 = vmatpush1.xpose.msra.mxu0 0.0
    %1731 = vmatprep.subr.mxu0 0.0
    %1732 = vmatpush1.xpose.msra.mxu0 0.0
    %1733 = vmatprep.subr.mxu0 0.0
    %1734 = vmatpush1.xpose.msra.mxu0 0.0
    %1735 = vmatprep.subr.mxu0 0.0
    %1736 = vmatpush1.xpose.msra.mxu0 0.0
    %1737 = vmatprep.subr.mxu0 0.0
    %1738 = vmatpush1.xpose.msra.mxu0 0.0
    %1739 = vmatprep.subr.mxu0 0.0
    %1740 = vmatpush1.xpose.msra.mxu0 0.0
    %1741 = vmatprep.subr.mxu0 0.0
    %1742 = vmatpush1.xpose.msra.mxu0 0.0
    %1743 = vmatprep.subr.mxu0 0.0
    %1744 = vmatpush1.xpose.msra.mxu0 0.0
    %1745 = vmatprep.subr.mxu0 0.0
    %1746 = vmatpush1.xpose.msra.mxu0 0.0
    %1747 = vmatprep.subr.mxu0 0.0
    %1748 = vmatpush1.xpose.msra.mxu0 0.0
    %1749 = vmatprep.mubr.f32.mxu0 0.0
    %1750 = vmatmul.mubr.f32.gmra.mrb[0].mxu0 %v1677
    %v1751 = vpop.f32.mrb[0].mxu0
    %v1752 = vadd.f32 0.0, %v1751
    %v1753 = vpop.f32.mrb[0].mxu0
    %1754 = vmatprep.mubr.f32.mxu0 0.0
    %1755 = vmatmul.mubr.f32.gmra.mrb[0].mxu0 %v1679
    %v1756 = vpop.f32.mrb[0].mxu0
    %v1757 = vadd.f32 0.0, %v1756
    %v1758 = vpop.f32.mrb[0].mxu0
    %1759 = vdwg.mxu0
    %1760 = vrot.lane.b32.xlu0 %v438, 104
    %v1761 = vpop.permute.xlu0 %1760
    %1762 = vrot.lane.b32.xlu0 %v443, 104
    %v1763 = vpop.permute.xlu0 %1762
    %1764 = vrot.lane.b32.xlu0 %v438, 72
    %v1765 = vpop.permute.xlu0 %1764
    %1766 = vrot.lane.b32.xlu0 %v443, 72
    %v1767 = vpop.permute.xlu0 %1766
    %v1768 = vsel %vm161, %v1761, 0
    %v1770 = vsel %vm161, %v1763, 0
    %v1772 = vsel %vm161, %v1765, 0
    %v1774 = vsel %vm161, %v1767, 0
    %1776 = vmatprep.subr.mxu0 0.0
    %1777 = vmatpush1.xpose.msra.mxu0 %v1772
    %1778 = vmatprep.subr.mxu0 0.0
    %1779 = vmatpush1.xpose.msra.mxu0 %v1774
    %1780 = vmatprep.subr.mxu0 0.0
    %1781 = vmatpush1.xpose.msra.mxu0 0.0
    %1782 = vmatprep.subr.mxu0 0.0
    %1783 = vmatpush1.xpose.msra.mxu0 0.0
    %1784 = vmatprep.subr.mxu0 0.0
    %1785 = vmatpush1.xpose.msra.mxu0 0.0
    %1786 = vmatprep.subr.mxu0 0.0
    %1787 = vmatpush1.xpose.msra.mxu0 0.0
    %1788 = vmatprep.subr.mxu0 0.0
    %1789 = vmatpush1.xpose.msra.mxu0 0.0
    %1790 = vmatprep.subr.mxu0 0.0
    %1791 = vmatpush1.xpose.msra.mxu0 0.0
    %1792 = vmatprep.subr.mxu0 0.0
    %1793 = vmatpush1.xpose.msra.mxu0 0.0
    %1794 = vmatprep.subr.mxu0 0.0
    %1795 = vmatpush1.xpose.msra.mxu0 0.0
    %1796 = vmatprep.subr.mxu0 0.0
    %1797 = vmatpush1.xpose.msra.mxu0 0.0
    %1798 = vmatprep.subr.mxu0 0.0
    %1799 = vmatpush1.xpose.msra.mxu0 0.0
    %1800 = vmatprep.subr.mxu0 0.0
    %1801 = vmatpush1.xpose.msra.mxu0 0.0
    %1802 = vmatprep.subr.mxu0 0.0
    %1803 = vmatpush1.xpose.msra.mxu0 0.0
    %1804 = vmatprep.subr.mxu0 0.0
    %1805 = vmatpush1.xpose.msra.mxu0 0.0
    %1806 = vmatprep.subr.mxu0 0.0
    %1807 = vmatpush1.xpose.msra.mxu0 0.0
    %1808 = vmatprep.subr.mxu0 0.0
    %1809 = vmatpush1.xpose.msra.mxu0 0.0
    %1810 = vmatprep.subr.mxu0 0.0
    %1811 = vmatpush1.xpose.msra.mxu0 0.0
    %1812 = vmatprep.subr.mxu0 0.0
    %1813 = vmatpush1.xpose.msra.mxu0 0.0
    %1814 = vmatprep.subr.mxu0 0.0
    %1815 = vmatpush1.xpose.msra.mxu0 0.0
    %1816 = vmatprep.subr.mxu0 0.0
    %1817 = vmatpush1.xpose.msra.mxu0 0.0
    %1818 = vmatprep.subr.mxu0 0.0
    %1819 = vmatpush1.xpose.msra.mxu0 0.0
    %1820 = vmatprep.subr.mxu0 0.0
    %1821 = vmatpush1.xpose.msra.mxu0 0.0
    %1822 = vmatprep.subr.mxu0 0.0
    %1823 = vmatpush1.xpose.msra.mxu0 0.0
    %1824 = vmatprep.subr.mxu0 0.0
    %1825 = vmatpush1.xpose.msra.mxu0 0.0
    %1826 = vmatprep.subr.mxu0 0.0
    %1827 = vmatpush1.xpose.msra.mxu0 0.0
    %1828 = vmatprep.subr.mxu0 0.0
    %1829 = vmatpush1.xpose.msra.mxu0 0.0
    %1830 = vmatprep.subr.mxu0 0.0
    %1831 = vmatpush1.xpose.msra.mxu0 0.0
    %1832 = vmatprep.subr.mxu0 0.0
    %1833 = vmatpush1.xpose.msra.mxu0 0.0
    %1834 = vmatprep.subr.mxu0 0.0
    %1835 = vmatpush1.xpose.msra.mxu0 0.0
    %1836 = vmatprep.subr.mxu0 0.0
    %1837 = vmatpush1.xpose.msra.mxu0 0.0
    %1838 = vmatprep.subr.mxu0 0.0
    %1839 = vmatpush1.xpose.msra.mxu0 0.0
    %1840 = vmatprep.mubr.f32.mxu0 0.0
    %1841 = vmatmul.mubr.f32.gmra.mrb[0].mxu0 %v1768
    %v1842 = vpop.f32.mrb[0].mxu0
    %v1843 = vadd.f32 0.0, %v1842
    %v1844 = vpop.f32.mrb[0].mxu0
    %1845 = vmatprep.mubr.f32.mxu0 0.0
    %1846 = vmatmul.mubr.f32.gmra.mrb[0].mxu0 %v1770
    %v1847 = vpop.f32.mrb[0].mxu0
    %v1848 = vadd.f32 0.0, %v1847
    %v1849 = vpop.f32.mrb[0].mxu0
    %1850 = vdwg.mxu0
    %v1851 = vmul.f32 %v1752, 0.17677669
    %v1852 = vmul.f32 %v1757, 0.17677669
    %v1853 = vmul.f32 %v1843, 0.17677669
    %v1854 = vmul.f32 %v1848, 0.17677669
    %v1855 = vsel %vm629, %v1851, -1e+30
    %v1856 = vsel %vm629, %v1852, -1e+30
    %v1857 = vsel %vm629, %v1853, -1e+30
    %v1858 = vsel %vm629, %v1854, -1e+30
    %v1859 = vsel %vm634, %v1855, -inf
    %1860 = vmax.xlane.f32.xlu0 %v1859
    %v1861 = vpop.xlane.xlu0 %1860
    %v1862 = vsel %vm634, %v1856, -inf
    %1863 = vmax.xlane.f32.xlu0 %v1862
    %v1864 = vpop.xlane.xlu0 %1863
    %v1865 = vsel %vm634, %v1857, -inf
    %1866 = vmax.xlane.f32.xlu0 %v1865
    %v1867 = vpop.xlane.xlu0 %1866
    %v1868 = vsel %vm634, %v1858, -inf
    %1869 = vmax.xlane.f32.xlu0 %v1868
    %v1870 = vpop.xlane.xlu0 %1869
    %v1871 = vsub.f32 %v1855, %v1861
    %v1872 = vsub.f32 %v1856, %v1864
    %v1873 = vsub.f32 %v1857, %v1867
    %v1874 = vsub.f32 %v1858, %v1870
    %v1875 = vmul.f32 %v1871, 1.442695
    %v1876 = vpow.pop %v1875
    %v1877 = vmul.f32 %v1872, 1.442695
    %v1878 = vpow.pop %v1877
    %v1879 = vmul.f32 %v1873, 1.442695
    %v1880 = vpow.pop %v1879
    %v1881 = vmul.f32 %v1874, 1.442695
    %v1882 = vpow.pop %v1881
    %v1883 = vsel %vm634, %v1876, 0.0
    %1884 = vadd.xlane.f32.xlu0 %v1883
    %v1885 = vpop.xlane.xlu0 %1884
    %v1886 = vsel %vm634, %v1878, 0.0
    %1887 = vadd.xlane.f32.xlu0 %v1886
    %v1888 = vpop.xlane.xlu0 %1887
    %v1889 = vsel %vm634, %v1880, 0.0
    %1890 = vadd.xlane.f32.xlu0 %v1889
    %v1891 = vpop.xlane.xlu0 %1890
    %v1892 = vsel %vm634, %v1882, 0.0
    %1893 = vadd.xlane.f32.xlu0 %v1892
    %v1894 = vpop.xlane.xlu0 %1893
    %v1895 = vrcp.pop %v1885
    %v1896 = vmul.f32 %v1876, %v1895
    %v1897 = vrcp.pop %v1888
    %v1898 = vmul.f32 %v1878, %v1897
    %v1899 = vrcp.pop %v1891
    %v1900 = vmul.f32 %v1880, %v1899
    %v1901 = vrcp.pop %v1894
    %v1902 = vmul.f32 %v1882, %v1901
    %1903 = vrot.lane.b32.xlu0 %v428, 40
    %v1904 = vpop.permute.xlu0 %1903
    %1905 = vrot.lane.b32.xlu0 %v433, 40
    %v1906 = vpop.permute.xlu0 %1905
    %v1910 = vsel %vm634, %v1896, 0
    %v1913 = vsel %vm634, %v1898, 0
    %1915 = vmatprep.subr.mxu0 0.0
    %1916 = vmatpush1.msra.mxu0 %v1904
    %1917 = vmatprep.subr.mxu0 0.0
    %1918 = vmatpush1.msra.mxu0 %v1906
    %1919 = vmatprep.subr.mxu0 0.0
    %1920 = vmatpush1.msra.mxu0 0.0
    %1921 = vmatprep.subr.mxu0 0.0
    %1922 = vmatpush1.msra.mxu0 0.0
    %1923 = vmatprep.subr.mxu0 0.0
    %1924 = vmatpush1.msra.mxu0 0.0
    %1925 = vmatprep.subr.mxu0 0.0
    %1926 = vmatpush1.msra.mxu0 0.0
    %1927 = vmatprep.subr.mxu0 0.0
    %1928 = vmatpush1.msra.mxu0 0.0
    %1929 = vmatprep.subr.mxu0 0.0
    %1930 = vmatpush1.msra.mxu0 0.0
    %1931 = vmatprep.subr.mxu0 0.0
    %1932 = vmatpush1.msra.mxu0 0.0
    %1933 = vmatprep.subr.mxu0 0.0
    %1934 = vmatpush1.msra.mxu0 0.0
    %1935 = vmatprep.subr.mxu0 0.0
    %1936 = vmatpush1.msra.mxu0 0.0
    %1937 = vmatprep.subr.mxu0 0.0
    %1938 = vmatpush1.msra.mxu0 0.0
    %1939 = vmatprep.subr.mxu0 0.0
    %1940 = vmatpush1.msra.mxu0 0.0
    %1941 = vmatprep.subr.mxu0 0.0
    %1942 = vmatpush1.msra.mxu0 0.0
    %1943 = vmatprep.subr.mxu0 0.0
    %1944 = vmatpush1.msra.mxu0 0.0
    %1945 = vmatprep.subr.mxu0 0.0
    %1946 = vmatpush1.msra.mxu0 0.0
    %1947 = vmatprep.subr.mxu0 0.0
    %1948 = vmatpush1.msra.mxu0 0.0
    %1949 = vmatprep.subr.mxu0 0.0
    %1950 = vmatpush1.msra.mxu0 0.0
    %1951 = vmatprep.subr.mxu0 0.0
    %1952 = vmatpush1.msra.mxu0 0.0
    %1953 = vmatprep.subr.mxu0 0.0
    %1954 = vmatpush1.msra.mxu0 0.0
    %1955 = vmatprep.subr.mxu0 0.0
    %1956 = vmatpush1.msra.mxu0 0.0
    %1957 = vmatprep.subr.mxu0 0.0
    %1958 = vmatpush1.msra.mxu0 0.0
    %1959 = vmatprep.subr.mxu0 0.0
    %1960 = vmatpush1.msra.mxu0 0.0
    %1961 = vmatprep.subr.mxu0 0.0
    %1962 = vmatpush1.msra.mxu0 0.0
    %1963 = vmatprep.subr.mxu0 0.0
    %1964 = vmatpush1.msra.mxu0 0.0
    %1965 = vmatprep.subr.mxu0 0.0
    %1966 = vmatpush1.msra.mxu0 0.0
    %1967 = vmatprep.subr.mxu0 0.0
    %1968 = vmatpush1.msra.mxu0 0.0
    %1969 = vmatprep.subr.mxu0 0.0
    %1970 = vmatpush1.msra.mxu0 0.0
    %1971 = vmatprep.subr.mxu0 0.0
    %1972 = vmatpush1.msra.mxu0 0.0
    %1973 = vmatprep.subr.mxu0 0.0
    %1974 = vmatpush1.msra.mxu0 0.0
    %1975 = vmatprep.subr.mxu0 0.0
    %1976 = vmatpush1.msra.mxu0 0.0
    %1977 = vmatprep.subr.mxu0 0.0
    %1978 = vmatpush1.msra.mxu0 0.0
    %1979 = vmatprep.mubr.f32.mxu0 0.0
    %1980 = vmatmul.mubr.f32.gmra.mrb[0].mxu0 %v1910
    %v1981 = vpop.f32.mrb[0].mxu0
    %v1982 = vadd.f32 0.0, %v1981
    %v1983 = vpop.f32.mrb[0].mxu0
    %1984 = vmatprep.mubr.f32.mxu0 0.0
    %1985 = vmatmul.mubr.f32.gmra.mrb[0].mxu0 %v1913
    %v1986 = vpop.f32.mrb[0].mxu0
    %v1987 = vadd.f32 0.0, %v1986
    %v1988 = vpop.f32.mrb[0].mxu0
    %1989 = vdwg.mxu0
    %1990 = vrot.lane.b32.xlu0 %v438, 40
    %v1991 = vpop.permute.xlu0 %1990
    %1992 = vrot.lane.b32.xlu0 %v443, 40
    %v1993 = vpop.permute.xlu0 %1992
    %v1997 = vsel %vm634, %v1900, 0
    %v2000 = vsel %vm634, %v1902, 0
    %2002 = vmatprep.subr.mxu0 0.0
    %2003 = vmatpush1.msra.mxu0 %v1991
    %2004 = vmatprep.subr.mxu0 0.0
    %2005 = vmatpush1.msra.mxu0 %v1993
    %2006 = vmatprep.subr.mxu0 0.0
    %2007 = vmatpush1.msra.mxu0 0.0
    %2008 = vmatprep.subr.mxu0 0.0
    %2009 = vmatpush1.msra.mxu0 0.0
    %2010 = vmatprep.subr.mxu0 0.0
    %2011 = vmatpush1.msra.mxu0 0.0
    %2012 = vmatprep.subr.mxu0 0.0
    %2013 = vmatpush1.msra.mxu0 0.0
    %2014 = vmatprep.subr.mxu0 0.0
    %2015 = vmatpush1.msra.mxu0 0.0
    %2016 = vmatprep.subr.mxu0 0.0
    %2017 = vmatpush1.msra.mxu0 0.0
    %2018 = vmatprep.subr.mxu0 0.0
    %2019 = vmatpush1.msra.mxu0 0.0
    %2020 = vmatprep.subr.mxu0 0.0
    %2021 = vmatpush1.msra.mxu0 0.0
    %2022 = vmatprep.subr.mxu0 0.0
    %2023 = vmatpush1.msra.mxu0 0.0
    %2024 = vmatprep.subr.mxu0 0.0
    %2025 = vmatpush1.msra.mxu0 0.0
    %2026 = vmatprep.subr.mxu0 0.0
    %2027 = vmatpush1.msra.mxu0 0.0
    %2028 = vmatprep.subr.mxu0 0.0
    %2029 = vmatpush1.msra.mxu0 0.0
    %2030 = vmatprep.subr.mxu0 0.0
    %2031 = vmatpush1.msra.mxu0 0.0
    %2032 = vmatprep.subr.mxu0 0.0
    %2033 = vmatpush1.msra.mxu0 0.0
    %2034 = vmatprep.subr.mxu0 0.0
    %2035 = vmatpush1.msra.mxu0 0.0
    %2036 = vmatprep.subr.mxu0 0.0
    %2037 = vmatpush1.msra.mxu0 0.0
    %2038 = vmatprep.subr.mxu0 0.0
    %2039 = vmatpush1.msra.mxu0 0.0
    %2040 = vmatprep.subr.mxu0 0.0
    %2041 = vmatpush1.msra.mxu0 0.0
    %2042 = vmatprep.subr.mxu0 0.0
    %2043 = vmatpush1.msra.mxu0 0.0
    %2044 = vmatprep.subr.mxu0 0.0
    %2045 = vmatpush1.msra.mxu0 0.0
    %2046 = vmatprep.subr.mxu0 0.0
    %2047 = vmatpush1.msra.mxu0 0.0
    %2048 = vmatprep.subr.mxu0 0.0
    %2049 = vmatpush1.msra.mxu0 0.0
    %2050 = vmatprep.subr.mxu0 0.0
    %2051 = vmatpush1.msra.mxu0 0.0
    %2052 = vmatprep.subr.mxu0 0.0
    %2053 = vmatpush1.msra.mxu0 0.0
    %2054 = vmatprep.subr.mxu0 0.0
    %2055 = vmatpush1.msra.mxu0 0.0
    %2056 = vmatprep.subr.mxu0 0.0
    %2057 = vmatpush1.msra.mxu0 0.0
    %2058 = vmatprep.subr.mxu0 0.0
    %2059 = vmatpush1.msra.mxu0 0.0
    %2060 = vmatprep.subr.mxu0 0.0
    %2061 = vmatpush1.msra.mxu0 0.0
    %2062 = vmatprep.subr.mxu0 0.0
    %2063 = vmatpush1.msra.mxu0 0.0
    %2064 = vmatprep.subr.mxu0 0.0
    %2065 = vmatpush1.msra.mxu0 0.0
    %2066 = vmatprep.mubr.f32.mxu0 0.0
    %2067 = vmatmul.mubr.f32.gmra.mrb[0].mxu0 %v1997
    %v2068 = vpop.f32.mrb[0].mxu0
    %v2069 = vadd.f32 0.0, %v2068
    %v2070 = vpop.f32.mrb[0].mxu0
    %2071 = vmatprep.mubr.f32.mxu0 0.0
    %2072 = vmatmul.mubr.f32.gmra.mrb[0].mxu0 %v2000
    %v2073 = vpop.f32.mrb[0].mxu0
    %v2074 = vadd.f32 0.0, %v2073
    %v2075 = vpop.f32.mrb[0].mxu0
    %2076 = vdwg.mxu0
    %2081 = vrot.lane.b32.xlu0 %v1166, 8
    %v2082 = vpop.permute.xlu0 %2081
    %2083 = vrot.lane.b32.xlu0 %v1171, 8
    %v2084 = vpop.permute.xlu0 %2083
    %2085 = vrot.lane.b32.xlu0 %v1253, 8
    %v2086 = vpop.permute.xlu0 %2085
    %2087 = vrot.lane.b32.xlu0 %v1258, 8
    %v2088 = vpop.permute.xlu0 %2087
    %2097 = vrot.lane.b32.xlu0 %v1574, 16
    %v2098 = vpop.permute.xlu0 %2097
    %2099 = vrot.lane.b32.xlu0 %v1579, 16
    %v2100 = vpop.permute.xlu0 %2099
    %2101 = vrot.lane.b32.xlu0 %v1661, 16
    %v2102 = vpop.permute.xlu0 %2101
    %2103 = vrot.lane.b32.xlu0 %v1666, 16
    %v2104 = vpop.permute.xlu0 %2103
    %2113 = vrot.lane.b32.xlu0 %v1982, 24
    %v2114 = vpop.permute.xlu0 %2113
    %2115 = vrot.lane.b32.xlu0 %v1987, 24
    %v2116 = vpop.permute.xlu0 %2115
    %2117 = vrot.lane.b32.xlu0 %v2069, 24
    %v2118 = vpop.permute.xlu0 %2117
    %2119 = vrot.lane.b32.xlu0 %v2074, 24
    %v2120 = vpop.permute.xlu0 %2119
    %v2125 = vsel %vm161, %v758, %v2082
    %v2126 = vsel %vm161, %v763, %v2084
    %v2127 = vsel %vm161, %v845, %v2086
    %v2128 = vsel %vm161, %v850, %v2088
    %v2129 = vsel %vm634, %v2125, %v2098
    %v2130 = vsel %vm634, %v2126, %v2100
    %v2131 = vsel %vm634, %v2127, %v2102
    %v2132 = vsel %vm634, %v2128, %v2104
    %vm2133 = vcmask 195584
    %v2134 = vsel %vm2133, %v2129, %v2114
    %v2135 = vsel %vm2133, %v2130, %v2116
    %v2136 = vsel %vm2133, %v2131, %v2118
    %v2137 = vsel %vm2133, %v2132, %v2120
    %v2138 = vld [vmem:[%s15] sm:$0xff]
    %v2139 = vld [vmem:[%s15 + $0x8] sm:$0xff]
    %v2140 = vld [vmem:[%s15 + $0x10] sm:$0xff]
    %v2141 = vld [vmem:[%s15 + $0x18] sm:$0xff]
    %v2142 = vld [vmem:[%s17] sm:$0x1]
    %v2144 = vlaneseq
    %v2145 = vshrl.u32 %v2144, 7
    %v2146 = vsub.s32 0, %v2145
    %v2147 = vrot.slane %v2142, %v2146
    %v2150 = vsel %vm271, %v2134, 0
    %v2153 = vsel %vm271, %v2135, 0
    %v2156 = vsel %vm271, %v2136, 0
    %v2159 = vsel %vm271, %v2137, 0
    %2161 = vmatprep.subr.mxu0 0.0
    %2162 = vmatpush1.msra.mxu0 %v2138
    %2163 = vmatprep.subr.mxu0 0.0
    %2164 = vmatpush1.msra.mxu0 %v2139
    %2165 = vmatprep.subr.mxu0 0.0
    %2166 = vmatpush1.msra.mxu0 %v2140
    %2167 = vmatprep.subr.mxu0 0.0
    %2168 = vmatpush1.msra.mxu0 %v2141
    %2169 = vmatprep.subr.mxu0 0.0
    %2170 = vmatpush1.msra.mxu0 0.0
    %2171 = vmatprep.subr.mxu0 0.0
    %2172 = vmatpush1.msra.mxu0 0.0
    %2173 = vmatprep.subr.mxu0 0.0
    %2174 = vmatpush1.msra.mxu0 0.0
    %2175 = vmatprep.subr.mxu0 0.0
    %2176 = vmatpush1.msra.mxu0 0.0
    %2177 = vmatprep.subr.mxu0 0.0
    %2178 = vmatpush1.msra.mxu0 0.0
    %2179 = vmatprep.subr.mxu0 0.0
    %2180 = vmatpush1.msra.mxu0 0.0
    %2181 = vmatprep.subr.mxu0 0.0
    %2182 = vmatpush1.msra.mxu0 0.0
    %2183 = vmatprep.subr.mxu0 0.0
    %2184 = vmatpush1.msra.mxu0 0.0
    %2185 = vmatprep.subr.mxu0 0.0
    %2186 = vmatpush1.msra.mxu0 0.0
    %2187 = vmatprep.subr.mxu0 0.0
    %2188 = vmatpush1.msra.mxu0 0.0
    %2189 = vmatprep.subr.mxu0 0.0
    %2190 = vmatpush1.msra.mxu0 0.0
    %2191 = vmatprep.subr.mxu0 0.0
    %2192 = vmatpush1.msra.mxu0 0.0
    %2193 = vmatprep.subr.mxu0 0.0
    %2194 = vmatpush1.msra.mxu0 0.0
    %2195 = vmatprep.subr.mxu0 0.0
    %2196 = vmatpush1.msra.mxu0 0.0
    %2197 = vmatprep.subr.mxu0 0.0
    %2198 = vmatpush1.msra.mxu0 0.0
    %2199 = vmatprep.subr.mxu0 0.0
    %2200 = vmatpush1.msra.mxu0 0.0
    %2201 = vmatprep.subr.mxu0 0.0
    %2202 = vmatpush1.msra.mxu0 0.0
    %2203 = vmatprep.subr.mxu0 0.0
    %2204 = vmatpush1.msra.mxu0 0.0
    %2205 = vmatprep.subr.mxu0 0.0
    %2206 = vmatpush1.msra.mxu0 0.0
    %2207 = vmatprep.subr.mxu0 0.0
    %2208 = vmatpush1.msra.mxu0 0.0
    %2209 = vmatprep.subr.mxu0 0.0
    %2210 = vmatpush1.msra.mxu0 0.0
    %2211 = vmatprep.subr.mxu0 0.0
    %2212 = vmatpush1.msra.mxu0 0.0
    %2213 = vmatprep.subr.mxu0 0.0
    %2214 = vmatpush1.msra.mxu0 0.0
    %2215 = vmatprep.subr.mxu0 0.0
    %2216 = vmatpush1.msra.mxu0 0.0
    %2217 = vmatprep.subr.mxu0 0.0
    %2218 = vmatpush1.msra.mxu0 0.0
    %2219 = vmatprep.subr.mxu0 0.0
    %2220 = vmatpush1.msra.mxu0 0.0
    %2221 = vmatprep.subr.mxu0 0.0
    %2222 = vmatpush1.msra.mxu0 0.0
    %2223 = vmatprep.subr.mxu0 0.0
    %2224 = vmatpush1.msra.mxu0 0.0
    %2225 = vmatprep.mubr.f32.mxu0 0.0
    %2226 = vmatmul.mubr.f32.gmra.mrb[0].mxu0 %v2150
    %v2227 = vpop.f32.mrb[0].mxu0
    %v2228 = vadd.f32 %v2147, %v2227
    %v2229 = vpop.f32.mrb[0].mxu0
    %2230 = vmatprep.mubr.f32.mxu0 0.0
    %2231 = vmatmul.mubr.f32.gmra.mrb[0].mxu0 %v2153
    %v2232 = vpop.f32.mrb[0].mxu0
    %v2233 = vadd.f32 %v2147, %v2232
    %v2234 = vpop.f32.mrb[0].mxu0
    %2235 = vmatprep.mubr.f32.mxu0 0.0
    %2236 = vmatmul.mubr.f32.gmra.mrb[0].mxu0 %v2156
    %v2237 = vpop.f32.mrb[0].mxu0
    %v2238 = vadd.f32 %v2147, %v2237
    %v2239 = vpop.f32.mrb[0].mxu0
    %2240 = vmatprep.mubr.f32.mxu0 0.0
    %2241 = vmatmul.mubr.f32.gmra.mrb[0].mxu0 %v2159
    %v2242 = vpop.f32.mrb[0].mxu0
    %v2243 = vadd.f32 %v2147, %v2242
    %v2244 = vpop.f32.mrb[0].mxu0
    %2245 = vdwg.mxu0
    %v2246 = vadd.f32 %v265, %v2228
    %v2247 = vadd.f32 %v266, %v2233
    %v2248 = vadd.f32 %v267, %v2238
    %v2249 = vadd.f32 %v268, %v2243
    %v2250 = vld [vmem:[%s19] sm:$0x1]
    %v2251 = vld [vmem:[%s21] sm:$0x1]
    %v2252 = vsel %vm271, %v2246, 0.0
    %2253 = vadd.xlane.f32.xlu0 %v2252
    %v2254 = vpop.xlane.xlu0 %2253
    %v2255 = vsel %vm271, %v2247, 0.0
    %2256 = vadd.xlane.f32.xlu0 %v2255
    %v2257 = vpop.xlane.xlu0 %2256
    %v2258 = vsel %vm271, %v2248, 0.0
    %2259 = vadd.xlane.f32.xlu0 %v2258
    %v2260 = vpop.xlane.xlu0 %2259
    %v2261 = vsel %vm271, %v2249, 0.0
    %2262 = vadd.xlane.f32.xlu0 %v2261
    %v2263 = vpop.xlane.xlu0 %2262
    %v2264 = vmul.f32 %v2254, %v284
    %v2265 = vmul.f32 %v2257, %v284
    %v2266 = vmul.f32 %v2260, %v284
    %v2267 = vmul.f32 %v2263, %v284
    %v2268 = vsub.f32 %v2246, %v2264
    %v2269 = vsub.f32 %v2247, %v2265
    %v2270 = vsub.f32 %v2248, %v2266
    %v2271 = vsub.f32 %v2249, %v2267
    %v2272 = vmul.f32 %v2268, %v2268
    %v2273 = vmul.f32 %v2269, %v2269
    %v2274 = vmul.f32 %v2270, %v2270
    %v2275 = vmul.f32 %v2271, %v2271
    %v2276 = vsel %vm271, %v2272, 0.0
    %2277 = vadd.xlane.f32.xlu0 %v2276
    %v2278 = vpop.xlane.xlu0 %2277
    %v2279 = vsel %vm271, %v2273, 0.0
    %2280 = vadd.xlane.f32.xlu0 %v2279
    %v2281 = vpop.xlane.xlu0 %2280
    %v2282 = vsel %vm271, %v2274, 0.0
    %2283 = vadd.xlane.f32.xlu0 %v2282
    %v2284 = vpop.xlane.xlu0 %2283
    %v2285 = vsel %vm271, %v2275, 0.0
    %2286 = vadd.xlane.f32.xlu0 %v2285
    %v2287 = vpop.xlane.xlu0 %2286
    %v2288 = vmul.f32 %v2278, %v284
    %v2289 = vmul.f32 %v2281, %v284
    %v2290 = vmul.f32 %v2284, %v284
    %v2291 = vmul.f32 %v2287, %v284
    %v2292 = vadd.f32 %v2288, 1e-05
    %v2293 = vadd.f32 %v2289, 1e-05
    %v2294 = vadd.f32 %v2290, 1e-05
    %v2295 = vadd.f32 %v2291, 1e-05
    %v2296 = vrsqrt.pop %v2292
    %v2297 = vrsqrt.pop %v2293
    %v2298 = vrsqrt.pop %v2294
    %v2299 = vrsqrt.pop %v2295
    %v2300 = vmul.f32 %v2268, %v2296
    %v2301 = vmul.f32 %v2269, %v2297
    %v2302 = vmul.f32 %v2270, %v2298
    %v2303 = vmul.f32 %v2271, %v2299
    %v2305 = vlaneseq
    %v2306 = vshrl.u32 %v2305, 7
    %v2307 = vsub.s32 0, %v2306
    %v2308 = vrot.slane %v2250, %v2307
    %v2310 = vmul.f32 %v2300, %v2308
    %v2311 = vmul.f32 %v2301, %v2308
    %v2312 = vmul.f32 %v2302, %v2308
    %v2313 = vmul.f32 %v2303, %v2308
    %v2315 = vlaneseq
    %v2316 = vshrl.u32 %v2315, 7
    %v2317 = vsub.s32 0, %v2316
    %v2318 = vrot.slane %v2251, %v2317
    %v2320 = vadd.f32 %v2310, %v2318
    %v2321 = vadd.f32 %v2311, %v2318
    %v2322 = vadd.f32 %v2312, %v2318
    %v2323 = vadd.f32 %v2313, %v2318
    %v2324 = vld [vmem:[%s23] sm:$0xff]
    %v2325 = vld [vmem:[%s23 + $0x8] sm:$0xff]
    %v2326 = vld [vmem:[%s23 + $0x10] sm:$0xff]
    %v2327 = vld [vmem:[%s23 + $0x18] sm:$0xff]
    %v2328 = vld [vmem:[%s25] sm:$0x1]
    %v2330 = vlaneseq
    %v2331 = vshrl.u32 %v2330, 7
    %v2332 = vsub.s32 0, %v2331
    %v2333 = vrot.slane %v2328, %v2332
    %v2336 = vsel %vm271, %v2320, 0
    %v2339 = vsel %vm271, %v2321, 0
    %v2342 = vsel %vm271, %v2322, 0
    %v2345 = vsel %vm271, %v2323, 0
    %2347 = vmatprep.subr.mxu0 0.0
    %2348 = vmatpush1.msra.mxu0 %v2324
    %2349 = vmatprep.subr.mxu0 0.0
    %2350 = vmatpush1.msra.mxu0 %v2325
    %2351 = vmatprep.subr.mxu0 0.0
    %2352 = vmatpush1.msra.mxu0 %v2326
    %2353 = vmatprep.subr.mxu0 0.0
    %2354 = vmatpush1.msra.mxu0 %v2327
    %2355 = vmatprep.subr.mxu0 0.0
    %2356 = vmatpush1.msra.mxu0 0.0
    %2357 = vmatprep.subr.mxu0 0.0
    %2358 = vmatpush1.msra.mxu0 0.0
    %2359 = vmatprep.subr.mxu0 0.0
    %2360 = vmatpush1.msra.mxu0 0.0
    %2361 = vmatprep.subr.mxu0 0.0
    %2362 = vmatpush1.msra.mxu0 0.0
    %2363 = vmatprep.subr.mxu0 0.0
    %2364 = vmatpush1.msra.mxu0 0.0
    %2365 = vmatprep.subr.mxu0 0.0
    %2366 = vmatpush1.msra.mxu0 0.0
    %2367 = vmatprep.subr.mxu0 0.0
    %2368 = vmatpush1.msra.mxu0 0.0
    %2369 = vmatprep.subr.mxu0 0.0
    %2370 = vmatpush1.msra.mxu0 0.0
    %2371 = vmatprep.subr.mxu0 0.0
    %2372 = vmatpush1.msra.mxu0 0.0
    %2373 = vmatprep.subr.mxu0 0.0
    %2374 = vmatpush1.msra.mxu0 0.0
    %2375 = vmatprep.subr.mxu0 0.0
    %2376 = vmatpush1.msra.mxu0 0.0
    %2377 = vmatprep.subr.mxu0 0.0
    %2378 = vmatpush1.msra.mxu0 0.0
    %2379 = vmatprep.subr.mxu0 0.0
    %2380 = vmatpush1.msra.mxu0 0.0
    %2381 = vmatprep.subr.mxu0 0.0
    %2382 = vmatpush1.msra.mxu0 0.0
    %2383 = vmatprep.subr.mxu0 0.0
    %2384 = vmatpush1.msra.mxu0 0.0
    %2385 = vmatprep.subr.mxu0 0.0
    %2386 = vmatpush1.msra.mxu0 0.0
    %2387 = vmatprep.subr.mxu0 0.0
    %2388 = vmatpush1.msra.mxu0 0.0
    %2389 = vmatprep.subr.mxu0 0.0
    %2390 = vmatpush1.msra.mxu0 0.0
    %2391 = vmatprep.subr.mxu0 0.0
    %2392 = vmatpush1.msra.mxu0 0.0
    %2393 = vmatprep.subr.mxu0 0.0
    %2394 = vmatpush1.msra.mxu0 0.0
    %2395 = vmatprep.subr.mxu0 0.0
    %2396 = vmatpush1.msra.mxu0 0.0
    %2397 = vmatprep.subr.mxu0 0.0
    %2398 = vmatpush1.msra.mxu0 0.0
    %2399 = vmatprep.subr.mxu0 0.0
    %2400 = vmatpush1.msra.mxu0 0.0
    %2401 = vmatprep.subr.mxu0 0.0
    %2402 = vmatpush1.msra.mxu0 0.0
    %2403 = vmatprep.subr.mxu0 0.0
    %2404 = vmatpush1.msra.mxu0 0.0
    %2405 = vmatprep.subr.mxu0 0.0
    %2406 = vmatpush1.msra.mxu0 0.0
    %2407 = vmatprep.subr.mxu0 0.0
    %2408 = vmatpush1.msra.mxu0 0.0
    %2409 = vmatprep.subr.mxu0 0.0
    %2410 = vmatpush1.msra.mxu0 0.0
    %2411 = vmatprep.mubr.f32.mxu0 0.0
    %2412 = vmatmul.mubr.f32.gmra.mrb[0].mxu0 %v2336
    %v2413 = vpop.f32.mrb[0].mxu0
    %v2414 = vadd.f32 %v2333, %v2413
    %v2415 = vpop.f32.mrb[0].mxu0
    %2416 = vmatprep.mubr.f32.mxu0 0.0
    %2417 = vmatmul.mubr.f32.gmra.mrb[0].mxu0 %v2339
    %v2418 = vpop.f32.mrb[0].mxu0
    %v2419 = vadd.f32 %v2333, %v2418
    %v2420 = vpop.f32.mrb[0].mxu0
    %2421 = vmatprep.mubr.f32.mxu0 0.0
    %2422 = vmatmul.mubr.f32.gmra.mrb[0].mxu0 %v2342
    %v2423 = vpop.f32.mrb[0].mxu0
    %v2424 = vadd.f32 %v2333, %v2423
    %v2425 = vpop.f32.mrb[0].mxu0
    %2426 = vmatprep.mubr.f32.mxu0 0.0
    %2427 = vmatmul.mubr.f32.gmra.mrb[0].mxu0 %v2345
    %v2428 = vpop.f32.mrb[0].mxu0
    %v2429 = vadd.f32 %v2333, %v2428
    %v2430 = vpop.f32.mrb[0].mxu0
    %2431 = vdwg.mxu0
    %v2432 = vmul.f32 %v2414, 0.5
    %v2433 = vmul.f32 %v2419, 0.5
    %v2434 = vmul.f32 %v2424, 0.5
    %v2435 = vmul.f32 %v2429, 0.5
    %v2436 = vmul.f32 %v2414, 0.70710677
    %v2437 = vmul.f32 %v2419, 0.70710677
    %v2438 = vmul.f32 %v2424, 0.70710677
    %v2439 = vmul.f32 %v2429, 0.70710677
    %vm2440 = vcmp.ge.f32.partialorder %v2436, 0.0
    %vm2441 = vcmp.ge.f32.partialorder %v2437, 0.0
    %vm2442 = vcmp.ge.f32.partialorder %v2438, 0.0
    %vm2443 = vcmp.ge.f32.partialorder %v2439, 0.0
    %v2444 = vsel %vm2440, 1.0, -1.0
    %v2445 = vsel %vm2441, 1.0, -1.0
    %v2446 = vsel %vm2442, 1.0, -1.0
    %v2447 = vsel %vm2443, 1.0, -1.0
    %v2448 = vand.u32 2147483647, %v2436
    %v2449 = vand.u32 2147483647, %v2437
    %v2450 = vand.u32 2147483647, %v2438
    %v2451 = vand.u32 2147483647, %v2439
    %v2452 = vmul.f32 %v2448, 0.3275911
    %v2453 = vmul.f32 %v2449, 0.3275911
    %v2454 = vmul.f32 %v2450, 0.3275911
    %v2455 = vmul.f32 %v2451, 0.3275911
    %v2456 = vadd.f32 %v2452, 1.0
    %v2457 = vadd.f32 %v2453, 1.0
    %v2458 = vadd.f32 %v2454, 1.0
    %v2459 = vadd.f32 %v2455, 1.0
    %v2460 = vrcp.pop %v2456
    %v2461 = vmul.f32 1.0, %v2460
    %v2462 = vrcp.pop %v2457
    %v2463 = vmul.f32 1.0, %v2462
    %v2464 = vrcp.pop %v2458
    %v2465 = vmul.f32 1.0, %v2464
    %v2466 = vrcp.pop %v2459
    %v2467 = vmul.f32 1.0, %v2466
    %v2468 = vmul.f32 %v2461, 1.0614054
    %v2469 = vmul.f32 %v2463, 1.0614054
    %v2470 = vmul.f32 %v2465, 1.0614054
    %v2471 = vmul.f32 %v2467, 1.0614054
    %v2472 = vadd.f32 %v2468, -1.4531521
    %v2473 = vadd.f32 %v2469, -1.4531521
    %v2474 = vadd.f32 %v2470, -1.4531521
    %v2475 = vadd.f32 %v2471, -1.4531521
    %v2476 = vmul.f32 %v2472, %v2461
    %v2477 = vmul.f32 %v2473, %v2463
    %v2478 = vmul.f32 %v2474, %v2465
    %v2479 = vmul.f32 %v2475, %v2467
    %v2480 = vadd.f32 %v2476, 1.4214138
    %v2481 = vadd.f32 %v2477, 1.4214138
    %v2482 = vadd.f32 %v2478, 1.4214138
    %v2483 = vadd.f32 %v2479, 1.4214138
    %v2484 = vmul.f32 %v2480, %v2461
    %v2485 = vmul.f32 %v2481, %v2463
    %v2486 = vmul.f32 %v2482, %v2465
    %v2487 = vmul.f32 %v2483, %v2467
    %v2488 = vadd.f32 %v2484, -0.28449672
    %v2489 = vadd.f32 %v2485, -0.28449672
    %v2490 = vadd.f32 %v2486, -0.28449672
    %v2491 = vadd.f32 %v2487, -0.28449672
    %v2492 = vmul.f32 %v2488, %v2461
    %v2493 = vmul.f32 %v2489, %v2463
    %v2494 = vmul.f32 %v2490, %v2465
    %v2495 = vmul.f32 %v2491, %v2467
    %v2496 = vadd.f32 %v2492, 0.2548296
    %v2497 = vadd.f32 %v2493, 0.2548296
    %v2498 = vadd.f32 %v2494, 0.2548296
    %v2499 = vadd.f32 %v2495, 0.2548296
    %v2500 = vmul.f32 %v2496, %v2461
    %v2501 = vmul.f32 %v2497, %v2463
    %v2502 = vmul.f32 %v2498, %v2465
    %v2503 = vmul.f32 %v2499, %v2467
    %v2504 = vsub.f32 0.0, %v2448
    %v2505 = vsub.f32 0.0, %v2449
    %v2506 = vsub.f32 0.0, %v2450
    %v2507 = vsub.f32 0.0, %v2451
    %v2508 = vmul.f32 %v2504, %v2448
    %v2509 = vmul.f32 %v2505, %v2449
    %v2510 = vmul.f32 %v2506, %v2450
    %v2511 = vmul.f32 %v2507, %v2451
    %v2512 = vmul.f32 %v2508, 1.442695
    %v2513 = vpow.pop %v2512
    %v2514 = vmul.f32 %v2509, 1.442695
    %v2515 = vpow.pop %v2514
    %v2516 = vmul.f32 %v2510, 1.442695
    %v2517 = vpow.pop %v2516
    %v2518 = vmul.f32 %v2511, 1.442695
    %v2519 = vpow.pop %v2518
    %v2520 = vmul.f32 %v2500, %v2513
    %v2521 = vmul.f32 %v2501, %v2515
    %v2522 = vmul.f32 %v2502, %v2517
    %v2523 = vmul.f32 %v2503, %v2519
    %v2524 = vsub.f32 1.0, %v2520
    %v2525 = vsub.f32 1.0, %v2521
    %v2526 = vsub.f32 1.0, %v2522
    %v2527 = vsub.f32 1.0, %v2523
    %v2528 = vmul.f32 %v2444, %v2524
    %v2529 = vmul.f32 %v2445, %v2525
    %v2530 = vmul.f32 %v2446, %v2526
    %v2531 = vmul.f32 %v2447, %v2527
    %v2532 = vadd.f32 %v2528, 1.0
    %v2533 = vadd.f32 %v2529, 1.0
    %v2534 = vadd.f32 %v2530, 1.0
    %v2535 = vadd.f32 %v2531, 1.0
    %v2536 = vmul.f32 %v2432, %v2532
    %v2537 = vmul.f32 %v2433, %v2533
    %v2538 = vmul.f32 %v2434, %v2534
    %v2539 = vmul.f32 %v2435, %v2535
    %v2540 = vld [vmem:[%s27] sm:$0xff]
    %v2541 = vld [vmem:[%s27 + $0x8] sm:$0xff]
    %v2542 = vld [vmem:[%s27 + $0x10] sm:$0xff]
    %v2543 = vld [vmem:[%s27 + $0x18] sm:$0xff]
    %v2544 = vld [vmem:[%s27 + $0x20] sm:$0xff]
    %v2545 = vld [vmem:[%s27 + $0x28] sm:$0xff]
    %v2546 = vld [vmem:[%s27 + $0x30] sm:$0xff]
    %v2547 = vld [vmem:[%s27 + $0x38] sm:$0xff]
    %v2548 = vld [vmem:[%s27 + $0x40] sm:$0xff]
    %v2549 = vld [vmem:[%s27 + $0x48] sm:$0xff]
    %v2550 = vld [vmem:[%s27 + $0x50] sm:$0xff]
    %v2551 = vld [vmem:[%s27 + $0x58] sm:$0xff]
    %v2552 = vld [vmem:[%s27 + $0x60] sm:$0xff]
    %v2553 = vld [vmem:[%s27 + $0x68] sm:$0xff]
    %v2554 = vld [vmem:[%s27 + $0x70] sm:$0xff]
    %v2555 = vld [vmem:[%s27 + $0x78] sm:$0xff]
    %v2556 = vld [vmem:[%s29] sm:$0x1]
    %v2558 = vlaneseq
    %v2559 = vshrl.u32 %v2558, 7
    %v2560 = vsub.s32 0, %v2559
    %v2561 = vrot.slane %v2556, %v2560
    %2563 = vmatprep.subr.mxu0 0.0
    %2564 = vmatpush1.msra.mxu0 %v2540
    %2565 = vmatprep.subr.mxu0 0.0
    %2566 = vmatpush1.msra.mxu0 %v2541
    %2567 = vmatprep.subr.mxu0 0.0
    %2568 = vmatpush1.msra.mxu0 %v2542
    %2569 = vmatprep.subr.mxu0 0.0
    %2570 = vmatpush1.msra.mxu0 %v2543
    %2571 = vmatprep.subr.mxu0 0.0
    %2572 = vmatpush1.msra.mxu0 %v2544
    %2573 = vmatprep.subr.mxu0 0.0
    %2574 = vmatpush1.msra.mxu0 %v2545
    %2575 = vmatprep.subr.mxu0 0.0
    %2576 = vmatpush1.msra.mxu0 %v2546
    %2577 = vmatprep.subr.mxu0 0.0
    %2578 = vmatpush1.msra.mxu0 %v2547
    %2579 = vmatprep.subr.mxu0 0.0
    %2580 = vmatpush1.msra.mxu0 %v2548
    %2581 = vmatprep.subr.mxu0 0.0
    %2582 = vmatpush1.msra.mxu0 %v2549
    %2583 = vmatprep.subr.mxu0 0.0
    %2584 = vmatpush1.msra.mxu0 %v2550
    %2585 = vmatprep.subr.mxu0 0.0
    %2586 = vmatpush1.msra.mxu0 %v2551
    %2587 = vmatprep.subr.mxu0 0.0
    %2588 = vmatpush1.msra.mxu0 %v2552
    %2589 = vmatprep.subr.mxu0 0.0
    %2590 = vmatpush1.msra.mxu0 %v2553
    %2591 = vmatprep.subr.mxu0 0.0
    %2592 = vmatpush1.msra.mxu0 %v2554
    %2593 = vmatprep.subr.mxu0 0.0
    %2594 = vmatpush1.msra.mxu0 %v2555
    %2595 = vmatprep.subr.mxu0 0.0
    %2596 = vmatpush1.msra.mxu0 0.0
    %2597 = vmatprep.subr.mxu0 0.0
    %2598 = vmatpush1.msra.mxu0 0.0
    %2599 = vmatprep.subr.mxu0 0.0
    %2600 = vmatpush1.msra.mxu0 0.0
    %2601 = vmatprep.subr.mxu0 0.0
    %2602 = vmatpush1.msra.mxu0 0.0
    %2603 = vmatprep.subr.mxu0 0.0
    %2604 = vmatpush1.msra.mxu0 0.0
    %2605 = vmatprep.subr.mxu0 0.0
    %2606 = vmatpush1.msra.mxu0 0.0
    %2607 = vmatprep.subr.mxu0 0.0
    %2608 = vmatpush1.msra.mxu0 0.0
    %2609 = vmatprep.subr.mxu0 0.0
    %2610 = vmatpush1.msra.mxu0 0.0
    %2611 = vmatprep.subr.mxu0 0.0
    %2612 = vmatpush1.msra.mxu0 0.0
    %2613 = vmatprep.subr.mxu0 0.0
    %2614 = vmatpush1.msra.mxu0 0.0
    %2615 = vmatprep.subr.mxu0 0.0
    %2616 = vmatpush1.msra.mxu0 0.0
    %2617 = vmatprep.subr.mxu0 0.0
    %2618 = vmatpush1.msra.mxu0 0.0
    %2619 = vmatprep.subr.mxu0 0.0
    %2620 = vmatpush1.msra.mxu0 0.0
    %2621 = vmatprep.subr.mxu0 0.0
    %2622 = vmatpush1.msra.mxu0 0.0
    %2623 = vmatprep.subr.mxu0 0.0
    %2624 = vmatpush1.msra.mxu0 0.0
    %2625 = vmatprep.subr.mxu0 0.0
    %2626 = vmatpush1.msra.mxu0 0.0
    %2627 = vmatprep.mubr.f32.mxu0 0.0
    %2628 = vmatmul.mubr.f32.gmra.mrb[0].mxu0 %v2536
    %v2629 = vpop.f32.mrb[0].mxu0
    %v2630 = vadd.f32 %v2561, %v2629
    %v2631 = vpop.f32.mrb[0].mxu0
    %2632 = vmatprep.mubr.f32.mxu0 0.0
    %2633 = vmatmul.mubr.f32.gmra.mrb[0].mxu0 %v2537
    %v2634 = vpop.f32.mrb[0].mxu0
    %v2635 = vadd.f32 %v2561, %v2634
    %v2636 = vpop.f32.mrb[0].mxu0
    %2637 = vmatprep.mubr.f32.mxu0 0.0
    %2638 = vmatmul.mubr.f32.gmra.mrb[0].mxu0 %v2538
    %v2639 = vpop.f32.mrb[0].mxu0
    %v2640 = vadd.f32 %v2561, %v2639
    %v2641 = vpop.f32.mrb[0].mxu0
    %2642 = vmatprep.mubr.f32.mxu0 0.0
    %2643 = vmatmul.mubr.f32.gmra.mrb[0].mxu0 %v2539
    %v2644 = vpop.f32.mrb[0].mxu0
    %v2645 = vadd.f32 %v2561, %v2644
    %v2646 = vpop.f32.mrb[0].mxu0
    %2647 = vdwg.mxu0
    %v2648 = vadd.f32 %v2246, %v2630
    %v2649 = vadd.f32 %v2247, %v2635
    %v2650 = vadd.f32 %v2248, %v2640
    %v2651 = vadd.f32 %v2249, %v2645
    %v2652 = vld [vmem:[%s31] sm:$0x1]
    %v2653 = vld [vmem:[%s33] sm:$0x1]
    %v2654 = vsel %vm271, %v2648, 0.0
    %2655 = vadd.xlane.f32.xlu0 %v2654
    %v2656 = vpop.xlane.xlu0 %2655
    %v2657 = vsel %vm271, %v2649, 0.0
    %2658 = vadd.xlane.f32.xlu0 %v2657
    %v2659 = vpop.xlane.xlu0 %2658
    %v2660 = vsel %vm271, %v2650, 0.0
    %2661 = vadd.xlane.f32.xlu0 %v2660
    %v2662 = vpop.xlane.xlu0 %2661
    %v2663 = vsel %vm271, %v2651, 0.0
    %2664 = vadd.xlane.f32.xlu0 %v2663
    %v2665 = vpop.xlane.xlu0 %2664
    %v2666 = vmul.f32 %v2656, %v284
    %v2667 = vmul.f32 %v2659, %v284
    %v2668 = vmul.f32 %v2662, %v284
    %v2669 = vmul.f32 %v2665, %v284
    %v2670 = vsub.f32 %v2648, %v2666
    %v2671 = vsub.f32 %v2649, %v2667
    %v2672 = vsub.f32 %v2650, %v2668
    %v2673 = vsub.f32 %v2651, %v2669
    %v2674 = vmul.f32 %v2670, %v2670
    %v2675 = vmul.f32 %v2671, %v2671
    %v2676 = vmul.f32 %v2672, %v2672
    %v2677 = vmul.f32 %v2673, %v2673
    %v2678 = vsel %vm271, %v2674, 0.0
    %2679 = vadd.xlane.f32.xlu0 %v2678
    %v2680 = vpop.xlane.xlu0 %2679
    %v2681 = vsel %vm271, %v2675, 0.0
    %2682 = vadd.xlane.f32.xlu0 %v2681
    %v2683 = vpop.xlane.xlu0 %2682
    %v2684 = vsel %vm271, %v2676, 0.0
    %2685 = vadd.xlane.f32.xlu0 %v2684
    %v2686 = vpop.xlane.xlu0 %2685
    %v2687 = vsel %vm271, %v2677, 0.0
    %2688 = vadd.xlane.f32.xlu0 %v2687
    %v2689 = vpop.xlane.xlu0 %2688
    %v2690 = vmul.f32 %v2680, %v284
    %v2691 = vmul.f32 %v2683, %v284
    %v2692 = vmul.f32 %v2686, %v284
    %v2693 = vmul.f32 %v2689, %v284
    %v2694 = vadd.f32 %v2690, 1e-05
    %v2695 = vadd.f32 %v2691, 1e-05
    %v2696 = vadd.f32 %v2692, 1e-05
    %v2697 = vadd.f32 %v2693, 1e-05
    %v2698 = vrsqrt.pop %v2694
    %v2699 = vrsqrt.pop %v2695
    %v2700 = vrsqrt.pop %v2696
    %v2701 = vrsqrt.pop %v2697
    %v2702 = vmul.f32 %v2670, %v2698
    %v2703 = vmul.f32 %v2671, %v2699
    %v2704 = vmul.f32 %v2672, %v2700
    %v2705 = vmul.f32 %v2673, %v2701
    %v2707 = vlaneseq
    %v2708 = vshrl.u32 %v2707, 7
    %v2709 = vsub.s32 0, %v2708
    %v2710 = vrot.slane %v2652, %v2709
    %v2712 = vmul.f32 %v2702, %v2710
    %v2713 = vmul.f32 %v2703, %v2710
    %v2714 = vmul.f32 %v2704, %v2710
    %v2715 = vmul.f32 %v2705, %v2710
    %v2717 = vlaneseq
    %v2718 = vshrl.u32 %v2717, 7
    %v2719 = vsub.s32 0, %v2718
    %v2720 = vrot.slane %v2653, %v2719
    %v2722 = vadd.f32 %v2712, %v2720
    %v2723 = vadd.f32 %v2713, %v2720
    %v2724 = vadd.f32 %v2714, %v2720
    %v2725 = vadd.f32 %v2715, %v2720
    %v2726 = vmul.f32 %v2722, %v144
    %v2727 = vmul.f32 %v2723, %v145
    %v2728 = vmul.f32 %v2724, %v144
    %v2729 = vmul.f32 %v2725, %v145
    %v2730 = vsel %vm271, %v2726, 0.0
    %v2731 = vsel %vm271, %v2727, 0.0
    %v2732 = vadd.f32 %v2730, %v2731
    %v2733 = vrot.slane %v2732, 4
    %v2734 = vadd.f32 %v2732, %v2733
    %v2735 = vrot.slane %v2734, 2
    %v2736 = vadd.f32 %v2734, %v2735
    %v2737 = vrot.slane %v2736, 1
    %v2738 = vadd.f32 %v2736, %v2737
    %v2739 = vsel %vm271, %v2728, 0.0
    %v2740 = vsel %vm271, %v2729, 0.0
    %v2741 = vadd.f32 %v2739, %v2740
    %v2742 = vrot.slane %v2741, 4
    %v2743 = vadd.f32 %v2741, %v2742
    %v2744 = vrot.slane %v2743, 2
    %v2745 = vadd.f32 %v2743, %v2744
    %v2746 = vrot.slane %v2745, 1
    %v2747 = vadd.f32 %v2745, %v2746
    %v2748 = vmul.f32 %v2722, %v138
    %v2749 = vmul.f32 %v2723, %v139
    %v2750 = vmul.f32 %v2724, %v138
    %v2751 = vmul.f32 %v2725, %v139
    %v2752 = vsel %vm271, %v2748, 0.0
    %v2753 = vsel %vm271, %v2749, 0.0
    %v2754 = vadd.f32 %v2752, %v2753
    %v2755 = vrot.slane %v2754, 4
    %v2756 = vadd.f32 %v2754, %v2755
    %v2757 = vrot.slane %v2756, 2
    %v2758 = vadd.f32 %v2756, %v2757
    %v2759 = vrot.slane %v2758, 1
    %v2760 = vadd.f32 %v2758, %v2759
    %v2761 = vsel %vm271, %v2750, 0.0
    %v2762 = vsel %vm271, %v2751, 0.0
    %v2763 = vadd.f32 %v2761, %v2762
    %v2764 = vrot.slane %v2763, 4
    %v2765 = vadd.f32 %v2763, %v2764
    %v2766 = vrot.slane %v2765, 2
    %v2767 = vadd.f32 %v2765, %v2766
    %v2768 = vrot.slane %v2767, 1
    %v2769 = vadd.f32 %v2767, %v2768
    %v2770 = vmul.f32 %v2760, 0.125
    %v2771 = vmul.f32 %v2769, 0.125
    %vm2774 = vcmask 1041409
    %v2775 = vsel %vm2774, %v2771, %v2770
    %vm2777 = vcmask 254976
    %v2778 = vsel %vm2777, %v2775, 0.0
    %2779 = vadd.xlane.f32.xlu0 %v2778
    %v2780 = vpop.xlane.xlu0 %2779
    %v2781 = vmul.f32 %v2780, %v284
    %v2783 = vrot.slane %v2781, 1
    %v2786 = vsub.f32 %v2770, %v2781
    %v2787 = vsub.f32 %v2771, %v2783
    %v2788 = vmul.f32 %v2786, %v2786
    %v2789 = vmul.f32 %v2787, %v2787
    %v2792 = vrot.slane %v2789, 7
    %v2793 = vsel %vm2774, %v2792, %v2788
    %v2795 = vsel %vm2777, %v2793, 0.0
    %2796 = vadd.xlane.f32.xlu0 %v2795
    %v2797 = vpop.xlane.xlu0 %2796
    %v2798 = vmul.f32 %v2797, %v284
    %v2799 = vadd.f32 %v2798, 1e-05
    %v2800 = vrsqrt.pop %v2799
    %v2802 = vrot.slane %v2800, 1
    %v2805 = vmul.f32 %v2786, %v2800
    %v2806 = vmul.f32 %v2787, %v2802
    %v2807 = vmul.f32 %v2805, %v2710
    %v2808 = vmul.f32 %v2806, %v2710
    %v2809 = vadd.f32 %v2807, %v2720
    %v2810 = vadd.f32 %v2808, %v2720
    %v2813 = vrot.slane %v2810, 7
    %v2814 = vsel %vm2774, %v2813, %v2809
    %v2818 = vsel %vm2774, %v2747, %v2738
    %2819 = vrot.lane.b32.xlu0 %v2818, 32
    %v2820 = vpop.permute.xlu0 %2819
    %v2822 = vsel %vm271, %v2814, %v2820
    %v2823 = vld [vmem:[%s37] sm:$0xff]
    %v2824 = vld [vmem:[%s37 + $0x8] sm:$0xff]
    %v2825 = vld [vmem:[%s37 + $0x10] sm:$0xff]
    %v2826 = vld [vmem:[%s37 + $0x18] sm:$0xff]
    %v2827 = vld [vmem:[%s37 + $0x20] sm:$0xff]
    %v2828 = vld [vmem:[%s37 + $0x28] sm:$0xff]
    %v2829 = vld [vmem:[%s37 + $0x30] sm:$0xff]
    %v2830 = vld [vmem:[%s37 + $0x38] sm:$0xff]
    %v2831 = vld [vmem:[%s39] sm:$0x1]
    %v2832 = vld [vmem:[%s41] sm:$0xff]
    %v2833 = vld [vmem:[%s41 + $0x8] sm:$0xff]
    %v2834 = vld [vmem:[%s41 + $0x10] sm:$0xff]
    %v2835 = vld [vmem:[%s41 + $0x18] sm:$0xff]
    %v2836 = vld [vmem:[%s41 + $0x20] sm:$0xff]
    %v2837 = vld [vmem:[%s41 + $0x28] sm:$0xff]
    %v2838 = vld [vmem:[%s41 + $0x30] sm:$0xff]
    %v2839 = vld [vmem:[%s41 + $0x38] sm:$0xff]
    %v2840 = vld [vmem:[%s43] sm:$0x1]
    %v2841 = vld [vmem:[%s45] sm:$0x1]
    %v2842 = vld [vmem:[%s47] sm:$0x1]
    %v2844 = vlaneseq
    %v2845 = vshrl.u32 %v2844, 7
    %v2846 = vsub.s32 0, %v2845
    %v2847 = vrot.slane %v2831, %v2846
    %vm2849 = vcmask 523264
    %v2851 = vsel %vm2849, %v2822, 0
    %2853 = vmatprep.subr.mxu0 0.0
    %2854 = vmatpush1.msra.mxu0 %v2823
    %2855 = vmatprep.subr.mxu0 0.0
    %2856 = vmatpush1.msra.mxu0 %v2824
    %2857 = vmatprep.subr.mxu0 0.0
    %2858 = vmatpush1.msra.mxu0 %v2825
    %2859 = vmatprep.subr.mxu0 0.0
    %2860 = vmatpush1.msra.mxu0 %v2826
    %2861 = vmatprep.subr.mxu0 0.0
    %2862 = vmatpush1.msra.mxu0 %v2827
    %2863 = vmatprep.subr.mxu0 0.0
    %2864 = vmatpush1.msra.mxu0 %v2828
    %2865 = vmatprep.subr.mxu0 0.0
    %2866 = vmatpush1.msra.mxu0 %v2829
    %2867 = vmatprep.subr.mxu0 0.0
    %2868 = vmatpush1.msra.mxu0 %v2830
    %2869 = vmatprep.subr.mxu0 0.0
    %2870 = vmatpush1.msra.mxu0 0.0
    %2871 = vmatprep.subr.mxu0 0.0
    %2872 = vmatpush1.msra.mxu0 0.0
    %2873 = vmatprep.subr.mxu0 0.0
    %2874 = vmatpush1.msra.mxu0 0.0
    %2875 = vmatprep.subr.mxu0 0.0
    %2876 = vmatpush1.msra.mxu0 0.0
    %2877 = vmatprep.subr.mxu0 0.0
    %2878 = vmatpush1.msra.mxu0 0.0
    %2879 = vmatprep.subr.mxu0 0.0
    %2880 = vmatpush1.msra.mxu0 0.0
    %2881 = vmatprep.subr.mxu0 0.0
    %2882 = vmatpush1.msra.mxu0 0.0
    %2883 = vmatprep.subr.mxu0 0.0
    %2884 = vmatpush1.msra.mxu0 0.0
    %2885 = vmatprep.subr.mxu0 0.0
    %2886 = vmatpush1.msra.mxu0 0.0
    %2887 = vmatprep.subr.mxu0 0.0
    %2888 = vmatpush1.msra.mxu0 0.0
    %2889 = vmatprep.subr.mxu0 0.0
    %2890 = vmatpush1.msra.mxu0 0.0
    %2891 = vmatprep.subr.mxu0 0.0
    %2892 = vmatpush1.msra.mxu0 0.0
    %2893 = vmatprep.subr.mxu0 0.0
    %2894 = vmatpush1.msra.mxu0 0.0
    %2895 = vmatprep.subr.mxu0 0.0
    %2896 = vmatpush1.msra.mxu0 0.0
    %2897 = vmatprep.subr.mxu0 0.0
    %2898 = vmatpush1.msra.mxu0 0.0
    %2899 = vmatprep.subr.mxu0 0.0
    %2900 = vmatpush1.msra.mxu0 0.0
    %2901 = vmatprep.subr.mxu0 0.0
    %2902 = vmatpush1.msra.mxu0 0.0
    %2903 = vmatprep.subr.mxu0 0.0
    %2904 = vmatpush1.msra.mxu0 0.0
    %2905 = vmatprep.subr.mxu0 0.0
    %2906 = vmatpush1.msra.mxu0 0.0
    %2907 = vmatprep.subr.mxu0 0.0
    %2908 = vmatpush1.msra.mxu0 0.0
    %2909 = vmatprep.subr.mxu0 0.0
    %2910 = vmatpush1.msra.mxu0 0.0
    %2911 = vmatprep.subr.mxu0 0.0
    %2912 = vmatpush1.msra.mxu0 0.0
    %2913 = vmatprep.subr.mxu0 0.0
    %2914 = vmatpush1.msra.mxu0 0.0
    %2915 = vmatprep.subr.mxu0 0.0
    %2916 = vmatpush1.msra.mxu0 0.0
    %2917 = vmatprep.mubr.f32.mxu0 0.0
    %2918 = vmatmul.mubr.f32.gmra.mrb[0].mxu0 %v2851
    %v2919 = vpop.f32.mrb[0].mxu0
    %v2920 = vadd.f32 %v2847, %v2919
    %v2921 = vpop.f32.mrb[0].mxu0
    %2922 = vdwg.mxu0
    %v2923 = vmul.f32 %v2920, 0.5
    %v2924 = vmul.f32 %v2920, 0.70710677
    %vm2925 = vcmp.ge.f32.partialorder %v2924, 0.0
    %v2926 = vsel %vm2925, 1.0, -1.0
    %v2927 = vand.u32 2147483647, %v2924
    %v2928 = vmul.f32 %v2927, 0.3275911
    %v2929 = vadd.f32 %v2928, 1.0
    %v2930 = vrcp.pop %v2929
    %v2931 = vmul.f32 1.0, %v2930
    %v2932 = vmul.f32 %v2931, 1.0614054
    %v2933 = vadd.f32 %v2932, -1.4531521
    %v2934 = vmul.f32 %v2933, %v2931
    %v2935 = vadd.f32 %v2934, 1.4214138
    %v2936 = vmul.f32 %v2935, %v2931
    %v2937 = vadd.f32 %v2936, -0.28449672
    %v2938 = vmul.f32 %v2937, %v2931
    %v2939 = vadd.f32 %v2938, 0.2548296
    %v2940 = vmul.f32 %v2939, %v2931
    %v2941 = vsub.f32 0.0, %v2927
    %v2942 = vmul.f32 %v2941, %v2927
    %v2943 = vmul.f32 %v2942, 1.442695
    %v2944 = vpow.pop %v2943
    %v2945 = vmul.f32 %v2940, %v2944
    %v2946 = vsub.f32 1.0, %v2945
    %v2947 = vmul.f32 %v2926, %v2946
    %v2948 = vadd.f32 %v2947, 1.0
    %v2949 = vmul.f32 %v2923, %v2948
    %v2951 = vlaneseq
    %v2952 = vshrl.u32 %v2951, 7
    %v2953 = vsub.s32 0, %v2952
    %v2954 = vrot.slane %v2840, %v2953
    %v2957 = vsel %vm2849, %v2949, 0
    %2959 = vmatprep.subr.mxu0 0.0
    %2960 = vmatpush1.msra.mxu0 %v2832
    %2961 = vmatprep.subr.mxu0 0.0
    %2962 = vmatpush1.msra.mxu0 %v2833
    %2963 = vmatprep.subr.mxu0 0.0
    %2964 = vmatpush1.msra.mxu0 %v2834
    %2965 = vmatprep.subr.mxu0 0.0
    %2966 = vmatpush1.msra.mxu0 %v2835
    %2967 = vmatprep.subr.mxu0 0.0
    %2968 = vmatpush1.msra.mxu0 %v2836
    %2969 = vmatprep.subr.mxu0 0.0
    %2970 = vmatpush1.msra.mxu0 %v2837
    %2971 = vmatprep.subr.mxu0 0.0
    %2972 = vmatpush1.msra.mxu0 %v2838
    %2973 = vmatprep.subr.mxu0 0.0
    %2974 = vmatpush1.msra.mxu0 %v2839
    %2975 = vmatprep.subr.mxu0 0.0
    %2976 = vmatpush1.msra.mxu0 0.0
    %2977 = vmatprep.subr.mxu0 0.0
    %2978 = vmatpush1.msra.mxu0 0.0
    %2979 = vmatprep.subr.mxu0 0.0
    %2980 = vmatpush1.msra.mxu0 0.0
    %2981 = vmatprep.subr.mxu0 0.0
    %2982 = vmatpush1.msra.mxu0 0.0
    %2983 = vmatprep.subr.mxu0 0.0
    %2984 = vmatpush1.msra.mxu0 0.0
    %2985 = vmatprep.subr.mxu0 0.0
    %2986 = vmatpush1.msra.mxu0 0.0
    %2987 = vmatprep.subr.mxu0 0.0
    %2988 = vmatpush1.msra.mxu0 0.0
    %2989 = vmatprep.subr.mxu0 0.0
    %2990 = vmatpush1.msra.mxu0 0.0
    %2991 = vmatprep.subr.mxu0 0.0
    %2992 = vmatpush1.msra.mxu0 0.0
    %2993 = vmatprep.subr.mxu0 0.0
    %2994 = vmatpush1.msra.mxu0 0.0
    %2995 = vmatprep.subr.mxu0 0.0
    %2996 = vmatpush1.msra.mxu0 0.0
    %2997 = vmatprep.subr.mxu0 0.0
    %2998 = vmatpush1.msra.mxu0 0.0
    %2999 = vmatprep.subr.mxu0 0.0
    %3000 = vmatpush1.msra.mxu0 0.0
    %3001 = vmatprep.subr.mxu0 0.0
    %3002 = vmatpush1.msra.mxu0 0.0
    %3003 = vmatprep.subr.mxu0 0.0
    %3004 = vmatpush1.msra.mxu0 0.0
    %3005 = vmatprep.subr.mxu0 0.0
    %3006 = vmatpush1.msra.mxu0 0.0
    %3007 = vmatprep.subr.mxu0 0.0
    %3008 = vmatpush1.msra.mxu0 0.0
    %3009 = vmatprep.subr.mxu0 0.0
    %3010 = vmatpush1.msra.mxu0 0.0
    %3011 = vmatprep.subr.mxu0 0.0
    %3012 = vmatpush1.msra.mxu0 0.0
    %3013 = vmatprep.subr.mxu0 0.0
    %3014 = vmatpush1.msra.mxu0 0.0
    %3015 = vmatprep.subr.mxu0 0.0
    %3016 = vmatpush1.msra.mxu0 0.0
    %3017 = vmatprep.subr.mxu0 0.0
    %3018 = vmatpush1.msra.mxu0 0.0
    %3019 = vmatprep.subr.mxu0 0.0
    %3020 = vmatpush1.msra.mxu0 0.0
    %3021 = vmatprep.subr.mxu0 0.0
    %3022 = vmatpush1.msra.mxu0 0.0
    %3023 = vmatprep.mubr.f32.mxu0 0.0
    %3024 = vmatmul.mubr.f32.gmra.mrb[0].mxu0 %v2957
    %v3025 = vpop.f32.mrb[0].mxu0
    %v3026 = vadd.f32 %v2954, %v3025
    %v3027 = vpop.f32.mrb[0].mxu0
    %3028 = vdwg.mxu0
    %v3029 = vadd.f32 %v3026, %v2920
    %vm3030 = vcmask 517120
    %v3031 = vsel %vm3030, %v3029, 0.0
    %3032 = vadd.xlane.f32.xlu0 %v3031
    %v3033 = vpop.xlane.xlu0 %3032
    %v3034 = vrcp.pop 64.0
    %v3035 = vmul.f32 %v3033, %v3034
    %v3036 = vsub.f32 %v3029, %v3035
    %v3037 = vmul.f32 %v3036, %v3036
    %v3038 = vsel %vm3030, %v3037, 0.0
    %3039 = vadd.xlane.f32.xlu0 %v3038
    %v3040 = vpop.xlane.xlu0 %3039
    %v3041 = vmul.f32 %v3040, %v3034
    %v3042 = vadd.f32 %v3041, 1e-05
    %v3043 = vrsqrt.pop %v3042
    %v3044 = vmul.f32 %v3036, %v3043
    %v3046 = vlaneseq
    %v3047 = vshrl.u32 %v3046, 7
    %v3048 = vsub.s32 0, %v3047
    %v3049 = vrot.slane %v2841, %v3048
    %v3051 = vmul.f32 %v3044, %v3049
    %v3053 = vlaneseq
    %v3054 = vshrl.u32 %v3053, 7
    %v3055 = vsub.s32 0, %v3054
    %v3056 = vrot.slane %v2842, %v3055
    %v3058 = vadd.f32 %v3051, %v3056
    %v3059 = vld [vmem:[%s35] sm:$0xff]
    %v3060 = vld [vmem:[%s35 + $0x8] sm:$0xf]
    %v3061 = vld [vmem:[%s49] sm:$0xff]
    %v3062 = vld [vmem:[%s49 + $0x8] sm:$0xff]
    %v3063 = vld [vmem:[%s49 + $0x10] sm:$0xff]
    %v3064 = vld [vmem:[%s49 + $0x18] sm:$0xff]
    %v3065 = vld [vmem:[%s49 + $0x20] sm:$0xff]
    %v3066 = vld [vmem:[%s49 + $0x28] sm:$0xff]
    %v3067 = vld [vmem:[%s49 + $0x30] sm:$0xff]
    %v3068 = vld [vmem:[%s49 + $0x38] sm:$0xff]
    %v3069 = vld [vmem:[%s49 + $0x40] sm:$0xff]
    %v3070 = vld [vmem:[%s49 + $0x48] sm:$0xff]
    %v3071 = vld [vmem:[%s49 + $0x50] sm:$0xff]
    %v3072 = vld [vmem:[%s49 + $0x58] sm:$0xff]
    %v3073 = vld [vmem:[%s49 + $0x60] sm:$0xff]
    %v3074 = vld [vmem:[%s49 + $0x68] sm:$0xff]
    %v3075 = vld [vmem:[%s49 + $0x70] sm:$0xff]
    %v3076 = vld [vmem:[%s49 + $0x78] sm:$0xff]
    %v3077 = vld [vmem:[%s49 + $0x80] sm:$0xff]
    %v3078 = vld [vmem:[%s49 + $0x88] sm:$0xff]
    %v3079 = vld [vmem:[%s49 + $0x90] sm:$0xff]
    %v3080 = vld [vmem:[%s49 + $0x98] sm:$0xff]
    %v3081 = vld [vmem:[%s49 + $0xa0] sm:$0xff]
    %v3082 = vld [vmem:[%s49 + $0xa8] sm:$0xff]
    %v3083 = vld [vmem:[%s49 + $0xb0] sm:$0xff]
    %v3084 = vld [vmem:[%s49 + $0xb8] sm:$0xff]
    %v3085 = vld [vmem:[%s49 + $0xc0] sm:$0xff]
    %v3086 = vld [vmem:[%s49 + $0xc8] sm:$0xff]
    %v3087 = vld [vmem:[%s49 + $0xd0] sm:$0xff]
    %v3088 = vld [vmem:[%s49 + $0xd8] sm:$0xff]
    %v3089 = vld [vmem:[%s49 + $0xe0] sm:$0xff]
    %v3090 = vld [vmem:[%s49 + $0xe8] sm:$0xff]
    %v3091 = vld [vmem:[%s49 + $0xf0] sm:$0xff]
    %v3092 = vld [vmem:[%s49 + $0xf8] sm:$0xff]
    %v3093 = vld [vmem:[%s49 + $0x100] sm:$0xff]
    %v3094 = vld [vmem:[%s49 + $0x108] sm:$0xff]
    %v3095 = vld [vmem:[%s49 + $0x110] sm:$0xff]
    %v3096 = vld [vmem:[%s49 + $0x118] sm:$0xff]
    %v3097 = vld [vmem:[%s49 + $0x120] sm:$0xff]
    %v3098 = vld [vmem:[%s49 + $0x128] sm:$0xff]
    %v3099 = vld [vmem:[%s49 + $0x130] sm:$0xff]
    %v3100 = vld [vmem:[%s49 + $0x138] sm:$0xff]
    %v3101 = vld [vmem:[%s49 + $0x140] sm:$0xff]
    %v3102 = vld [vmem:[%s49 + $0x148] sm:$0xff]
    %v3103 = vld [vmem:[%s49 + $0x150] sm:$0xff]
    %v3104 = vld [vmem:[%s49 + $0x158] sm:$0xff]
    %v3105 = vld [vmem:[%s49 + $0x160] sm:$0xff]
    %v3106 = vld [vmem:[%s49 + $0x168] sm:$0xff]
    %v3107 = vld [vmem:[%s49 + $0x170] sm:$0xff]
    %v3108 = vld [vmem:[%s49 + $0x178] sm:$0xff]
    %v3109 = vld [vmem:[%s49 + $0x180] sm:$0xff]
    %v3110 = vld [vmem:[%s49 + $0x188] sm:$0xff]
    %v3111 = vld [vmem:[%s49 + $0x190] sm:$0xff]
    %v3112 = vld [vmem:[%s49 + $0x198] sm:$0xff]
    %v3113 = vld [vmem:[%s49 + $0x1a0] sm:$0xff]
    %v3114 = vld [vmem:[%s49 + $0x1a8] sm:$0xff]
    %v3115 = vld [vmem:[%s49 + $0x1b0] sm:$0xff]
    %v3116 = vld [vmem:[%s49 + $0x1b8] sm:$0xff]
    %v3117 = vld [vmem:[%s49 + $0x1c0] sm:$0xff]
    %v3118 = vld [vmem:[%s49 + $0x1c8] sm:$0xff]
    %v3119 = vld [vmem:[%s49 + $0x1d0] sm:$0xff]
    %v3120 = vld [vmem:[%s49 + $0x1d8] sm:$0xff]
    %v3121 = vld [vmem:[%s49 + $0x1e0] sm:$0xff]
    %v3122 = vld [vmem:[%s49 + $0x1e8] sm:$0xff]
    %v3123 = vld [vmem:[%s49 + $0x1f0] sm:$0xff]
    %v3124 = vld [vmem:[%s49 + $0x1f8] sm:$0xff]
    %v3125 = vld [vmem:[%s49 + $0x200] sm:$0xff]
    %v3126 = vld [vmem:[%s49 + $0x208] sm:$0xff]
    %v3127 = vld [vmem:[%s49 + $0x210] sm:$0xff]
    %v3128 = vld [vmem:[%s49 + $0x218] sm:$0xff]
    %v3129 = vld [vmem:[%s49 + $0x220] sm:$0xff]
    %v3130 = vld [vmem:[%s49 + $0x228] sm:$0xff]
    %v3131 = vld [vmem:[%s49 + $0x230] sm:$0xff]
    %v3132 = vld [vmem:[%s49 + $0x238] sm:$0xff]
    %v3133 = vld [vmem:[%s49 + $0x240] sm:$0xff]
    %v3134 = vld [vmem:[%s49 + $0x248] sm:$0xff]
    %v3135 = vld [vmem:[%s49 + $0x250] sm:$0xff]
    %v3136 = vld [vmem:[%s49 + $0x258] sm:$0xff]
    %v3137 = vld [vmem:[%s49 + $0x260] sm:$0xff]
    %v3138 = vld [vmem:[%s49 + $0x268] sm:$0xff]
    %v3139 = vld [vmem:[%s49 + $0x270] sm:$0xff]
    %v3140 = vld [vmem:[%s49 + $0x278] sm:$0xff]
    %v3141 = vld [vmem:[%s49 + $0x280] sm:$0xff]
    %v3142 = vld [vmem:[%s49 + $0x288] sm:$0xff]
    %v3143 = vld [vmem:[%s49 + $0x290] sm:$0xff]
    %v3144 = vld [vmem:[%s49 + $0x298] sm:$0xff]
    %v3145 = vld [vmem:[%s49 + $0x2a0] sm:$0xff]
    %v3146 = vld [vmem:[%s49 + $0x2a8] sm:$0xff]
    %v3147 = vld [vmem:[%s49 + $0x2b0] sm:$0xff]
    %v3148 = vld [vmem:[%s49 + $0x2b8] sm:$0xff]
    %v3149 = vld [vmem:[%s49 + $0x2c0] sm:$0xff]
    %v3150 = vld [vmem:[%s49 + $0x2c8] sm:$0xff]
    %v3151 = vld [vmem:[%s49 + $0x2d0] sm:$0xff]
    %v3152 = vld [vmem:[%s49 + $0x2d8] sm:$0xff]
    %v3153 = vld [vmem:[%s49 + $0x2e0] sm:$0xff]
    %v3154 = vld [vmem:[%s49 + $0x2e8] sm:$0xff]
    %v3155 = vld [vmem:[%s49 + $0x2f0] sm:$0xff]
    %v3156 = vld [vmem:[%s49 + $0x2f8] sm:$0xff]
    %v3157 = vld [vmem:[%s51] sm:$0x1]
    %v3158 = vld [vmem:[%s53] sm:$0xff]
    %v3159 = vld [vmem:[%s53 + $0x8] sm:$0xff]
    %v3160 = vld [vmem:[%s53 + $0x10] sm:$0xff]
    %v3161 = vld [vmem:[%s53 + $0x18] sm:$0xff]
    %v3162 = vld [vmem:[%s53 + $0x20] sm:$0xff]
    %v3163 = vld [vmem:[%s53 + $0x28] sm:$0xff]
    %v3164 = vld [vmem:[%s53 + $0x30] sm:$0xff]
    %v3165 = vld [vmem:[%s53 + $0x38] sm:$0xff]
    %v3166 = vld [vmem:[%s55] sm:$0x1]
    %v3167 = vld [vmem:[%s57] sm:$0x1]
    %v3168 = vld [vmem:[%s59] sm:$0x1]
    %v3170 = vlaneseq
    %v3171 = vshrl.u32 %v3170, 7
    %v3172 = vsub.s32 0, %v3171
    %v3173 = vrot.slane %v3157, %v3172
    %v3177 = vcombine.high %v3059, %v3059
    %v3179 = vunpack.c.l.s4 1983009808
    %v3180 = vunpack.c.0.s8 %v3179
    %v3181 = vlaneseq
    %v3182 = vshrl.u32 %v3181, 7
    %v3183 = vsub.s32 %v3180, %v3182
    %v3184 = vrot.slane %v3059, %v3183
    %v3186 = vunpack.c.l.s4 1983009808
    %v3187 = vunpack.c.0.s8 %v3186
    %v3188 = vlaneseq
    %v3189 = vshrl.u32 %v3188, 7
    %v3190 = vsub.s32 %v3187, %v3189
    %v3191 = vrot.slane %v3177, %v3190
    %v3192 = vcombine.high %v3184, %v3184
    %v3193 = vcombine.high %v3191, %v3191
    %v3195 = vunpack.c.l.s4 1983009808
    %v3196 = vunpack.c.0.s8 %v3195
    %v3197 = vlaneseq
    %v3198 = vshrl.u32 %v3197, 7
    %v3199 = vsub.s32 %v3196, %v3198
    %v3200 = vrot.slane %v3060, %v3199
    %v3201 = vcombine.high %v3200, %v3200
    %3208 = vmatprep.subr.mxu0 0.0
    %3209 = vmatpush1.msra.mxu0 %v3061
    %3210 = vmatprep.subr.mxu0 0.0
    %3211 = vmatpush1.msra.mxu0 %v3062
    %3212 = vmatprep.subr.mxu0 0.0
    %3213 = vmatpush1.msra.mxu0 %v3063
    %3214 = vmatprep.subr.mxu0 0.0
    %3215 = vmatpush1.msra.mxu0 %v3064
    %3216 = vmatprep.subr.mxu0 0.0
    %3217 = vmatpush1.msra.mxu0 %v3065
    %3218 = vmatprep.subr.mxu0 0.0
    %3219 = vmatpush1.msra.mxu0 %v3066
    %3220 = vmatprep.subr.mxu0 0.0
    %3221 = vmatpush1.msra.mxu0 %v3067
    %3222 = vmatprep.subr.mxu0 0.0
    %3223 = vmatpush1.msra.mxu0 %v3068
    %3224 = vmatprep.subr.mxu0 0.0
    %3225 = vmatpush1.msra.mxu0 %v3069
    %3226 = vmatprep.subr.mxu0 0.0
    %3227 = vmatpush1.msra.mxu0 %v3070
    %3228 = vmatprep.subr.mxu0 0.0
    %3229 = vmatpush1.msra.mxu0 %v3071
    %3230 = vmatprep.subr.mxu0 0.0
    %3231 = vmatpush1.msra.mxu0 %v3072
    %3232 = vmatprep.subr.mxu0 0.0
    %3233 = vmatpush1.msra.mxu0 %v3073
    %3234 = vmatprep.subr.mxu0 0.0
    %3235 = vmatpush1.msra.mxu0 %v3074
    %3236 = vmatprep.subr.mxu0 0.0
    %3237 = vmatpush1.msra.mxu0 %v3075
    %3238 = vmatprep.subr.mxu0 0.0
    %3239 = vmatpush1.msra.mxu0 %v3076
    %3240 = vmatprep.subr.mxu0 0.0
    %3241 = vmatpush1.msra.mxu0 %v3077
    %3242 = vmatprep.subr.mxu0 0.0
    %3243 = vmatpush1.msra.mxu0 %v3078
    %3244 = vmatprep.subr.mxu0 0.0
    %3245 = vmatpush1.msra.mxu0 %v3079
    %3246 = vmatprep.subr.mxu0 0.0
    %3247 = vmatpush1.msra.mxu0 %v3080
    %3248 = vmatprep.subr.mxu0 0.0
    %3249 = vmatpush1.msra.mxu0 %v3081
    %3250 = vmatprep.subr.mxu0 0.0
    %3251 = vmatpush1.msra.mxu0 %v3082
    %3252 = vmatprep.subr.mxu0 0.0
    %3253 = vmatpush1.msra.mxu0 %v3083
    %3254 = vmatprep.subr.mxu0 0.0
    %3255 = vmatpush1.msra.mxu0 %v3084
    %3256 = vmatprep.subr.mxu0 0.0
    %3257 = vmatpush1.msra.mxu0 %v3085
    %3258 = vmatprep.subr.mxu0 0.0
    %3259 = vmatpush1.msra.mxu0 %v3086
    %3260 = vmatprep.subr.mxu0 0.0
    %3261 = vmatpush1.msra.mxu0 %v3087
    %3262 = vmatprep.subr.mxu0 0.0
    %3263 = vmatpush1.msra.mxu0 %v3088
    %3264 = vmatprep.subr.mxu0 0.0
    %3265 = vmatpush1.msra.mxu0 %v3089
    %3266 = vmatprep.subr.mxu0 0.0
    %3267 = vmatpush1.msra.mxu0 %v3090
    %3268 = vmatprep.subr.mxu0 0.0
    %3269 = vmatpush1.msra.mxu0 %v3091
    %3270 = vmatprep.subr.mxu0 0.0
    %3271 = vmatpush1.msra.mxu0 %v3092
    %3272 = vmatprep.mubr.f32.mxu0 %v3192
    %3273 = vmatmul.mubr.f32.gmra.mrb[0].mxu0 %v3184
    %v3274 = vpop.f32.mrb[0].mxu0
    %v3275 = vadd.f32 %v3173, %v3274
    %v3276 = vpop.f32.mrb[0].mxu0
    %3277 = vdwg.mxu0
    %3278 = vmatprep.subr.mxu0 0.0
    %3279 = vmatpush1.msra.mxu0 %v3093
    %3280 = vmatprep.subr.mxu0 0.0
    %3281 = vmatpush1.msra.mxu0 %v3094
    %3282 = vmatprep.subr.mxu0 0.0
    %3283 = vmatpush1.msra.mxu0 %v3095
    %3284 = vmatprep.subr.mxu0 0.0
    %3285 = vmatpush1.msra.mxu0 %v3096
    %3286 = vmatprep.subr.mxu0 0.0
    %3287 = vmatpush1.msra.mxu0 %v3097
    %3288 = vmatprep.subr.mxu0 0.0
    %3289 = vmatpush1.msra.mxu0 %v3098
    %3290 = vmatprep.subr.mxu0 0.0
    %3291 = vmatpush1.msra.mxu0 %v3099
    %3292 = vmatprep.subr.mxu0 0.0
    %3293 = vmatpush1.msra.mxu0 %v3100
    %3294 = vmatprep.subr.mxu0 0.0
    %3295 = vmatpush1.msra.mxu0 %v3101
    %3296 = vmatprep.subr.mxu0 0.0
    %3297 = vmatpush1.msra.mxu0 %v3102
    %3298 = vmatprep.subr.mxu0 0.0
    %3299 = vmatpush1.msra.mxu0 %v3103
    %3300 = vmatprep.subr.mxu0 0.0
    %3301 = vmatpush1.msra.mxu0 %v3104
    %3302 = vmatprep.subr.mxu0 0.0
    %3303 = vmatpush1.msra.mxu0 %v3105
    %3304 = vmatprep.subr.mxu0 0.0
    %3305 = vmatpush1.msra.mxu0 %v3106
    %3306 = vmatprep.subr.mxu0 0.0
    %3307 = vmatpush1.msra.mxu0 %v3107
    %3308 = vmatprep.subr.mxu0 0.0
    %3309 = vmatpush1.msra.mxu0 %v3108
    %3310 = vmatprep.subr.mxu0 0.0
    %3311 = vmatpush1.msra.mxu0 %v3109
    %3312 = vmatprep.subr.mxu0 0.0
    %3313 = vmatpush1.msra.mxu0 %v3110
    %3314 = vmatprep.subr.mxu0 0.0
    %3315 = vmatpush1.msra.mxu0 %v3111
    %3316 = vmatprep.subr.mxu0 0.0
    %3317 = vmatpush1.msra.mxu0 %v3112
    %3318 = vmatprep.subr.mxu0 0.0
    %3319 = vmatpush1.msra.mxu0 %v3113
    %3320 = vmatprep.subr.mxu0 0.0
    %3321 = vmatpush1.msra.mxu0 %v3114
    %3322 = vmatprep.subr.mxu0 0.0
    %3323 = vmatpush1.msra.mxu0 %v3115
    %3324 = vmatprep.subr.mxu0 0.0
    %3325 = vmatpush1.msra.mxu0 %v3116
    %3326 = vmatprep.subr.mxu0 0.0
    %3327 = vmatpush1.msra.mxu0 %v3117
    %3328 = vmatprep.subr.mxu0 0.0
    %3329 = vmatpush1.msra.mxu0 %v3118
    %3330 = vmatprep.subr.mxu0 0.0
    %3331 = vmatpush1.msra.mxu0 %v3119
    %3332 = vmatprep.subr.mxu0 0.0
    %3333 = vmatpush1.msra.mxu0 %v3120
    %3334 = vmatprep.subr.mxu0 0.0
    %3335 = vmatpush1.msra.mxu0 %v3121
    %3336 = vmatprep.subr.mxu0 0.0
    %3337 = vmatpush1.msra.mxu0 %v3122
    %3338 = vmatprep.subr.mxu0 0.0
    %3339 = vmatpush1.msra.mxu0 %v3123
    %3340 = vmatprep.subr.mxu0 0.0
    %3341 = vmatpush1.msra.mxu0 %v3124
    %3342 = vmatprep.mubr.f32.mxu0 %v3193
    %3343 = vmatmul.mubr.f32.gmra.mrb[0].mxu0 %v3191
    %v3344 = vpop.f32.mrb[0].mxu0
    %v3345 = vadd.f32 %v3275, %v3344
    %v3346 = vpop.f32.mrb[0].mxu0
    %3347 = vdwg.mxu0
    %3348 = vmatprep.subr.mxu0 0.0
    %3349 = vmatpush1.msra.mxu0 %v3125
    %3350 = vmatprep.subr.mxu0 0.0
    %3351 = vmatpush1.msra.mxu0 %v3126
    %3352 = vmatprep.subr.mxu0 0.0
    %3353 = vmatpush1.msra.mxu0 %v3127
    %3354 = vmatprep.subr.mxu0 0.0
    %3355 = vmatpush1.msra.mxu0 %v3128
    %3356 = vmatprep.subr.mxu0 0.0
    %3357 = vmatpush1.msra.mxu0 %v3129
    %3358 = vmatprep.subr.mxu0 0.0
    %3359 = vmatpush1.msra.mxu0 %v3130
    %3360 = vmatprep.subr.mxu0 0.0
    %3361 = vmatpush1.msra.mxu0 %v3131
    %3362 = vmatprep.subr.mxu0 0.0
    %3363 = vmatpush1.msra.mxu0 %v3132
    %3364 = vmatprep.subr.mxu0 0.0
    %3365 = vmatpush1.msra.mxu0 %v3133
    %3366 = vmatprep.subr.mxu0 0.0
    %3367 = vmatpush1.msra.mxu0 %v3134
    %3368 = vmatprep.subr.mxu0 0.0
    %3369 = vmatpush1.msra.mxu0 %v3135
    %3370 = vmatprep.subr.mxu0 0.0
    %3371 = vmatpush1.msra.mxu0 %v3136
    %3372 = vmatprep.subr.mxu0 0.0
    %3373 = vmatpush1.msra.mxu0 %v3137
    %3374 = vmatprep.subr.mxu0 0.0
    %3375 = vmatpush1.msra.mxu0 %v3138
    %3376 = vmatprep.subr.mxu0 0.0
    %3377 = vmatpush1.msra.mxu0 %v3139
    %3378 = vmatprep.subr.mxu0 0.0
    %3379 = vmatpush1.msra.mxu0 %v3140
    %3380 = vmatprep.subr.mxu0 0.0
    %3381 = vmatpush1.msra.mxu0 %v3141
    %3382 = vmatprep.subr.mxu0 0.0
    %3383 = vmatpush1.msra.mxu0 %v3142
    %3384 = vmatprep.subr.mxu0 0.0
    %3385 = vmatpush1.msra.mxu0 %v3143
    %3386 = vmatprep.subr.mxu0 0.0
    %3387 = vmatpush1.msra.mxu0 %v3144
    %3388 = vmatprep.subr.mxu0 0.0
    %3389 = vmatpush1.msra.mxu0 %v3145
    %3390 = vmatprep.subr.mxu0 0.0
    %3391 = vmatpush1.msra.mxu0 %v3146
    %3392 = vmatprep.subr.mxu0 0.0
    %3393 = vmatpush1.msra.mxu0 %v3147
    %3394 = vmatprep.subr.mxu0 0.0
    %3395 = vmatpush1.msra.mxu0 %v3148
    %3396 = vmatprep.subr.mxu0 0.0
    %3397 = vmatpush1.msra.mxu0 %v3149
    %3398 = vmatprep.subr.mxu0 0.0
    %3399 = vmatpush1.msra.mxu0 %v3150
    %3400 = vmatprep.subr.mxu0 0.0
    %3401 = vmatpush1.msra.mxu0 %v3151
    %3402 = vmatprep.subr.mxu0 0.0
    %3403 = vmatpush1.msra.mxu0 %v3152
    %3404 = vmatprep.subr.mxu0 0.0
    %3405 = vmatpush1.msra.mxu0 %v3153
    %3406 = vmatprep.subr.mxu0 0.0
    %3407 = vmatpush1.msra.mxu0 %v3154
    %3408 = vmatprep.subr.mxu0 0.0
    %3409 = vmatpush1.msra.mxu0 %v3155
    %3410 = vmatprep.subr.mxu0 0.0
    %3411 = vmatpush1.msra.mxu0 %v3156
    %3412 = vmatprep.mubr.f32.mxu0 %v3201
    %3413 = vmatmul.mubr.f32.gmra.mrb[0].mxu0 %v3200
    %v3414 = vpop.f32.mrb[0].mxu0
    %v3415 = vadd.f32 %v3345, %v3414
    %v3416 = vpop.f32.mrb[0].mxu0
    %3417 = vdwg.mxu0
    %v3418 = vmul.f32 %v3415, 0.5
    %v3419 = vmul.f32 %v3415, 0.70710677
    %vm3420 = vcmp.ge.f32.partialorder %v3419, 0.0
    %v3421 = vsel %vm3420, 1.0, -1.0
    %v3422 = vand.u32 2147483647, %v3419
    %v3423 = vmul.f32 %v3422, 0.3275911
    %v3424 = vadd.f32 %v3423, 1.0
    %v3425 = vrcp.pop %v3424
    %v3426 = vmul.f32 1.0, %v3425
    %v3427 = vmul.f32 %v3426, 1.0614054
    %v3428 = vadd.f32 %v3427, -1.4531521
    %v3429 = vmul.f32 %v3428, %v3426
    %v3430 = vadd.f32 %v3429, 1.4214138
    %v3431 = vmul.f32 %v3430, %v3426
    %v3432 = vadd.f32 %v3431, -0.28449672
    %v3433 = vmul.f32 %v3432, %v3426
    %v3434 = vadd.f32 %v3433, 0.2548296
    %v3435 = vmul.f32 %v3434, %v3426
    %v3436 = vsub.f32 0.0, %v3422
    %v3437 = vmul.f32 %v3436, %v3422
    %v3438 = vmul.f32 %v3437, 1.442695
    %v3439 = vpow.pop %v3438
    %v3440 = vmul.f32 %v3435, %v3439
    %v3441 = vsub.f32 1.0, %v3440
    %v3442 = vmul.f32 %v3421, %v3441
    %v3443 = vadd.f32 %v3442, 1.0
    %v3444 = vmul.f32 %v3418, %v3443
    %v3446 = vlaneseq
    %v3447 = vshrl.u32 %v3446, 7
    %v3448 = vsub.s32 0, %v3447
    %v3449 = vrot.slane %v3166, %v3448
    %v3452 = vsel %vm2849, %v3444, 0
    %3454 = vmatprep.subr.mxu0 0.0
    %3455 = vmatpush1.msra.mxu0 %v3158
    %3456 = vmatprep.subr.mxu0 0.0
    %3457 = vmatpush1.msra.mxu0 %v3159
    %3458 = vmatprep.subr.mxu0 0.0
    %3459 = vmatpush1.msra.mxu0 %v3160
    %3460 = vmatprep.subr.mxu0 0.0
    %3461 = vmatpush1.msra.mxu0 %v3161
    %3462 = vmatprep.subr.mxu0 0.0
    %3463 = vmatpush1.msra.mxu0 %v3162
    %3464 = vmatprep.subr.mxu0 0.0
    %3465 = vmatpush1.msra.mxu0 %v3163
    %3466 = vmatprep.subr.mxu0 0.0
    %3467 = vmatpush1.msra.mxu0 %v3164
    %3468 = vmatprep.subr.mxu0 0.0
    %3469 = vmatpush1.msra.mxu0 %v3165
    %3470 = vmatprep.subr.mxu0 0.0
    %3471 = vmatpush1.msra.mxu0 0.0
    %3472 = vmatprep.subr.mxu0 0.0
    %3473 = vmatpush1.msra.mxu0 0.0
    %3474 = vmatprep.subr.mxu0 0.0
    %3475 = vmatpush1.msra.mxu0 0.0
    %3476 = vmatprep.subr.mxu0 0.0
    %3477 = vmatpush1.msra.mxu0 0.0
    %3478 = vmatprep.subr.mxu0 0.0
    %3479 = vmatpush1.msra.mxu0 0.0
    %3480 = vmatprep.subr.mxu0 0.0
    %3481 = vmatpush1.msra.mxu0 0.0
    %3482 = vmatprep.subr.mxu0 0.0
    %3483 = vmatpush1.msra.mxu0 0.0
    %3484 = vmatprep.subr.mxu0 0.0
    %3485 = vmatpush1.msra.mxu0 0.0
    %3486 = vmatprep.subr.mxu0 0.0
    %3487 = vmatpush1.msra.mxu0 0.0
    %3488 = vmatprep.subr.mxu0 0.0
    %3489 = vmatpush1.msra.mxu0 0.0
    %3490 = vmatprep.subr.mxu0 0.0
    %3491 = vmatpush1.msra.mxu0 0.0
    %3492 = vmatprep.subr.mxu0 0.0
    %3493 = vmatpush1.msra.mxu0 0.0
    %3494 = vmatprep.subr.mxu0 0.0
    %3495 = vmatpush1.msra.mxu0 0.0
    %3496 = vmatprep.subr.mxu0 0.0
    %3497 = vmatpush1.msra.mxu0 0.0
    %3498 = vmatprep.subr.mxu0 0.0
    %3499 = vmatpush1.msra.mxu0 0.0
    %3500 = vmatprep.subr.mxu0 0.0
    %3501 = vmatpush1.msra.mxu0 0.0
    %3502 = vmatprep.subr.mxu0 0.0
    %3503 = vmatpush1.msra.mxu0 0.0
    %3504 = vmatprep.subr.mxu0 0.0
    %3505 = vmatpush1.msra.mxu0 0.0
    %3506 = vmatprep.subr.mxu0 0.0
    %3507 = vmatpush1.msra.mxu0 0.0
    %3508 = vmatprep.subr.mxu0 0.0
    %3509 = vmatpush1.msra.mxu0 0.0
    %3510 = vmatprep.subr.mxu0 0.0
    %3511 = vmatpush1.msra.mxu0 0.0
    %3512 = vmatprep.subr.mxu0 0.0
    %3513 = vmatpush1.msra.mxu0 0.0
    %3514 = vmatprep.subr.mxu0 0.0
    %3515 = vmatpush1.msra.mxu0 0.0
    %3516 = vmatprep.subr.mxu0 0.0
    %3517 = vmatpush1.msra.mxu0 0.0
    %3518 = vmatprep.mubr.f32.mxu0 0.0
    %3519 = vmatmul.mubr.f32.gmra.mrb[0].mxu0 %v3452
    %v3520 = vpop.f32.mrb[0].mxu0
    %v3521 = vadd.f32 %v3449, %v3520
    %v3522 = vpop.f32.mrb[0].mxu0
    %3523 = vdwg.mxu0
    %v3524 = vadd.f32 %v3521, %v3415
    %v3525 = vsel %vm3030, %v3524, 0.0
    %3526 = vadd.xlane.f32.xlu0 %v3525
    %v3527 = vpop.xlane.xlu0 %3526
    %v3528 = vmul.f32 %v3527, %v3034
    %v3529 = vsub.f32 %v3524, %v3528
    %v3530 = vmul.f32 %v3529, %v3529
    %v3531 = vsel %vm3030, %v3530, 0.0
    %3532 = vadd.xlane.f32.xlu0 %v3531
    %v3533 = vpop.xlane.xlu0 %3532
    %v3534 = vmul.f32 %v3533, %v3034
    %v3535 = vadd.f32 %v3534, 1e-05
    %v3536 = vrsqrt.pop %v3535
    %v3537 = vmul.f32 %v3529, %v3536
    %v3539 = vlaneseq
    %v3540 = vshrl.u32 %v3539, 7
    %v3541 = vsub.s32 0, %v3540
    %v3542 = vrot.slane %v3167, %v3541
    %v3544 = vmul.f32 %v3537, %v3542
    %v3546 = vlaneseq
    %v3547 = vshrl.u32 %v3546, 7
    %v3548 = vsub.s32 0, %v3547
    %v3549 = vrot.slane %v3168, %v3548
    %v3551 = vadd.f32 %v3544, %v3549
    %v3553 = vsel %vm2849, %v3058, 0
    %v3556 = vsel %vm2849, %v3551, 0
    %3558 = vmatprep.subr.mxu0 0.0
    %3559 = vmatpush1.xpose.msra.mxu0 %v3556
    %3560 = vmatprep.subr.mxu0 0.0
    %3561 = vmatpush1.xpose.msra.mxu0 0.0
    %3562 = vmatprep.subr.mxu0 0.0
    %3563 = vmatpush1.xpose.msra.mxu0 0.0
    %3564 = vmatprep.subr.mxu0 0.0
    %3565 = vmatpush1.xpose.msra.mxu0 0.0
    %3566 = vmatprep.subr.mxu0 0.0
    %3567 = vmatpush1.xpose.msra.mxu0 0.0
    %3568 = vmatprep.subr.mxu0 0.0
    %3569 = vmatpush1.xpose.msra.mxu0 0.0
    %3570 = vmatprep.subr.mxu0 0.0
    %3571 = vmatpush1.xpose.msra.mxu0 0.0
    %3572 = vmatprep.subr.mxu0 0.0
    %3573 = vmatpush1.xpose.msra.mxu0 0.0
    %3574 = vmatprep.subr.mxu0 0.0
    %3575 = vmatpush1.xpose.msra.mxu0 0.0
    %3576 = vmatprep.subr.mxu0 0.0
    %3577 = vmatpush1.xpose.msra.mxu0 0.0
    %3578 = vmatprep.subr.mxu0 0.0
    %3579 = vmatpush1.xpose.msra.mxu0 0.0
    %3580 = vmatprep.subr.mxu0 0.0
    %3581 = vmatpush1.xpose.msra.mxu0 0.0
    %3582 = vmatprep.subr.mxu0 0.0
    %3583 = vmatpush1.xpose.msra.mxu0 0.0
    %3584 = vmatprep.subr.mxu0 0.0
    %3585 = vmatpush1.xpose.msra.mxu0 0.0
    %3586 = vmatprep.subr.mxu0 0.0
    %3587 = vmatpush1.xpose.msra.mxu0 0.0
    %3588 = vmatprep.subr.mxu0 0.0
    %3589 = vmatpush1.xpose.msra.mxu0 0.0
    %3590 = vmatprep.subr.mxu0 0.0
    %3591 = vmatpush1.xpose.msra.mxu0 0.0
    %3592 = vmatprep.subr.mxu0 0.0
    %3593 = vmatpush1.xpose.msra.mxu0 0.0
    %3594 = vmatprep.subr.mxu0 0.0
    %3595 = vmatpush1.xpose.msra.mxu0 0.0
    %3596 = vmatprep.subr.mxu0 0.0
    %3597 = vmatpush1.xpose.msra.mxu0 0.0
    %3598 = vmatprep.subr.mxu0 0.0
    %3599 = vmatpush1.xpose.msra.mxu0 0.0
    %3600 = vmatprep.subr.mxu0 0.0
    %3601 = vmatpush1.xpose.msra.mxu0 0.0
    %3602 = vmatprep.subr.mxu0 0.0
    %3603 = vmatpush1.xpose.msra.mxu0 0.0
    %3604 = vmatprep.subr.mxu0 0.0
    %3605 = vmatpush1.xpose.msra.mxu0 0.0
    %3606 = vmatprep.subr.mxu0 0.0
    %3607 = vmatpush1.xpose.msra.mxu0 0.0
    %3608 = vmatprep.subr.mxu0 0.0
    %3609 = vmatpush1.xpose.msra.mxu0 0.0
    %3610 = vmatprep.subr.mxu0 0.0
    %3611 = vmatpush1.xpose.msra.mxu0 0.0
    %3612 = vmatprep.subr.mxu0 0.0
    %3613 = vmatpush1.xpose.msra.mxu0 0.0
    %3614 = vmatprep.subr.mxu0 0.0
    %3615 = vmatpush1.xpose.msra.mxu0 0.0
    %3616 = vmatprep.subr.mxu0 0.0
    %3617 = vmatpush1.xpose.msra.mxu0 0.0
    %3618 = vmatprep.subr.mxu0 0.0
    %3619 = vmatpush1.xpose.msra.mxu0 0.0
    %3620 = vmatprep.subr.mxu0 0.0
    %3621 = vmatpush1.xpose.msra.mxu0 0.0
    %3622 = vmatprep.mubr.f32.mxu0 0.0
    %3623 = vmatmul.mubr.f32.gmra.mrb[0].mxu0 %v3553
    %v3624 = vpop.f32.mrb[0].mxu0
    %v3625 = vadd.f32 0.0, %v3624
    %v3626 = vpop.f32.mrb[0].mxu0
    %3627 = vdwg.mxu0
    %3628 = vmatprep.subr.mxu0 0.0
    %3629 = vmatpush1.xpose.msra.mxu0 %v3556
    %3630 = vmatprep.subr.mxu0 0.0
    %3631 = vmatpush1.xpose.msra.mxu0 0.0
    %3632 = vmatprep.subr.mxu0 0.0
    %3633 = vmatpush1.xpose.msra.mxu0 0.0
    %3634 = vmatprep.subr.mxu0 0.0
    %3635 = vmatpush1.xpose.msra.mxu0 0.0
    %3636 = vmatprep.subr.mxu0 0.0
    %3637 = vmatpush1.xpose.msra.mxu0 0.0
    %3638 = vmatprep.subr.mxu0 0.0
    %3639 = vmatpush1.xpose.msra.mxu0 0.0
    %3640 = vmatprep.subr.mxu0 0.0
    %3641 = vmatpush1.xpose.msra.mxu0 0.0
    %3642 = vmatprep.subr.mxu0 0.0
    %3643 = vmatpush1.xpose.msra.mxu0 0.0
    %3644 = vmatprep.subr.mxu0 0.0
    %3645 = vmatpush1.xpose.msra.mxu0 0.0
    %3646 = vmatprep.subr.mxu0 0.0
    %3647 = vmatpush1.xpose.msra.mxu0 0.0
    %3648 = vmatprep.subr.mxu0 0.0
    %3649 = vmatpush1.xpose.msra.mxu0 0.0
    %3650 = vmatprep.subr.mxu0 0.0
    %3651 = vmatpush1.xpose.msra.mxu0 0.0
    %3652 = vmatprep.subr.mxu0 0.0
    %3653 = vmatpush1.xpose.msra.mxu0 0.0
    %3654 = vmatprep.subr.mxu0 0.0
    %3655 = vmatpush1.xpose.msra.mxu0 0.0
    %3656 = vmatprep.subr.mxu0 0.0
    %3657 = vmatpush1.xpose.msra.mxu0 0.0
    %3658 = vmatprep.subr.mxu0 0.0
    %3659 = vmatpush1.xpose.msra.mxu0 0.0
    %3660 = vmatprep.subr.mxu0 0.0
    %3661 = vmatpush1.xpose.msra.mxu0 0.0
    %3662 = vmatprep.subr.mxu0 0.0
    %3663 = vmatpush1.xpose.msra.mxu0 0.0
    %3664 = vmatprep.subr.mxu0 0.0
    %3665 = vmatpush1.xpose.msra.mxu0 0.0
    %3666 = vmatprep.subr.mxu0 0.0
    %3667 = vmatpush1.xpose.msra.mxu0 0.0
    %3668 = vmatprep.subr.mxu0 0.0
    %3669 = vmatpush1.xpose.msra.mxu0 0.0
    %3670 = vmatprep.subr.mxu0 0.0
    %3671 = vmatpush1.xpose.msra.mxu0 0.0
    %3672 = vmatprep.subr.mxu0 0.0
    %3673 = vmatpush1.xpose.msra.mxu0 0.0
    %3674 = vmatprep.subr.mxu0 0.0
    %3675 = vmatpush1.xpose.msra.mxu0 0.0
    %3676 = vmatprep.subr.mxu0 0.0
    %3677 = vmatpush1.xpose.msra.mxu0 0.0
    %3678 = vmatprep.subr.mxu0 0.0
    %3679 = vmatpush1.xpose.msra.mxu0 0.0
    %3680 = vmatprep.subr.mxu0 0.0
    %3681 = vmatpush1.xpose.msra.mxu0 0.0
    %3682 = vmatprep.subr.mxu0 0.0
    %3683 = vmatpush1.xpose.msra.mxu0 0.0
    %3684 = vmatprep.subr.mxu0 0.0
    %3685 = vmatpush1.xpose.msra.mxu0 0.0
    %3686 = vmatprep.subr.mxu0 0.0
    %3687 = vmatpush1.xpose.msra.mxu0 0.0
    %3688 = vmatprep.subr.mxu0 0.0
    %3689 = vmatpush1.xpose.msra.mxu0 0.0
    %3690 = vmatprep.subr.mxu0 0.0
    %3691 = vmatpush1.xpose.msra.mxu0 0.0
    %3692 = vmatprep.mubr.f32.mxu0 0.0
    %3693 = vmatmul.mubr.f32.gmra.mrb[0].mxu0 %v3556
    %v3694 = vpop.f32.mrb[0].mxu0
    %v3695 = vadd.f32 0.0, %v3694
    %v3696 = vpop.f32.mrb[0].mxu0
    %3697 = vdwg.mxu0
    %3698 = vmatprep.subr.mxu0 0.0
    %3699 = vmatpush1.xpose.msra.mxu0 %v3553
    %3700 = vmatprep.subr.mxu0 0.0
    %3701 = vmatpush1.xpose.msra.mxu0 0.0
    %3702 = vmatprep.subr.mxu0 0.0
    %3703 = vmatpush1.xpose.msra.mxu0 0.0
    %3704 = vmatprep.subr.mxu0 0.0
    %3705 = vmatpush1.xpose.msra.mxu0 0.0
    %3706 = vmatprep.subr.mxu0 0.0
    %3707 = vmatpush1.xpose.msra.mxu0 0.0
    %3708 = vmatprep.subr.mxu0 0.0
    %3709 = vmatpush1.xpose.msra.mxu0 0.0
    %3710 = vmatprep.subr.mxu0 0.0
    %3711 = vmatpush1.xpose.msra.mxu0 0.0
    %3712 = vmatprep.subr.mxu0 0.0
    %3713 = vmatpush1.xpose.msra.mxu0 0.0
    %3714 = vmatprep.subr.mxu0 0.0
    %3715 = vmatpush1.xpose.msra.mxu0 0.0
    %3716 = vmatprep.subr.mxu0 0.0
    %3717 = vmatpush1.xpose.msra.mxu0 0.0
    %3718 = vmatprep.subr.mxu0 0.0
    %3719 = vmatpush1.xpose.msra.mxu0 0.0
    %3720 = vmatprep.subr.mxu0 0.0
    %3721 = vmatpush1.xpose.msra.mxu0 0.0
    %3722 = vmatprep.subr.mxu0 0.0
    %3723 = vmatpush1.xpose.msra.mxu0 0.0
    %3724 = vmatprep.subr.mxu0 0.0
    %3725 = vmatpush1.xpose.msra.mxu0 0.0
    %3726 = vmatprep.subr.mxu0 0.0
    %3727 = vmatpush1.xpose.msra.mxu0 0.0
    %3728 = vmatprep.subr.mxu0 0.0
    %3729 = vmatpush1.xpose.msra.mxu0 0.0
    %3730 = vmatprep.subr.mxu0 0.0
    %3731 = vmatpush1.xpose.msra.mxu0 0.0
    %3732 = vmatprep.subr.mxu0 0.0
    %3733 = vmatpush1.xpose.msra.mxu0 0.0
    %3734 = vmatprep.subr.mxu0 0.0
    %3735 = vmatpush1.xpose.msra.mxu0 0.0
    %3736 = vmatprep.subr.mxu0 0.0
    %3737 = vmatpush1.xpose.msra.mxu0 0.0
    %3738 = vmatprep.subr.mxu0 0.0
    %3739 = vmatpush1.xpose.msra.mxu0 0.0
    %3740 = vmatprep.subr.mxu0 0.0
    %3741 = vmatpush1.xpose.msra.mxu0 0.0
    %3742 = vmatprep.subr.mxu0 0.0
    %3743 = vmatpush1.xpose.msra.mxu0 0.0
    %3744 = vmatprep.subr.mxu0 0.0
    %3745 = vmatpush1.xpose.msra.mxu0 0.0
    %3746 = vmatprep.subr.mxu0 0.0
    %3747 = vmatpush1.xpose.msra.mxu0 0.0
    %3748 = vmatprep.subr.mxu0 0.0
    %3749 = vmatpush1.xpose.msra.mxu0 0.0
    %3750 = vmatprep.subr.mxu0 0.0
    %3751 = vmatpush1.xpose.msra.mxu0 0.0
    %3752 = vmatprep.subr.mxu0 0.0
    %3753 = vmatpush1.xpose.msra.mxu0 0.0
    %3754 = vmatprep.subr.mxu0 0.0
    %3755 = vmatpush1.xpose.msra.mxu0 0.0
    %3756 = vmatprep.subr.mxu0 0.0
    %3757 = vmatpush1.xpose.msra.mxu0 0.0
    %3758 = vmatprep.subr.mxu0 0.0
    %3759 = vmatpush1.xpose.msra.mxu0 0.0
    %3760 = vmatprep.subr.mxu0 0.0
    %3761 = vmatpush1.xpose.msra.mxu0 0.0
    %3762 = vmatprep.mubr.f32.mxu0 0.0
    %3763 = vmatmul.mubr.f32.gmra.mrb[0].mxu0 %v3553
    %v3764 = vpop.f32.mrb[0].mxu0
    %v3765 = vadd.f32 %v3695, %v3764
    %v3766 = vpop.f32.mrb[0].mxu0
    %3767 = vdwg.mxu0
    %v3768 = vmul.f32 %v3765, 0.5
    %vm3769 = vcmask 9216
    %v3770 = vsel %vm3769, %v3768, -inf
    %3771 = vmax.xlane.f32.xlu0 %v3770
    %v3772 = vpop.xlane.xlu0 %3771
    %v3773 = vsub.f32 %v3768, %v3772
    %v3774 = vmul.f32 %v3773, 1.442695
    %v3775 = vpow.pop %v3774
    %v3776 = vsel %vm3769, %v3775, 0.0
    %3777 = vadd.xlane.f32.xlu0 %v3776
    %v3778 = vpop.xlane.xlu0 %3777
    %v3779 = vrcp.pop %v3778
    %v3780 = vmul.f32 %v3775, %v3779
    %v3781 = vsel %vm3769, %v3625, -inf
    %3782 = vmax.xlane.f32.xlu0 %v3781
    %v3783 = vpop.xlane.xlu0 %3782
    %v3784 = vsub.f32 %v3625, %v3783
    %v3785 = vmul.f32 %v3784, 1.442695
    %v3786 = vpow.pop %v3785
    %v3787 = vsel %vm3769, %v3786, 0.0
    %3788 = vadd.xlane.f32.xlu0 %v3787
    %v3789 = vpop.xlane.xlu0 %3788
    %v3790 = vlog2.pop %v3789
    %v3791 = vmul.f32 %v3790, 0.6931472
    %v3792 = vadd.f32 %v3791, %v3783
    %v3793 = vsub.f32 %v3625, %v3792
    %v3794 = vrot.slane %v3781, 4
    %v3795 = vmax.f32 %v3781, %v3794
    %v3796 = vrot.slane %v3795, 2
    %v3797 = vmax.f32 %v3795, %v3796
    %v3798 = vrot.slane %v3797, 1
    %v3799 = vmax.f32 %v3797, %v3798
    %v3800 = vsub.f32 %v3625, %v3799
    %v3801 = vmul.f32 %v3800, 1.442695
    %v3802 = vpow.pop %v3801
    %v3803 = vsel %vm3769, %v3802, 0.0
    %v3804 = vrot.slane %v3803, 4
    %v3805 = vadd.f32 %v3803, %v3804
    %v3806 = vrot.slane %v3805, 2
    %v3807 = vadd.f32 %v3805, %v3806
    %v3808 = vrot.slane %v3807, 1
    %v3809 = vadd.f32 %v3807, %v3808
    %v3810 = vlog2.pop %v3809
    %v3811 = vmul.f32 %v3810, 0.6931472
    %v3812 = vadd.f32 %v3811, %v3799
    %v3813 = vsub.f32 %v3625, %v3812
    %v3814 = vadd.f32 %v3793, %v3813
    %v3815 = vmul.f32 %v3780, %v3814
    %v3816 = vsel %vm3769, %v3815, 0.0
    %3817 = vadd.xlane.f32.xlu0 %v3816
    %v3818 = vpop.xlane.xlu0 %3817
    %vm3819 = vcmask 1041408
    %v3820 = vsel %vm3819, %v3818, 0.0
    %v3821 = vrot.slane %v3820, 4
    %v3822 = vadd.f32 %v3820, %v3821
    %v3823 = vrot.slane %v3822, 2
    %v3824 = vadd.f32 %v3822, %v3823
    %v3825 = vrot.slane %v3824, 1
    %v3826 = vadd.f32 %v3824, %v3825
    %v3827 = vmul.f32 %v3826, -0.25
    %vm3828 = vcmask 0
    %3829 = vst.msk [vmem:[#allocation2] sm:$0x1] %vm3828, %v3827
    // Predicated region
    $region122: #{tpu_custom_call.1} parent=1 // pred_check
      _
    $region123: #{tpu_custom_call.1} parent=1 // pred_check_branch
      %3831 = sbr.rel (0) target = $region125
    $region124: #{tpu_custom_call.1} parent=1 // pred_region
      %s3833 = ssub.s32 16, 16
      %3834 = vsyncadd [#allocation3], %s3833
      %s3836 = sshll.u32 [#allocation2], 4
      %s3837 = int_to_ptr.vmem [resolvable:$true] %s3836
      %3839 = dma.vmem_to_hbm [thread:$0]  %s3837, 16, %s61, [#allocation3]
    $region125: #{tpu_custom_call.1} parent=1 // pred_fallthru
      _
    // Predicated region
    $region126: #{tpu_custom_call.1} parent=1 // pred_check
      _
    $region127: #{tpu_custom_call.1} parent=1 // pred_check_branch
      %3841 = sbr.rel (0) target = $region129
    $region128: #{tpu_custom_call.1} parent=1 // pred_region
      %3842 = dma.done [#allocation3], 16
    $region129: #{tpu_custom_call.1} parent=1 // pred_fallthru
      _
    %3843 = vsyncpa [#allocation3], 1

</llo_original>
